<compile_context>
chip_gen: v7x
topology: tpu7x:2x2x1
jax: 0.10.0
libtpu: 0.0.40
codegen_flags: <defaults>
</compile_context>

<pallas_src>
import jax
import jax.numpy as jnp
import numpy as np
from jax import lax
from jax.experimental import pallas as pl
from jax.experimental.pallas import tpu as pltpu


def _sigmoid(x):
    return 1.0 / (1.0 + jnp.exp(-x))


def _softplus(x):
    # numerically stable: max(x, 0) + log(1 + exp(-|x|))
    return jnp.maximum(x, 0.0) + jnp.log(1.0 + jnp.exp(-jnp.abs(x)))


def _silu_eup(x):
    # SiLU = x * sigmoid(x); reciprocal on the (mostly idle) EUP instead of a
    # multi-op VALU divide.
    return x * pl.reciprocal(1.0 + jnp.exp(-x), approx=True)


# ---------------------------------------------------------------------------
# Pallas kernel: one (batch, L-chunk) step of the Mamba forward.
# All activations are feature-major, time-last => lane-dense last dim.
#   x_ref      (d_model, T)                    input chunk (f32)
#   w_in_ref   (2*d_inner, d_model)     bf16   fused in_proj (x-branch | z)
#   conv_w_ref (d_inner, d_conv)        f32    depthwise conv taps
#   conv_b_ref (d_inner, 1)             f32
#   w_x_ref    (2*d_state+d_inner, d_inner) bf16  fused x_proj (B | C | dt_pre)
#                                              (w_dt already folded in)
#   b_dt_ref   (d_inner, 1)             f32
#   A_ref      (d_state*d_inner, 1)     f32    -exp(A_log), row = s*d_inner+i
#   D_ref      (d_inner, 1)             f32
#   w_out_ref  (d_model, d_inner)       bf16
#   out_ref    (d_model, T)             f32
# Scratch (persists across the L-chunks of one sequence):
#   h_ref      (d_state*d_inner, 1)     SSM state carry
#   xprev_ref  (d_inner, T)             previous chunk's conv input (causal tail)
# ---------------------------------------------------------------------------
def _mamba_chunk_kernel(x_ref, w_in_ref, conv_w_ref, conv_b_ref, w_x_ref,
                        b_dt_ref, A_ref, D_ref, w_out_ref,
                        out_ref, h_ref, xprev_ref):
    l = pl.program_id(1)
    _, T = x_ref.shape
    d_inner, d_conv = conv_w_ref.shape
    N = A_ref.shape[0]
    d_state = N // d_inner
    f32 = jnp.float32
    bf16 = jnp.bfloat16

    # Reset the carried state at the start of every sequence.  Correctness
    # relies on the L grid axis being the innermost, sequentially iterated
    # ("arbitrary") axis -- do not reorder or mark it parallel.
    @pl.when(l == 0)
    def _():
        h_ref[...] = jnp.zeros(h_ref.shape, h_ref.dtype)
        xprev_ref[...] = jnp.zeros(xprev_ref.shape, xprev_ref.dtype)

    x = x_ref[...]                                               # (d_model, T)

    # ---- fused in_proj (x-branch | gate z): one bf16 MXU matmul ------------
    xz = jnp.dot(w_in_ref[...], x.astype(bf16),
                 preferred_element_type=f32)                     # (2*d_inner, T)
    xp = xz[:d_inner, :]
    z = xz[d_inner:, :]

    # ---- causal depthwise conv along time (lane axis): roll + iota mask ----
    prev = xprev_ref[...]                                        # prev chunk xp
    col = lax.broadcasted_iota(jnp.int32, (d_inner, T), 1)
    xc = conv_b_ref[...]                                         # (d_inner, 1)
    for k in range(d_conv):
        s = d_conv - 1 - k                                       # tap k hits x[t-s]
        if s == 0:
            tap = xp
        else:
            tap = jnp.where(col >= s,
                            pltpu.roll(xp, shift=s, axis=1),
                            pltpu.roll(prev, shift=s, axis=1))
        xc = xc + conv_w_ref[:, k:k + 1] * tap
    xprev_ref[...] = xp                                          # tail for next chunk
    xc = _silu_eup(xc)

    # ---- fused x_proj -> B | C | dt_pre : one bf16 MXU matmul --------------
    # (w_dt was folded into the last d_inner rows of w_x in the wrapper.)
    bcd = jnp.dot(w_x_ref[...], xc.astype(bf16),
                  preferred_element_type=f32)                    # (2*ds+d_inner, T)
    Bm = bcd[:d_state, :]
    Cm = bcd[d_state:2 * d_state, :]
    dt = _softplus(bcd[2 * d_state:, :] + b_dt_ref[...])         # (d_inner, T)

    # ---- discretize in the flat state-major layout: row = s*d_inner + i ----
    # Built with sublane broadcasts + layout-trivial reshapes (d_inner is a
    # multiple of the 8-sublane tile), not per-state slices + concatenate.
    def tile_rows(v):      # (d_inner, T) -> (N, T); row s*d_inner+i = v[i]
        return jnp.broadcast_to(v[None, :, :],
                                (d_state, d_inner, T)).reshape(N, T)

    def expand_rows(v):    # (d_state, T) -> (N, T); row s*d_inner+i = v[s]
        return jnp.broadcast_to(v[:, None, :],
                                (d_state, d_inner, T)).reshape(N, T)

    dA = jnp.exp(tile_rows(dt) * A_ref[...])                     # one exp on (N, T)
    dBx = tile_rows(dt * xc) * expand_rows(Bm)                   # (N, T)

    # ---- log-depth (Hillis-Steele) inclusive scan along time (lane axis) ---
    coln = lax.broadcasted_iota(jnp.int32, (N, T), 1)
    a_acc, b_acc = dA, dBx
    shift = 1
    while shift < T:                                             # ceil(log2 T) steps
        live = coln >= shift
        a_prev = jnp.where(live, pltpu.roll(a_acc, shift=shift, axis=1), 1.0)
        b_prev = jnp.where(live, pltpu.roll(b_acc, shift=shift, axis=1), 0.0)
        b_acc = a_acc * b_prev + b_acc
        a_acc = a_acc * a_prev
        shift *= 2
    h = a_acc * h_ref[...] + b_acc                               # fold carry; (N, T)
    h_ref[...] = h[:, T - 1:]                                    # carry to next chunk

    # ---- y_t = C_t . h_t + D * xc_t, gate with SiLU(z), out_proj -----------
    y = D_ref[...] * xc                                          # (d_inner, T)
    for s in range(d_state):
        y = y + Cm[s:s + 1, :] * h[s * d_inner:(s + 1) * d_inner, :]
    y = y * _silu_eup(z)
    out_ref[...] = jnp.dot(w_out_ref[...], y.astype(bf16),
                           preferred_element_type=f32).astype(out_ref.dtype)


# ---------------------------------------------------------------------------
# Wrapper: NCHW image -> (B, C, L) (pure reshape) -> pad L -> pallas_call.
# ---------------------------------------------------------------------------
def image_mamba_pallas(x_img, mp, *, seq_tile=512):
    B, C, H, W = x_img.shape
    L = H * W
    d_inner = mp["w_in"].shape[0] // 2
    d_state = mp["A_log"].shape[1]
    N = d_state * d_inner

    # Pad L up to a multiple of 128 (lane width), then pick the largest tile
    # (multiple of 128, <= seq_tile) dividing the padded length.  We never
    # fall back to seq_tile = L: that would allocate (N, L)-sized scan
    # temporaries and blow VMEM (64 MiB/TC on v7x) for large images.
    Lp = -(-L // 128) * 128
    tile = 128
    for cand in range(128, min(seq_tile, Lp) + 1, 128):
        if Lp % cand == 0:
            tile = cand
    nL = Lp // tile

    x_seq = x_img.reshape(B, C, L)
    if Lp != L:
        # Zero tail-padding: causal model, so the first L outputs are exact.
        x_seq = jnp.pad(x_seq, ((0, 0), (0, 0), (0, Lp - L)))

    bf16 = jnp.bfloat16
    w_in_k = mp["w_in"].astype(bf16)                             # (2*d_inner, C)
    conv_w_k = mp["conv_w"]                                      # (d_inner, d_conv)
    conv_b_k = mp["conv_b"].reshape(d_inner, 1)
    # Fold w_dt into the fused x_proj so the kernel's matmul emits dt_pre
    # directly:  rows = [ B | C | w_dt @ w_x_dt_rows ].
    w_x = mp["w_x"]
    w_x_fused = jnp.concatenate(
        [w_x[:2 * d_state, :], mp["w_dt"] @ w_x[2 * d_state:, :]],
        axis=0).astype(bf16)                                     # (2*ds+d_inner, d_inner)
    b_dt_k = mp["b_dt"].reshape(d_inner, 1)
    A_k = (-jnp.exp(mp["A_log"])).T.reshape(N, 1)                # row s*d_inner+i = A[i,s]
    D_k = mp["D"].reshape(d_inner, 1)
    w_out_k = mp["w_out"].astype(bf16)                           # (C, d_inner)

    weights = [w_in_k, conv_w_k, conv_b_k, w_x_fused, b_dt_k, A_k, D_k, w_out_k]
    w_specs = [pl.BlockSpec(w.shape, lambda b, l: (0, 0)) for w in weights]

    out_seq = pl.pallas_call(
        _mamba_chunk_kernel,
        out_shape=jax.ShapeDtypeStruct((B, C, Lp), jnp.float32),
        grid=(B, nL),
        in_specs=[pl.BlockSpec((None, C, tile), lambda b, l: (b, 0, l))]
                 + w_specs,
        out_specs=pl.BlockSpec((None, C, tile), lambda b, l: (b, 0, l)),
        scratch_shapes=[pltpu.VMEM((N, 1), jnp.float32),
                        pltpu.VMEM((d_inner, tile), jnp.float32)],
        # The L axis carries state (scratch) -> must stay "arbitrary" and be
        # the innermost grid axis.  Batch is "parallel" for v7x megacore; the
        # MuGIM2 wrapper stacks both streams so the batch count is even.
        compiler_params=pltpu.CompilerParams(
            dimension_semantics=("parallel", "arbitrary"),
            vmem_limit_bytes=32 * 1024 * 1024),
    )(x_seq, *weights)

    return out_seq[:, :, :L].reshape(B, C, H, W)


# ---------------------------------------------------------------------------
# Pure-JAX Mamba reference (lax.scan) -- mirrors the kernel's bf16 matmuls but
# keeps the unfused two-stage dt projection of the original module.
# ---------------------------------------------------------------------------
def _mamba_ref_single(xs, mp):
    L, _ = xs.shape
    d_inner = mp["w_in"].shape[0] // 2
    d_state = mp["A_log"].shape[1]
    d_conv = mp["conv_w"].shape[1]
    bf16 = jnp.bfloat16
    f32 = jnp.float32

    xz = jnp.dot(xs.astype(bf16), mp["w_in"].astype(bf16).T,
                 preferred_element_type=f32)
    xp, z = xz[:, :d_inner], xz[:, d_inner:]

    xpad = jnp.concatenate([jnp.zeros((d_conv - 1, d_inner), f32), xp], axis=0)
    xc = mp["conv_b"][None, :]
    for k in range(d_conv):
        xc = xc + mp["conv_w"][:, k][None, :] * xpad[k:k + L, :]
    xc = xc * _sigmoid(xc)

    bcd = jnp.dot(xc.astype(bf16), mp["w_x"].astype(bf16).T,
                  preferred_element_type=f32)
    Bm = bcd[:, :d_state]
    Cm = bcd[:, d_state:2 * d_state]
    dt_low = bcd[:, 2 * d_state:]
    if mp["w_dt"].shape[1] == 1:
        dt_pre = dt_low * mp["w_dt"][:, 0][None, :] + mp["b_dt"][None, :]
    else:
        dt_pre = jnp.dot(dt_low, mp["w_dt"].T) + mp["b_dt"][None, :]
    dt = _softplus(dt_pre)
    A = -jnp.exp(mp["A_log"])                                    # (d_inner, d_state)

    def step(h, inp):
        dt_t, x_t, B_t, C_t = inp
        dAt = jnp.exp(dt_t[:, None] * A)
        h = dAt * h + (dt_t * x_t)[:, None] * B_t[None, :]
        y_t = jnp.sum(h * C_t[None, :], axis=-1) + mp["D"] * x_t
        return h, y_t

    _, ys = lax.scan(step, jnp.zeros((d_inner, d_state), f32), (dt, xc, Bm, Cm))
    ys = ys * (z * _sigmoid(z))
    return jnp.dot(ys.astype(bf16), mp["w_out"].astype(bf16).T,
                   preferred_element_type=f32)


def image_mamba_ref(x_img, mp):
    B, C, H, W = x_img.shape
    xs = jnp.transpose(x_img, (0, 2, 3, 1)).reshape(B, H * W, C)
    ys = jax.vmap(lambda s: _mamba_ref_single(s, mp))(xs)
    return jnp.transpose(ys.reshape(B, H, W, C), (0, 3, 1, 2))


# ---------------------------------------------------------------------------
# MuGIM2Block surroundings (plain JAX; shared by kernel- and reference paths).
# ---------------------------------------------------------------------------
def layer_norm_2d(x, w, b, eps=1e-6):
    mu = jnp.mean(x, axis=1, keepdims=True)
    var = jnp.mean((x - mu) ** 2, axis=1, keepdims=True)
    y = (x - mu) / jnp.sqrt(var + eps)
    return w[None, :, None, None] * y + b[None, :, None, None]


def conv1x1(x, w, b):
    return jnp.einsum('oi,bihw->bohw', w, x) + b[None, :, None, None]


def dwconv3x3(x, w, b):
    y = lax.conv_general_dilated(
        x, w[:, None, :, :], window_strides=(1, 1), padding=((1, 1), (1, 1)),
        dimension_numbers=('NCHW', 'OIHW', 'NCHW'),
        feature_group_count=x.shape[1])
    return y + b[None, :, None, None]


def mugim2_forward(inp_l, inp_r, p, mamba_fn):
    # block1: DualStreamBlock(LN, 1x1 c->2c, 3x3 dw) -> gate -> ImageMamba -> 1x1
    def b1_stream(t):
        t = layer_norm_2d(t, p["b1_ln_w"], p["b1_ln_b"])
        t = conv1x1(t, p["b1_c1_w"], p["b1_c1_b"])
        t = dwconv3x3(t, p["b1_dw_w"], p["b1_dw_b"])
        return t

    x, y = b1_stream(inp_l), b1_stream(inp_r)
    x1, x2 = jnp.split(x, 2, axis=1)
    y1, y2 = jnp.split(y, 2, axis=1)
    x, y = x1 * y2, y1 * x2
    # Shared ImageMamba on both streams -> batch them into one kernel call
    # (also guarantees an even stacked batch for v7x megacore splitting).
    stacked = mamba_fn(jnp.concatenate([x, y], axis=0))
    x, y = jnp.split(stacked, 2, axis=0)
    x = conv1x1(x, p["b1_c2_w"], p["b1_c2_b"])
    y = conv1x1(y, p["b1_c2_w"], p["b1_c2_b"])
    x_skip = inp_l + x * p["a_l"]
    y_skip = inp_r + y * p["a_r"]

    # block2: DualStreamBlock(LN, 1x1 c->2c) -> gate -> 1x1
    def b2_stream(t):
        t = layer_norm_2d(t, p["b2_ln_w"], p["b2_ln_b"])
        t = conv1x1(t, p["b2_c1_w"], p["b2_c1_b"])
        return t

    x, y = b2_stream(x_skip), b2_stream(y_skip)
    x1, x2 = jnp.split(x, 2, axis=1)
    y1, y2 = jnp.split(y, 2, axis=1)
    x, y = x1 * y2, y1 * x2
    x = conv1x1(x, p["b2_c2_w"], p["b2_c2_b"])
    y = conv1x1(y, p["b2_c2_w"], p["b2_c2_b"])
    out_l = x_skip + x * p["b_l"]
    out_r = y_skip + y * p["b_r"]
    return out_l, out_r


# ---------------------------------------------------------------------------
# Deterministic parameter init.
# ---------------------------------------------------------------------------
def init_mugim2_params(key, c, d_state=16, d_conv=4, expand=2):
    d_inner = expand * c
    dt_rank = max(1, -(-c // 16))                # ceil(c / 16)
    ks = jax.random.split(key, 24)

    def nrm(k, shape, scale):
        return jax.random.normal(k, shape, jnp.float32) * scale

    mamba = {
        "w_in":   nrm(ks[0], (2 * d_inner, c), 0.3),
        "conv_w": nrm(ks[1], (d_inner, d_conv), 0.3),
        "conv_b": nrm(ks[2], (d_inner,), 0.1),
        "w_x":    nrm(ks[3], (2 * d_state + dt_rank, d_inner), 0.3),
        "w_dt":   nrm(ks[4], (d_inner, dt_rank), 0.5),
        "b_dt":   nrm(ks[5], (d_inner,), 0.1),
        "A_log":  jnp.log(jnp.broadcast_to(
            jnp.arange(1, d_state + 1, dtype=jnp.float32)[None, :],
            (d_inner, d_state))),
        "D":      jnp.ones((d_inner,), jnp.float32),
        "w_out":  nrm(ks[6], (c, d_inner), 0.3),
    }
    # NOTE: torch initializes a_*/b_* to zeros; use nonzero values here so the
    # correctness check actually exercises the Mamba path.
    return {
        "mamba": mamba,
        "b1_ln_w": jnp.ones((c,), jnp.float32), "b1_ln_b": jnp.zeros((c,), jnp.float32),
        "b1_c1_w": nrm(ks[7], (2 * c, c), 0.3), "b1_c1_b": nrm(ks[8], (2 * c,), 0.05),
        "b1_dw_w": nrm(ks[9], (2 * c, 3, 3), 0.2), "b1_dw_b": nrm(ks[10], (2 * c,), 0.05),
        "b1_c2_w": nrm(ks[11], (c, c), 0.3), "b1_c2_b": nrm(ks[12], (c,), 0.05),
        "a_l": nrm(ks[13], (1, c, 1, 1), 0.5), "a_r": nrm(ks[14], (1, c, 1, 1), 0.5),
        "b2_ln_w": jnp.ones((c,), jnp.float32), "b2_ln_b": jnp.zeros((c,), jnp.float32),
        "b2_c1_w": nrm(ks[15], (2 * c, c), 0.3), "b2_c1_b": nrm(ks[16], (2 * c,), 0.05),
        "b2_c2_w": nrm(ks[17], (c, c), 0.3), "b2_c2_b": nrm(ks[18], (c,), 0.05),
        "b_l": nrm(ks[19], (1, c, 1, 1), 0.5), "b_r": nrm(ks[20], (1, c, 1, 1), 0.5),
    }


if __name__ == "__main__":
    key = jax.random.PRNGKey(0)
    k_l, k_r, k_p, k_x = jax.random.split(key, 4)

    B, c, H, W = 2, 4, 16, 16                     # L = 256 -> one 256-wide chunk
    inp_l = jax.random.normal(k_l, (B, c, H, W), jnp.float32)
    inp_r = jax.random.normal(k_r, (B, c, H, W), jnp.float32)
    params = init_mugim2_params(k_p, c)

    # Full MuGIM2Block forward (Pallas Mamba core).
    out_l, out_r = mugim2_forward(
        inp_l, inp_r, params,
        lambda t: image_mamba_pallas(t, params["mamba"]))
    out_l, out_r = jax.block_until_ready((out_l, out_r))
    assert out_l.shape == (B, c, H, W) and out_r.shape == (B, c, H, W)

    ref_l, ref_r = mugim2_forward(
        inp_l, inp_r, params,
        lambda t: image_mamba_ref(t, params["mamba"]))
    err = max(float(jnp.max(jnp.abs(out_l - ref_l))),
              float(jnp.max(jnp.abs(out_r - ref_r))))
    assert np.isfinite(err) and err < 5e-3, f"block max abs error {err}"

    # Direct ImageMamba check exercising the multi-chunk state carry and the
    # L % 128 != 0 padding path (L = 18*14 = 252 -> padded to 256, 2 chunks).
    x_odd = jax.random.normal(k_x, (B, c, 18, 14), jnp.float32)
    got = jax.block_until_ready(
        image_mamba_pallas(x_odd, params["mamba"], seq_tile=128))
    want = image_mamba_ref(x_odd, params["mamba"])
    err2 = float(jnp.max(jnp.abs(got - want)))
    assert np.isfinite(err2) and err2 < 5e-3, f"mamba max abs error {err2}"

    print("KERNEL_OK")
</pallas_src>

<mosaic_0001>
module attributes {stable_mosaic.version = 11 : i64} {
  func.func @_mamba_chunk_kernel(%arg0: i32, %arg1: i32, %arg2: memref<1x4x256xf32, #tpu.memory_space<vmem>>, %arg3: memref<16x4xbf16, #tpu.memory_space<vmem>>, %arg4: memref<8x4xf32, #tpu.memory_space<vmem>>, %arg5: memref<8x1xf32, #tpu.memory_space<vmem>>, %arg6: memref<40x8xbf16, #tpu.memory_space<vmem>>, %arg7: memref<8x1xf32, #tpu.memory_space<vmem>>, %arg8: memref<128x1xf32, #tpu.memory_space<vmem>>, %arg9: memref<8x1xf32, #tpu.memory_space<vmem>>, %arg10: memref<4x8xbf16, #tpu.memory_space<vmem>>, %arg11: memref<1x4x256xf32, #tpu.memory_space<vmem>>, %arg12: memref<128x1xf32, #tpu.memory_space<vmem>>, %arg13: memref<8x256xf32, #tpu.memory_space<vmem>>) attributes {dimension_semantics = [#tpu.dimension_semantics<parallel>, #tpu.dimension_semantics<arbitrary>], iteration_bounds = array<i64: 4, 1>, scalar_prefetch = 0 : i64, scratch_operands = 2 : i64, tpu.core_type = #tpu.core_type<tc>, window_params = [{transform_indices = @transform_0, window_bounds = array<i64: 1, 4, 256>}, {pipeline_mode = #tpu.pipeline_mode<synchronous>, transform_indices = @transform_1, window_bounds = array<i64: 16, 4>}, {pipeline_mode = #tpu.pipeline_mode<synchronous>, transform_indices = @transform_2, window_bounds = array<i64: 8, 4>}, {pipeline_mode = #tpu.pipeline_mode<synchronous>, transform_indices = @transform_3, window_bounds = array<i64: 8, 1>}, {pipeline_mode = #tpu.pipeline_mode<synchronous>, transform_indices = @transform_4, window_bounds = array<i64: 40, 8>}, {pipeline_mode = #tpu.pipeline_mode<synchronous>, transform_indices = @transform_5, window_bounds = array<i64: 8, 1>}, {pipeline_mode = #tpu.pipeline_mode<synchronous>, transform_indices = @transform_6, window_bounds = array<i64: 128, 1>}, {pipeline_mode = #tpu.pipeline_mode<synchronous>, transform_indices = @transform_7, window_bounds = array<i64: 8, 1>}, {pipeline_mode = #tpu.pipeline_mode<synchronous>, transform_indices = @transform_8, window_bounds = array<i64: 4, 8>}, {transform_indices = @transform_9, window_bounds = array<i64: 1, 4, 256>}]} {
    %c0_i32 = arith.constant 0 : i32
    %0 = arith.cmpi eq, %arg1, %c0_i32 : i32
    %1 = arith.extui %0 : i1 to i32
    %c0_i32_0 = arith.constant 0 : i32
    %2 = arith.cmpi ne, %1, %c0_i32_0 : i32
    scf.if %2 {
      %cst_82 = arith.constant 0.000000e+00 : f32
      %282 = vector.broadcast %cst_82 : f32 to vector<128x1xf32>
      %c0_83 = arith.constant 0 : index
      %c0_84 = arith.constant 0 : index
      %283 = vector.load %arg12[%c0_83, %c0_84] : memref<128x1xf32, #tpu.memory_space<vmem>>, vector<128x1xf32>
      tpu.vector_store %arg12[%c0_83, %c0_84], %282 {strides = array<i32>} : memref<128x1xf32, #tpu.memory_space<vmem>>, vector<128x1xf32>,
      %cst_85 = arith.constant 0.000000e+00 : f32
      %284 = vector.broadcast %cst_85 : f32 to vector<8x256xf32>
      %c0_86 = arith.constant 0 : index
      %c0_87 = arith.constant 0 : index
      %285 = vector.load %arg13[%c0_86, %c0_87] : memref<8x256xf32, #tpu.memory_space<vmem>>, vector<8x256xf32>
      tpu.vector_store %arg13[%c0_86, %c0_87], %284 {strides = array<i32>} : memref<8x256xf32, #tpu.memory_space<vmem>>, vector<8x256xf32>,
    } else {
    }
    %c0 = arith.constant 0 : index
    %c0_1 = arith.constant 0 : index
    %c0_2 = arith.constant 0 : index
    %3 = vector.load %arg2[%c0, %c0_1, %c0_2] : memref<1x4x256xf32, #tpu.memory_space<vmem>>, vector<1x4x256xf32>
    %4 = vector.shape_cast %3 : vector<1x4x256xf32> to vector<4x256xf32>
    %c0_3 = arith.constant 0 : index
    %c0_4 = arith.constant 0 : index
    %5 = vector.load %arg3[%c0_3, %c0_4] : memref<16x4xbf16, #tpu.memory_space<vmem>>, vector<16x4xbf16>
    %6 = arith.truncf %4 : vector<4x256xf32> to vector<4x256xbf16>
    %cst = arith.constant dense<0.000000e+00> : vector<16x256xf32>
    %7 = tpu.matmul %5, %6, %cst {dimension_numbers = #tpu.dot_dimension_numbers<[1], [0], [0], [1], [0, 0, 1, 1], [], []>} : vector<16x4xbf16>, vector<4x256xbf16>, vector<16x256xf32> -> vector<16x256xf32>
    %8 = vector.extract_strided_slice %7 {offsets = [0, 0], sizes = [8, 256], strides = [1, 1]} : vector<16x256xf32> to vector<8x256xf32>
    %9 = vector.extract_strided_slice %7 {offsets = [8, 0], sizes = [8, 256], strides = [1, 1]} : vector<16x256xf32> to vector<8x256xf32>
    %c0_5 = arith.constant 0 : index
    %c0_6 = arith.constant 0 : index
    %10 = vector.load %arg13[%c0_5, %c0_6] : memref<8x256xf32, #tpu.memory_space<vmem>>, vector<8x256xf32>
    %11 = tpu.iota {dimensions = array<i32: 1>} : vector<8x256xi32>
    %c0_7 = arith.constant 0 : index
    %c0_8 = arith.constant 0 : index
    %12 = vector.load %arg5[%c0_7, %c0_8] : memref<8x1xf32, #tpu.memory_space<vmem>>, vector<8x1xf32>
    %c3_i32 = arith.constant 3 : i32
    %13 = vector.broadcast %c3_i32 : i32 to vector<8x256xi32>
    %14 = arith.cmpi sge, %11, %13 : vector<8x256xi32>
    %c3_i32_9 = arith.constant 3 : i32
    %15 = tpu.dynamic_rotate %8 by %c3_i32_9 dim 1 : vector<8x256xf32>, i32 -> vector<8x256xf32>
    %c3_i32_10 = arith.constant 3 : i32
    %16 = tpu.dynamic_rotate %10 by %c3_i32_10 dim 1 : vector<8x256xf32>, i32 -> vector<8x256xf32>
    %17 = arith.select %14, %15, %16 : vector<8x256xi1>, vector<8x256xf32>
    %c0_11 = arith.constant 0 : index
    %c0_12 = arith.constant 0 : index
    %18 = vector.load %arg4[%c0_11, %c0_12] : memref<8x4xf32, #tpu.memory_space<vmem>>, vector<8x1xf32>
    %19 = vector.broadcast %18 : vector<8x1xf32> to vector<8x256xf32>
    %20 = arith.mulf %19, %17 : vector<8x256xf32>
    %21 = vector.broadcast %12 : vector<8x1xf32> to vector<8x256xf32>
    %22 = arith.addf %21, %20 : vector<8x256xf32>
    %c2_i32 = arith.constant 2 : i32
    %23 = vector.broadcast %c2_i32 : i32 to vector<8x256xi32>
    %24 = arith.cmpi sge, %11, %23 : vector<8x256xi32>
    %c2_i32_13 = arith.constant 2 : i32
    %25 = tpu.dynamic_rotate %8 by %c2_i32_13 dim 1 : vector<8x256xf32>, i32 -> vector<8x256xf32>
    %c2_i32_14 = arith.constant 2 : i32
    %26 = tpu.dynamic_rotate %10 by %c2_i32_14 dim 1 : vector<8x256xf32>, i32 -> vector<8x256xf32>
    %27 = arith.select %24, %25, %26 : vector<8x256xi1>, vector<8x256xf32>
    %c0_15 = arith.constant 0 : index
    %c1 = arith.constant 1 : index
    %28 = vector.load %arg4[%c0_15, %c1] : memref<8x4xf32, #tpu.memory_space<vmem>>, vector<8x1xf32>
    %29 = vector.broadcast %28 : vector<8x1xf32> to vector<8x256xf32>
    %30 = arith.mulf %29, %27 : vector<8x256xf32>
    %31 = arith.addf %22, %30 : vector<8x256xf32>
    %c1_i32 = arith.constant 1 : i32
    %32 = vector.broadcast %c1_i32 : i32 to vector<8x256xi32>
    %33 = arith.cmpi sge, %11, %32 : vector<8x256xi32>
    %c1_i32_16 = arith.constant 1 : i32
    %34 = tpu.dynamic_rotate %8 by %c1_i32_16 dim 1 : vector<8x256xf32>, i32 -> vector<8x256xf32>
    %c1_i32_17 = arith.constant 1 : i32
    %35 = tpu.dynamic_rotate %10 by %c1_i32_17 dim 1 : vector<8x256xf32>, i32 -> vector<8x256xf32>
    %36 = arith.select %33, %34, %35 : vector<8x256xi1>, vector<8x256xf32>
    %c0_18 = arith.constant 0 : index
    %c2 = arith.constant 2 : index
    %37 = vector.load %arg4[%c0_18, %c2] : memref<8x4xf32, #tpu.memory_space<vmem>>, vector<8x1xf32>
    %38 = vector.broadcast %37 : vector<8x1xf32> to vector<8x256xf32>
    %39 = arith.mulf %38, %36 : vector<8x256xf32>
    %40 = arith.addf %31, %39 : vector<8x256xf32>
    %c0_19 = arith.constant 0 : index
    %c3 = arith.constant 3 : index
    %41 = vector.load %arg4[%c0_19, %c3] : memref<8x4xf32, #tpu.memory_space<vmem>>, vector<8x1xf32>
    %42 = vector.broadcast %41 : vector<8x1xf32> to vector<8x256xf32>
    %43 = arith.mulf %42, %8 : vector<8x256xf32>
    %44 = arith.addf %40, %43 : vector<8x256xf32>
    %c0_20 = arith.constant 0 : index
    %c0_21 = arith.constant 0 : index
    %45 = vector.load %arg13[%c0_20, %c0_21] : memref<8x256xf32, #tpu.memory_space<vmem>>, vector<8x256xf32>
    tpu.vector_store %arg13[%c0_20, %c0_21], %8 {strides = array<i32>} : memref<8x256xf32, #tpu.memory_space<vmem>>, vector<8x256xf32>,
    %cst_22 = arith.constant 0.000000e+00 : f32
    %46 = vector.broadcast %cst_22 : f32 to vector<8x256xf32>
    %47 = arith.subf %46, %44 : vector<8x256xf32>
    %48 = math.exp %47 : vector<8x256xf32>
    %cst_23 = arith.constant 1.000000e+00 : f32
    %49 = vector.broadcast %cst_23 : f32 to vector<8x256xf32>
    %50 = arith.addf %49, %48 : vector<8x256xf32>
    %51 = tpu.reciprocal %50 {approx = true} : vector<8x256xf32> -> vector<8x256xf32>
    %52 = arith.mulf %44, %51 : vector<8x256xf32>
    %c0_24 = arith.constant 0 : index
    %c0_25 = arith.constant 0 : index
    %53 = vector.load %arg6[%c0_24, %c0_25] : memref<40x8xbf16, #tpu.memory_space<vmem>>, vector<40x8xbf16>
    %54 = arith.truncf %52 : vector<8x256xf32> to vector<8x256xbf16>
    %cst_26 = arith.constant dense<0.000000e+00> : vector<40x256xf32>
    %55 = tpu.matmul %53, %54, %cst_26 {dimension_numbers = #tpu.dot_dimension_numbers<[1], [0], [0], [1], [0, 0, 1, 1], [], []>} : vector<40x8xbf16>, vector<8x256xbf16>, vector<40x256xf32> -> vector<40x256xf32>
    %56 = vector.extract_strided_slice %55 {offsets = [0, 0], sizes = [16, 256], strides = [1, 1]} : vector<40x256xf32> to vector<16x256xf32>
    %57 = vector.extract_strided_slice %55 {offsets = [16, 0], sizes = [16, 256], strides = [1, 1]} : vector<40x256xf32> to vector<16x256xf32>
    %58 = vector.extract_strided_slice %55 {offsets = [32, 0], sizes = [8, 256], strides = [1, 1]} : vector<40x256xf32> to vector<8x256xf32>
    %c0_27 = arith.constant 0 : index
    %c0_28 = arith.constant 0 : index
    %59 = vector.load %arg7[%c0_27, %c0_28] : memref<8x1xf32, #tpu.memory_space<vmem>>, vector<8x1xf32>
    %60 = vector.broadcast %59 : vector<8x1xf32> to vector<8x256xf32>
    %61 = arith.addf %58, %60 : vector<8x256xf32>
    %cst_29 = arith.constant 0.000000e+00 : f32
    %62 = vector.broadcast %cst_29 : f32 to vector<8x256xf32>
    %63 = arith.maximumf %61, %62 : vector<8x256xf32>
    %64 = math.absf %61 : vector<8x256xf32>
    %cst_30 = arith.constant 0.000000e+00 : f32
    %65 = vector.broadcast %cst_30 : f32 to vector<8x256xf32>
    %66 = arith.subf %65, %64 : vector<8x256xf32>
    %67 = math.exp %66 : vector<8x256xf32>
    %cst_31 = arith.constant 1.000000e+00 : f32
    %68 = vector.broadcast %cst_31 : f32 to vector<8x256xf32>
    %69 = arith.addf %68, %67 : vector<8x256xf32>
    %70 = math.log %69 : vector<8x256xf32>
    %71 = arith.addf %63, %70 : vector<8x256xf32>
    %72 = vector.shape_cast %71 : vector<8x256xf32> to vector<1x8x256xf32>
    %73 = vector.shape_cast %72 : vector<1x8x256xf32> to vector<1x8x256xf32>
    %74 = vector.broadcast %73 : vector<1x8x256xf32> to vector<16x8x256xf32>
    %75 = vector.shape_cast %74 : vector<16x8x256xf32> to vector<128x256xf32>
    %c0_32 = arith.constant 0 : index
    %c0_33 = arith.constant 0 : index
    %76 = vector.load %arg8[%c0_32, %c0_33] : memref<128x1xf32, #tpu.memory_space<vmem>>, vector<128x1xf32>
    %77 = vector.broadcast %76 : vector<128x1xf32> to vector<128x256xf32>
    %78 = arith.mulf %75, %77 : vector<128x256xf32>
    %79 = math.exp %78 : vector<128x256xf32>
    %80 = arith.mulf %71, %52 : vector<8x256xf32>
    %81 = vector.shape_cast %80 : vector<8x256xf32> to vector<1x8x256xf32>
    %82 = vector.shape_cast %81 : vector<1x8x256xf32> to vector<1x8x256xf32>
    %83 = vector.broadcast %82 : vector<1x8x256xf32> to vector<16x8x256xf32>
    %84 = vector.shape_cast %83 : vector<16x8x256xf32> to vector<128x256xf32>
    %85 = vector.shape_cast %56 : vector<16x256xf32> to vector<16x1x256xf32>
    %86 = vector.shape_cast %85 : vector<16x1x256xf32> to vector<16x1x256xf32>
    %87 = vector.broadcast %86 : vector<16x1x256xf32> to vector<16x8x256xf32>
    %88 = vector.shape_cast %87 : vector<16x8x256xf32> to vector<128x256xf32>
    %89 = arith.mulf %84, %88 : vector<128x256xf32>
    %90 = tpu.iota {dimensions = array<i32: 1>} : vector<128x256xi32>
    %c1_i32_34 = arith.constant 1 : i32
    %91 = vector.broadcast %c1_i32_34 : i32 to vector<128x256xi32>
    %92 = arith.cmpi sge, %90, %91 : vector<128x256xi32>
    %c1_i32_35 = arith.constant 1 : i32
    %93 = tpu.dynamic_rotate %79 by %c1_i32_35 dim 1 : vector<128x256xf32>, i32 -> vector<128x256xf32>
    %cst_36 = arith.constant 1.000000e+00 : f32
    %94 = vector.broadcast %cst_36 : f32 to vector<128x256xf32>
    %95 = arith.select %92, %93, %94 : vector<128x256xi1>, vector<128x256xf32>
    %c1_i32_37 = arith.constant 1 : i32
    %96 = tpu.dynamic_rotate %89 by %c1_i32_37 dim 1 : vector<128x256xf32>, i32 -> vector<128x256xf32>
    %cst_38 = arith.constant 0.000000e+00 : f32
    %97 = vector.broadcast %cst_38 : f32 to vector<128x256xf32>
    %98 = arith.select %92, %96, %97 : vector<128x256xi1>, vector<128x256xf32>
    %99 = arith.mulf %79, %98 : vector<128x256xf32>
    %100 = arith.addf %99, %89 : vector<128x256xf32>
    %101 = arith.mulf %79, %95 : vector<128x256xf32>
    %c2_i32_39 = arith.constant 2 : i32
    %102 = vector.broadcast %c2_i32_39 : i32 to vector<128x256xi32>
    %103 = arith.cmpi sge, %90, %102 : vector<128x256xi32>
    %c2_i32_40 = arith.constant 2 : i32
    %104 = tpu.dynamic_rotate %101 by %c2_i32_40 dim 1 : vector<128x256xf32>, i32 -> vector<128x256xf32>
    %cst_41 = arith.constant 1.000000e+00 : f32
    %105 = vector.broadcast %cst_41 : f32 to vector<128x256xf32>
    %106 = arith.select %103, %104, %105 : vector<128x256xi1>, vector<128x256xf32>
    %c2_i32_42 = arith.constant 2 : i32
    %107 = tpu.dynamic_rotate %100 by %c2_i32_42 dim 1 : vector<128x256xf32>, i32 -> vector<128x256xf32>
    %cst_43 = arith.constant 0.000000e+00 : f32
    %108 = vector.broadcast %cst_43 : f32 to vector<128x256xf32>
    %109 = arith.select %103, %107, %108 : vector<128x256xi1>, vector<128x256xf32>
    %110 = arith.mulf %101, %109 : vector<128x256xf32>
    %111 = arith.addf %110, %100 : vector<128x256xf32>
    %112 = arith.mulf %101, %106 : vector<128x256xf32>
    %c4_i32 = arith.constant 4 : i32
    %113 = vector.broadcast %c4_i32 : i32 to vector<128x256xi32>
    %114 = arith.cmpi sge, %90, %113 : vector<128x256xi32>
    %c4_i32_44 = arith.constant 4 : i32
    %115 = tpu.dynamic_rotate %112 by %c4_i32_44 dim 1 : vector<128x256xf32>, i32 -> vector<128x256xf32>
    %cst_45 = arith.constant 1.000000e+00 : f32
    %116 = vector.broadcast %cst_45 : f32 to vector<128x256xf32>
    %117 = arith.select %114, %115, %116 : vector<128x256xi1>, vector<128x256xf32>
    %c4_i32_46 = arith.constant 4 : i32
    %118 = tpu.dynamic_rotate %111 by %c4_i32_46 dim 1 : vector<128x256xf32>, i32 -> vector<128x256xf32>
    %cst_47 = arith.constant 0.000000e+00 : f32
    %119 = vector.broadcast %cst_47 : f32 to vector<128x256xf32>
    %120 = arith.select %114, %118, %119 : vector<128x256xi1>, vector<128x256xf32>
    %121 = arith.mulf %112, %120 : vector<128x256xf32>
    %122 = arith.addf %121, %111 : vector<128x256xf32>
    %123 = arith.mulf %112, %117 : vector<128x256xf32>
    %c8_i32 = arith.constant 8 : i32
    %124 = vector.broadcast %c8_i32 : i32 to vector<128x256xi32>
    %125 = arith.cmpi sge, %90, %124 : vector<128x256xi32>
    %c8_i32_48 = arith.constant 8 : i32
    %126 = tpu.dynamic_rotate %123 by %c8_i32_48 dim 1 : vector<128x256xf32>, i32 -> vector<128x256xf32>
    %cst_49 = arith.constant 1.000000e+00 : f32
    %127 = vector.broadcast %cst_49 : f32 to vector<128x256xf32>
    %128 = arith.select %125, %126, %127 : vector<128x256xi1>, vector<128x256xf32>
    %c8_i32_50 = arith.constant 8 : i32
    %129 = tpu.dynamic_rotate %122 by %c8_i32_50 dim 1 : vector<128x256xf32>, i32 -> vector<128x256xf32>
    %cst_51 = arith.constant 0.000000e+00 : f32
    %130 = vector.broadcast %cst_51 : f32 to vector<128x256xf32>
    %131 = arith.select %125, %129, %130 : vector<128x256xi1>, vector<128x256xf32>
    %132 = arith.mulf %123, %131 : vector<128x256xf32>
    %133 = arith.addf %132, %122 : vector<128x256xf32>
    %134 = arith.mulf %123, %128 : vector<128x256xf32>
    %c16_i32 = arith.constant 16 : i32
    %135 = vector.broadcast %c16_i32 : i32 to vector<128x256xi32>
    %136 = arith.cmpi sge, %90, %135 : vector<128x256xi32>
    %c16_i32_52 = arith.constant 16 : i32
    %137 = tpu.dynamic_rotate %134 by %c16_i32_52 dim 1 : vector<128x256xf32>, i32 -> vector<128x256xf32>
    %cst_53 = arith.constant 1.000000e+00 : f32
    %138 = vector.broadcast %cst_53 : f32 to vector<128x256xf32>
    %139 = arith.select %136, %137, %138 : vector<128x256xi1>, vector<128x256xf32>
    %c16_i32_54 = arith.constant 16 : i32
    %140 = tpu.dynamic_rotate %133 by %c16_i32_54 dim 1 : vector<128x256xf32>, i32 -> vector<128x256xf32>
    %cst_55 = arith.constant 0.000000e+00 : f32
    %141 = vector.broadcast %cst_55 : f32 to vector<128x256xf32>
    %142 = arith.select %136, %140, %141 : vector<128x256xi1>, vector<128x256xf32>
    %143 = arith.mulf %134, %142 : vector<128x256xf32>
    %144 = arith.addf %143, %133 : vector<128x256xf32>
    %145 = arith.mulf %134, %139 : vector<128x256xf32>
    %c32_i32 = arith.constant 32 : i32
    %146 = vector.broadcast %c32_i32 : i32 to vector<128x256xi32>
    %147 = arith.cmpi sge, %90, %146 : vector<128x256xi32>
    %c32_i32_56 = arith.constant 32 : i32
    %148 = tpu.dynamic_rotate %145 by %c32_i32_56 dim 1 : vector<128x256xf32>, i32 -> vector<128x256xf32>
    %cst_57 = arith.constant 1.000000e+00 : f32
    %149 = vector.broadcast %cst_57 : f32 to vector<128x256xf32>
    %150 = arith.select %147, %148, %149 : vector<128x256xi1>, vector<128x256xf32>
    %c32_i32_58 = arith.constant 32 : i32
    %151 = tpu.dynamic_rotate %144 by %c32_i32_58 dim 1 : vector<128x256xf32>, i32 -> vector<128x256xf32>
    %cst_59 = arith.constant 0.000000e+00 : f32
    %152 = vector.broadcast %cst_59 : f32 to vector<128x256xf32>
    %153 = arith.select %147, %151, %152 : vector<128x256xi1>, vector<128x256xf32>
    %154 = arith.mulf %145, %153 : vector<128x256xf32>
    %155 = arith.addf %154, %144 : vector<128x256xf32>
    %156 = arith.mulf %145, %150 : vector<128x256xf32>
    %c64_i32 = arith.constant 64 : i32
    %157 = vector.broadcast %c64_i32 : i32 to vector<128x256xi32>
    %158 = arith.cmpi sge, %90, %157 : vector<128x256xi32>
    %c64_i32_60 = arith.constant 64 : i32
    %159 = tpu.dynamic_rotate %156 by %c64_i32_60 dim 1 : vector<128x256xf32>, i32 -> vector<128x256xf32>
    %cst_61 = arith.constant 1.000000e+00 : f32
    %160 = vector.broadcast %cst_61 : f32 to vector<128x256xf32>
    %161 = arith.select %158, %159, %160 : vector<128x256xi1>, vector<128x256xf32>
    %c64_i32_62 = arith.constant 64 : i32
    %162 = tpu.dynamic_rotate %155 by %c64_i32_62 dim 1 : vector<128x256xf32>, i32 -> vector<128x256xf32>
    %cst_63 = arith.constant 0.000000e+00 : f32
    %163 = vector.broadcast %cst_63 : f32 to vector<128x256xf32>
    %164 = arith.select %158, %162, %163 : vector<128x256xi1>, vector<128x256xf32>
    %165 = arith.mulf %156, %164 : vector<128x256xf32>
    %166 = arith.addf %165, %155 : vector<128x256xf32>
    %167 = arith.mulf %156, %161 : vector<128x256xf32>
    %c128_i32 = arith.constant 128 : i32
    %168 = vector.broadcast %c128_i32 : i32 to vector<128x256xi32>
    %169 = arith.cmpi sge, %90, %168 : vector<128x256xi32>
    %c128_i32_64 = arith.constant 128 : i32
    %170 = tpu.dynamic_rotate %167 by %c128_i32_64 dim 1 : vector<128x256xf32>, i32 -> vector<128x256xf32>
    %cst_65 = arith.constant 1.000000e+00 : f32
    %171 = vector.broadcast %cst_65 : f32 to vector<128x256xf32>
    %172 = arith.select %169, %170, %171 : vector<128x256xi1>, vector<128x256xf32>
    %c128_i32_66 = arith.constant 128 : i32
    %173 = tpu.dynamic_rotate %166 by %c128_i32_66 dim 1 : vector<128x256xf32>, i32 -> vector<128x256xf32>
    %cst_67 = arith.constant 0.000000e+00 : f32
    %174 = vector.broadcast %cst_67 : f32 to vector<128x256xf32>
    %175 = arith.select %169, %173, %174 : vector<128x256xi1>, vector<128x256xf32>
    %176 = arith.mulf %167, %175 : vector<128x256xf32>
    %177 = arith.addf %176, %166 : vector<128x256xf32>
    %178 = arith.mulf %167, %172 : vector<128x256xf32>
    %c0_68 = arith.constant 0 : index
    %c0_69 = arith.constant 0 : index
    %179 = vector.load %arg12[%c0_68, %c0_69] : memref<128x1xf32, #tpu.memory_space<vmem>>, vector<128x1xf32>
    %180 = vector.broadcast %179 : vector<128x1xf32> to vector<128x256xf32>
    %181 = arith.mulf %178, %180 : vector<128x256xf32>
    %182 = arith.addf %181, %177 : vector<128x256xf32>
    %183 = vector.extract_strided_slice %182 {offsets = [0, 255], sizes = [128, 1], strides = [1, 1]} : vector<128x256xf32> to vector<128x1xf32>
    %c0_70 = arith.constant 0 : index
    %c0_71 = arith.constant 0 : index
    %184 = vector.load %arg12[%c0_70, %c0_71] : memref<128x1xf32, #tpu.memory_space<vmem>>, vector<128x1xf32>
    tpu.vector_store %arg12[%c0_70, %c0_71], %183 {strides = array<i32>} : memref<128x1xf32, #tpu.memory_space<vmem>>, vector<128x1xf32>,
    %c0_72 = arith.constant 0 : index
    %c0_73 = arith.constant 0 : index
    %185 = vector.load %arg9[%c0_72, %c0_73] : memref<8x1xf32, #tpu.memory_space<vmem>>, vector<8x1xf32>
    %186 = vector.broadcast %185 : vector<8x1xf32> to vector<8x256xf32>
    %187 = arith.mulf %186, %52 : vector<8x256xf32>
    %188 = vector.extract_strided_slice %57 {offsets = [0, 0], sizes = [1, 256], strides = [1, 1]} : vector<16x256xf32> to vector<1x256xf32>
    %189 = vector.extract_strided_slice %182 {offsets = [0, 0], sizes = [8, 256], strides = [1, 1]} : vector<128x256xf32> to vector<8x256xf32>
    %190 = vector.broadcast %188 : vector<1x256xf32> to vector<8x256xf32>
    %191 = arith.mulf %190, %189 : vector<8x256xf32>
    %192 = arith.addf %187, %191 : vector<8x256xf32>
    %193 = vector.extract_strided_slice %57 {offsets = [1, 0], sizes = [1, 256], strides = [1, 1]} : vector<16x256xf32> to vector<1x256xf32>
    %194 = vector.extract_strided_slice %182 {offsets = [8, 0], sizes = [8, 256], strides = [1, 1]} : vector<128x256xf32> to vector<8x256xf32>
    %195 = vector.broadcast %193 : vector<1x256xf32> to vector<8x256xf32>
    %196 = arith.mulf %195, %194 : vector<8x256xf32>
    %197 = arith.addf %192, %196 : vector<8x256xf32>
    %198 = vector.extract_strided_slice %57 {offsets = [2, 0], sizes = [1, 256], strides = [1, 1]} : vector<16x256xf32> to vector<1x256xf32>
    %199 = vector.extract_strided_slice %182 {offsets = [16, 0], sizes = [8, 256], strides = [1, 1]} : vector<128x256xf32> to vector<8x256xf32>
    %200 = vector.broadcast %198 : vector<1x256xf32> to vector<8x256xf32>
    %201 = arith.mulf %200, %199 : vector<8x256xf32>
    %202 = arith.addf %197, %201 : vector<8x256xf32>
    %203 = vector.extract_strided_slice %57 {offsets = [3, 0], sizes = [1, 256], strides = [1, 1]} : vector<16x256xf32> to vector<1x256xf32>
    %204 = vector.extract_strided_slice %182 {offsets = [24, 0], sizes = [8, 256], strides = [1, 1]} : vector<128x256xf32> to vector<8x256xf32>
    %205 = vector.broadcast %203 : vector<1x256xf32> to vector<8x256xf32>
    %206 = arith.mulf %205, %204 : vector<8x256xf32>
    %207 = arith.addf %202, %206 : vector<8x256xf32>
    %208 = vector.extract_strided_slice %57 {offsets = [4, 0], sizes = [1, 256], strides = [1, 1]} : vector<16x256xf32> to vector<1x256xf32>
    %209 = vector.extract_strided_slice %182 {offsets = [32, 0], sizes = [8, 256], strides = [1, 1]} : vector<128x256xf32> to vector<8x256xf32>
    %210 = vector.broadcast %208 : vector<1x256xf32> to vector<8x256xf32>
    %211 = arith.mulf %210, %209 : vector<8x256xf32>
    %212 = arith.addf %207, %211 : vector<8x256xf32>
    %213 = vector.extract_strided_slice %57 {offsets = [5, 0], sizes = [1, 256], strides = [1, 1]} : vector<16x256xf32> to vector<1x256xf32>
    %214 = vector.extract_strided_slice %182 {offsets = [40, 0], sizes = [8, 256], strides = [1, 1]} : vector<128x256xf32> to vector<8x256xf32>
    %215 = vector.broadcast %213 : vector<1x256xf32> to vector<8x256xf32>
    %216 = arith.mulf %215, %214 : vector<8x256xf32>
    %217 = arith.addf %212, %216 : vector<8x256xf32>
    %218 = vector.extract_strided_slice %57 {offsets = [6, 0], sizes = [1, 256], strides = [1, 1]} : vector<16x256xf32> to vector<1x256xf32>
    %219 = vector.extract_strided_slice %182 {offsets = [48, 0], sizes = [8, 256], strides = [1, 1]} : vector<128x256xf32> to vector<8x256xf32>
    %220 = vector.broadcast %218 : vector<1x256xf32> to vector<8x256xf32>
    %221 = arith.mulf %220, %219 : vector<8x256xf32>
    %222 = arith.addf %217, %221 : vector<8x256xf32>
    %223 = vector.extract_strided_slice %57 {offsets = [7, 0], sizes = [1, 256], strides = [1, 1]} : vector<16x256xf32> to vector<1x256xf32>
    %224 = vector.extract_strided_slice %182 {offsets = [56, 0], sizes = [8, 256], strides = [1, 1]} : vector<128x256xf32> to vector<8x256xf32>
    %225 = vector.broadcast %223 : vector<1x256xf32> to vector<8x256xf32>
    %226 = arith.mulf %225, %224 : vector<8x256xf32>
    %227 = arith.addf %222, %226 : vector<8x256xf32>
    %228 = vector.extract_strided_slice %57 {offsets = [8, 0], sizes = [1, 256], strides = [1, 1]} : vector<16x256xf32> to vector<1x256xf32>
    %229 = vector.extract_strided_slice %182 {offsets = [64, 0], sizes = [8, 256], strides = [1, 1]} : vector<128x256xf32> to vector<8x256xf32>
    %230 = vector.broadcast %228 : vector<1x256xf32> to vector<8x256xf32>
    %231 = arith.mulf %230, %229 : vector<8x256xf32>
    %232 = arith.addf %227, %231 : vector<8x256xf32>
    %233 = vector.extract_strided_slice %57 {offsets = [9, 0], sizes = [1, 256], strides = [1, 1]} : vector<16x256xf32> to vector<1x256xf32>
    %234 = vector.extract_strided_slice %182 {offsets = [72, 0], sizes = [8, 256], strides = [1, 1]} : vector<128x256xf32> to vector<8x256xf32>
    %235 = vector.broadcast %233 : vector<1x256xf32> to vector<8x256xf32>
    %236 = arith.mulf %235, %234 : vector<8x256xf32>
    %237 = arith.addf %232, %236 : vector<8x256xf32>
    %238 = vector.extract_strided_slice %57 {offsets = [10, 0], sizes = [1, 256], strides = [1, 1]} : vector<16x256xf32> to vector<1x256xf32>
    %239 = vector.extract_strided_slice %182 {offsets = [80, 0], sizes = [8, 256], strides = [1, 1]} : vector<128x256xf32> to vector<8x256xf32>
    %240 = vector.broadcast %238 : vector<1x256xf32> to vector<8x256xf32>
    %241 = arith.mulf %240, %239 : vector<8x256xf32>
    %242 = arith.addf %237, %241 : vector<8x256xf32>
    %243 = vector.extract_strided_slice %57 {offsets = [11, 0], sizes = [1, 256], strides = [1, 1]} : vector<16x256xf32> to vector<1x256xf32>
    %244 = vector.extract_strided_slice %182 {offsets = [88, 0], sizes = [8, 256], strides = [1, 1]} : vector<128x256xf32> to vector<8x256xf32>
    %245 = vector.broadcast %243 : vector<1x256xf32> to vector<8x256xf32>
    %246 = arith.mulf %245, %244 : vector<8x256xf32>
    %247 = arith.addf %242, %246 : vector<8x256xf32>
    %248 = vector.extract_strided_slice %57 {offsets = [12, 0], sizes = [1, 256], strides = [1, 1]} : vector<16x256xf32> to vector<1x256xf32>
    %249 = vector.extract_strided_slice %182 {offsets = [96, 0], sizes = [8, 256], strides = [1, 1]} : vector<128x256xf32> to vector<8x256xf32>
    %250 = vector.broadcast %248 : vector<1x256xf32> to vector<8x256xf32>
    %251 = arith.mulf %250, %249 : vector<8x256xf32>
    %252 = arith.addf %247, %251 : vector<8x256xf32>
    %253 = vector.extract_strided_slice %57 {offsets = [13, 0], sizes = [1, 256], strides = [1, 1]} : vector<16x256xf32> to vector<1x256xf32>
    %254 = vector.extract_strided_slice %182 {offsets = [104, 0], sizes = [8, 256], strides = [1, 1]} : vector<128x256xf32> to vector<8x256xf32>
    %255 = vector.broadcast %253 : vector<1x256xf32> to vector<8x256xf32>
    %256 = arith.mulf %255, %254 : vector<8x256xf32>
    %257 = arith.addf %252, %256 : vector<8x256xf32>
    %258 = vector.extract_strided_slice %57 {offsets = [14, 0], sizes = [1, 256], strides = [1, 1]} : vector<16x256xf32> to vector<1x256xf32>
    %259 = vector.extract_strided_slice %182 {offsets = [112, 0], sizes = [8, 256], strides = [1, 1]} : vector<128x256xf32> to vector<8x256xf32>
    %260 = vector.broadcast %258 : vector<1x256xf32> to vector<8x256xf32>
    %261 = arith.mulf %260, %259 : vector<8x256xf32>
    %262 = arith.addf %257, %261 : vector<8x256xf32>
    %263 = vector.extract_strided_slice %57 {offsets = [15, 0], sizes = [1, 256], strides = [1, 1]} : vector<16x256xf32> to vector<1x256xf32>
    %264 = vector.extract_strided_slice %182 {offsets = [120, 0], sizes = [8, 256], strides = [1, 1]} : vector<128x256xf32> to vector<8x256xf32>
    %265 = vector.broadcast %263 : vector<1x256xf32> to vector<8x256xf32>
    %266 = arith.mulf %265, %264 : vector<8x256xf32>
    %267 = arith.addf %262, %266 : vector<8x256xf32>
    %cst_74 = arith.constant 0.000000e+00 : f32
    %268 = vector.broadcast %cst_74 : f32 to vector<8x256xf32>
    %269 = arith.subf %268, %9 : vector<8x256xf32>
    %270 = math.exp %269 : vector<8x256xf32>
    %cst_75 = arith.constant 1.000000e+00 : f32
    %271 = vector.broadcast %cst_75 : f32 to vector<8x256xf32>
    %272 = arith.addf %271, %270 : vector<8x256xf32>
    %273 = tpu.reciprocal %272 {approx = true} : vector<8x256xf32> -> vector<8x256xf32>
    %274 = arith.mulf %9, %273 : vector<8x256xf32>
    %275 = arith.mulf %267, %274 : vector<8x256xf32>
    %c0_76 = arith.constant 0 : index
    %c0_77 = arith.constant 0 : index
    %276 = vector.load %arg10[%c0_76, %c0_77] : memref<4x8xbf16, #tpu.memory_space<vmem>>, vector<4x8xbf16>
    %277 = arith.truncf %275 : vector<8x256xf32> to vector<8x256xbf16>
    %cst_78 = arith.constant dense<0.000000e+00> : vector<4x256xf32>
    %278 = tpu.matmul %276, %277, %cst_78 {dimension_numbers = #tpu.dot_dimension_numbers<[1], [0], [0], [1], [0, 0, 1, 1], [], []>} : vector<4x8xbf16>, vector<8x256xbf16>, vector<4x256xf32> -> vector<4x256xf32>
    %c0_79 = arith.constant 0 : index
    %c0_80 = arith.constant 0 : index
    %c0_81 = arith.constant 0 : index
    %279 = vector.load %arg11[%c0_79, %c0_80, %c0_81] : memref<1x4x256xf32, #tpu.memory_space<vmem>>, vector<1x4x256xf32>
    %280 = vector.shape_cast %279 : vector<1x4x256xf32> to vector<4x256xf32>
    %281 = vector.shape_cast %278 : vector<4x256xf32> to vector<1x4x256xf32>
    tpu.vector_store %arg11[%c0_79, %c0_80, %c0_81], %281 {strides = array<i32>} : memref<1x4x256xf32, #tpu.memory_space<vmem>>, vector<1x4x256xf32>,
    return
  }
  func.func @transform_0(%arg0: i32, %arg1: i32) -> (i32, i32, i32) {
    %c0_i32 = arith.constant 0 : i32
    %c0_i32_0 = arith.constant 0 : i32
    return %arg0, %c0_i32, %arg1 : i32, i32, i32
  }
  func.func @transform_1(%arg0: i32, %arg1: i32) -> (i32, i32) {
    %c0_i32 = arith.constant 0 : i32
    %c0_i32_0 = arith.constant 0 : i32
    %c0_i32_1 = arith.constant 0 : i32
    return %c0_i32, %c0_i32_0 : i32, i32
  }
  func.func @transform_2(%arg0: i32, %arg1: i32) -> (i32, i32) {
    %c0_i32 = arith.constant 0 : i32
    %c0_i32_0 = arith.constant 0 : i32
    %c0_i32_1 = arith.constant 0 : i32
    return %c0_i32, %c0_i32_0 : i32, i32
  }
  func.func @transform_3(%arg0: i32, %arg1: i32) -> (i32, i32) {
    %c0_i32 = arith.constant 0 : i32
    %c0_i32_0 = arith.constant 0 : i32
    %c0_i32_1 = arith.constant 0 : i32
    return %c0_i32, %c0_i32_0 : i32, i32
  }
  func.func @transform_4(%arg0: i32, %arg1: i32) -> (i32, i32) {
    %c0_i32 = arith.constant 0 : i32
    %c0_i32_0 = arith.constant 0 : i32
    %c0_i32_1 = arith.constant 0 : i32
    return %c0_i32, %c0_i32_0 : i32, i32
  }
  func.func @transform_5(%arg0: i32, %arg1: i32) -> (i32, i32) {
    %c0_i32 = arith.constant 0 : i32
    %c0_i32_0 = arith.constant 0 : i32
    %c0_i32_1 = arith.constant 0 : i32
    return %c0_i32, %c0_i32_0 : i32, i32
  }
  func.func @transform_6(%arg0: i32, %arg1: i32) -> (i32, i32) {
    %c0_i32 = arith.constant 0 : i32
    %c0_i32_0 = arith.constant 0 : i32
    %c0_i32_1 = arith.constant 0 : i32
    return %c0_i32, %c0_i32_0 : i32, i32
  }
  func.func @transform_7(%arg0: i32, %arg1: i32) -> (i32, i32) {
    %c0_i32 = arith.constant 0 : i32
    %c0_i32_0 = arith.constant 0 : i32
    %c0_i32_1 = arith.constant 0 : i32
    return %c0_i32, %c0_i32_0 : i32, i32
  }
  func.func @transform_8(%arg0: i32, %arg1: i32) -> (i32, i32) {
    %c0_i32 = arith.constant 0 : i32
    %c0_i32_0 = arith.constant 0 : i32
    %c0_i32_1 = arith.constant 0 : i32
    return %c0_i32, %c0_i32_0 : i32, i32
  }
  func.func @transform_9(%arg0: i32, %arg1: i32) -> (i32, i32, i32) {
    %c0_i32 = arith.constant 0 : i32
    %c0_i32_0 = arith.constant 0 : i32
    return %arg0, %c0_i32, %arg1 : i32, i32, i32
  }
}

</mosaic_0001>

<llo_original>
// kernel: tpu_custom_call.1
$region0: #{tpu_custom_call.1}
  #allocation0 [shape = 'u32[]', space=smem, size = 0x4, offset = 0x4, fixed_abs, tag = 'smem constant byte address 0x4 - core index']
  #allocation1 [shape = 'u32[144,128]{1,0:T(1,128)}', space=vmem, size = 0x12000, scoped, tag = 'internal scratch']
  #allocation2 [shape = 'f32[128,1]{1,0:T(8,128)}', space=vmem, size = 0x10000, scoped, tag = 'scratch operand']
  #allocation3 [shape = 'f32[8,256]{1,0:T(8,128)}', space=vmem, size = 0x2000, scoped, tag = 'scratch operand']
  %s0 = inlined_call_operand.vmem [shape: f32[4,4,256], index: 0, kind: input, shape index: {}]
  %s1 = inlined_call_operand.vmem [shape: bf16[16,4], index: 1, kind: input, shape index: {}]
  %s2 = inlined_call_operand.vmem [shape: f32[8,4], index: 2, kind: input, shape index: {}]
  %s3 = inlined_call_operand.vmem [shape: f32[8,1], index: 3, kind: input, shape index: {}]
  %s4 = inlined_call_operand.vmem [shape: bf16[40,8], index: 4, kind: input, shape index: {}]
  %s5 = inlined_call_operand.vmem [shape: f32[8,1], index: 5, kind: input, shape index: {}]
  %s6 = inlined_call_operand.vmem [shape: f32[128,1], index: 6, kind: input, shape index: {}]
  %s7 = inlined_call_operand.vmem [shape: f32[8,1], index: 7, kind: input, shape index: {}]
  %s8 = inlined_call_operand.vmem [shape: bf16[4,8], index: 8, kind: input, shape index: {}]
  %s9 = inlined_call_operand.hbm [shape: f32[4,4,256], index: 9, kind: output, shape index: {}]
  %s10 = sld [smem:[#allocation0]]
  $region73: #{tpu_custom_call.1} parent=0
    _
  %s12 = ssub.s32 1, %s10
  %s13 = scalar_select 0, %s12, %s10
  $region1: #{tpu_custom_call.1} parent=0
    #allocation4 [shape = 'u8[8192]{0}', space=vmem, size = 0x2000, scoped, tag = 'output window, operand 0']
    #allocation5 [shape = 's32[2]{0}', space=sflag, size = 0x8, scoped, tag = 'scoped memory for tpu_custom_call.1']
    %14 = vsyncpa [#allocation5], 0
    %s15 = scalar_lea.sflag [#allocation5], 1
    %16 = vsyncpa %s15, 0
    loop: start=0, step=1, limit=6
    $region2: #{tpu_custom_call.1} parent=1 // loop_pre_header
      _
    $region3: #{tpu_custom_call.1} parent=1 // loop_header
      %s18 = sphi 0, %s22
      %p19 = scmp.ge.s32.totalorder %s18, 6
      %s25 = sphi 0, %s37
      %s26 = sphi 0, %s33
      %s27 = sphi 0, %s25
      %s28 = sphi 0, %s26
      %s29 = sphi 0, %s27
      %s30 = sphi 0, %s28
      %s42 = sphi 0, %s44
      %s45 = sphi 0, %s42
      %s46 = sphi 0, %s45
      %s62 = sphi 0, %s46
      %s66 = sphi 0, %s66
      %s68 = sphi 0, %s66
      %s69 = sphi 0, %s68
      %s83 = sphi 0, %s69
      %s87 = sphi 0, %s87
      %s89 = sphi 0, %s87
      %s90 = sphi 0, %s89
      %s104 = sphi 0, %s90
      %s108 = sphi 0, %s108
      %s110 = sphi 0, %s108
      %s111 = sphi 0, %s110
      %s125 = sphi 0, %s111
      %s129 = sphi 0, %s129
      %s131 = sphi 0, %s129
      %s132 = sphi 0, %s131
      %s146 = sphi 0, %s132
      %s150 = sphi 0, %s150
      %s152 = sphi 0, %s150
      %s153 = sphi 0, %s152
      %s167 = sphi 0, %s153
      %s171 = sphi 0, %s171
      %s173 = sphi 0, %s171
      %s174 = sphi 0, %s173
      %s188 = sphi 0, %s174
      %s192 = sphi 0, %s192
      %s194 = sphi 0, %s192
      %s195 = sphi 0, %s194
      %s209 = sphi 0, %s195
      %s213 = sphi 0, %s213
      %s215 = sphi 0, %s213
      %s216 = sphi 0, %s215
      %s230 = sphi 0, %s216
      %s238 = sphi 0, %s240
      %s241 = sphi 0, %s238
      %s242 = sphi 0, %s241
      %s258 = sphi 0, %s242
    $region4: #{tpu_custom_call.1} parent=1 // loop_header_branch
      %21 = sbr.rel (%p19) target = $region8
    $region5: #{tpu_custom_call.1} parent=1 // loop_body
      %s23 = ssub.s32 %s18, 1
      %s24 = ssub.s32 %s18, 2
      %s31 = sadd.s32 1, %s26
      %p32 = scmp.ge.s32.totalorder %s31, 1
      %s33 = scalar_select %p32, 0, %s31
      %s34 = sadd.s32 1, %s25
      %s35 = scalar_select %p32, %s34, %s25
      %p36 = scmp.ge.s32.totalorder %s35, 4
      %s37 = scalar_select %p36, 0, %s35
      %s38 = ssub.s32 %s25, %s37
      %s39 = ssub.s32 %s26, %s33
      %s40 = sor.u32 %s38, %s39
      %p41 = scmp.eq.s32.totalorder %s40, 0
      %s43 = sadd.s32 %s42, 1
      %s44 = scalar_select %p41, %s42, %s43
      %p47 = pneg %p41
      %p48 = scmp.eq.s32.totalorder %s18, 3
      %p49 = por %p47, %p48
      %p50 = scmp.ne.s32.totalorder %s42, %s45
      %p51 = scmp.eq.s32.totalorder %s18, 0
      %p52 = por %p50, %p51
      %p53 = scmp.ne.s32.totalorder %s42, %s45
      %p54 = scmp.eq.s32.totalorder %s23, 3
      %p55 = por %p53, %p54
      %p56 = scmp.ne.s32.totalorder %s45, %s46
      %p57 = scmp.eq.s32.totalorder %s23, 0
      %p58 = por %p56, %p57
      %p59 = scmp.ne.s32.totalorder %s45, %s46
      %p60 = scmp.eq.s32.totalorder %s24, 3
      %p61 = por %p59, %p60
      %p63 = scmp.ne.s32.totalorder %s46, %s62
      %p64 = scmp.eq.s32.totalorder %s24, 0
      %p65 = por %p63, %p64
      %s67 = sadd.s32 %s66, 1
      %p70 = scmp.eq.s32.totalorder %s18, 3
      %p71 = scmp.ne.s32.totalorder %s66, %s68
      %p72 = scmp.eq.s32.totalorder %s18, 0
      %p73 = por %p71, %p72
      %p74 = scmp.ne.s32.totalorder %s66, %s68
      %p75 = scmp.eq.s32.totalorder %s23, 3
      %p76 = por %p74, %p75
      %p77 = scmp.ne.s32.totalorder %s68, %s69
      %p78 = scmp.eq.s32.totalorder %s23, 0
      %p79 = por %p77, %p78
      %p80 = scmp.ne.s32.totalorder %s68, %s69
      %p81 = scmp.eq.s32.totalorder %s24, 3
      %p82 = por %p80, %p81
      %p84 = scmp.ne.s32.totalorder %s69, %s83
      %p85 = scmp.eq.s32.totalorder %s24, 0
      %p86 = por %p84, %p85
      %s88 = sadd.s32 %s87, 1
      %p91 = scmp.eq.s32.totalorder %s18, 3
      %p92 = scmp.ne.s32.totalorder %s87, %s89
      %p93 = scmp.eq.s32.totalorder %s18, 0
      %p94 = por %p92, %p93
      %p95 = scmp.ne.s32.totalorder %s87, %s89
      %p96 = scmp.eq.s32.totalorder %s23, 3
      %p97 = por %p95, %p96
      %p98 = scmp.ne.s32.totalorder %s89, %s90
      %p99 = scmp.eq.s32.totalorder %s23, 0
      %p100 = por %p98, %p99
      %p101 = scmp.ne.s32.totalorder %s89, %s90
      %p102 = scmp.eq.s32.totalorder %s24, 3
      %p103 = por %p101, %p102
      %p105 = scmp.ne.s32.totalorder %s90, %s104
      %p106 = scmp.eq.s32.totalorder %s24, 0
      %p107 = por %p105, %p106
      %s109 = sadd.s32 %s108, 1
      %p112 = scmp.eq.s32.totalorder %s18, 3
      %p113 = scmp.ne.s32.totalorder %s108, %s110
      %p114 = scmp.eq.s32.totalorder %s18, 0
      %p115 = por %p113, %p114
      %p116 = scmp.ne.s32.totalorder %s108, %s110
      %p117 = scmp.eq.s32.totalorder %s23, 3
      %p118 = por %p116, %p117
      %p119 = scmp.ne.s32.totalorder %s110, %s111
      %p120 = scmp.eq.s32.totalorder %s23, 0
      %p121 = por %p119, %p120
      %p122 = scmp.ne.s32.totalorder %s110, %s111
      %p123 = scmp.eq.s32.totalorder %s24, 3
      %p124 = por %p122, %p123
      %p126 = scmp.ne.s32.totalorder %s111, %s125
      %p127 = scmp.eq.s32.totalorder %s24, 0
      %p128 = por %p126, %p127
      %s130 = sadd.s32 %s129, 1
      %p133 = scmp.eq.s32.totalorder %s18, 3
      %p134 = scmp.ne.s32.totalorder %s129, %s131
      %p135 = scmp.eq.s32.totalorder %s18, 0
      %p136 = por %p134, %p135
      %p137 = scmp.ne.s32.totalorder %s129, %s131
      %p138 = scmp.eq.s32.totalorder %s23, 3
      %p139 = por %p137, %p138
      %p140 = scmp.ne.s32.totalorder %s131, %s132
      %p141 = scmp.eq.s32.totalorder %s23, 0
      %p142 = por %p140, %p141
      %p143 = scmp.ne.s32.totalorder %s131, %s132
      %p144 = scmp.eq.s32.totalorder %s24, 3
      %p145 = por %p143, %p144
      %p147 = scmp.ne.s32.totalorder %s132, %s146
      %p148 = scmp.eq.s32.totalorder %s24, 0
      %p149 = por %p147, %p148
      %s151 = sadd.s32 %s150, 1
      %p154 = scmp.eq.s32.totalorder %s18, 3
      %p155 = scmp.ne.s32.totalorder %s150, %s152
      %p156 = scmp.eq.s32.totalorder %s18, 0
      %p157 = por %p155, %p156
      %p158 = scmp.ne.s32.totalorder %s150, %s152
      %p159 = scmp.eq.s32.totalorder %s23, 3
      %p160 = por %p158, %p159
      %p161 = scmp.ne.s32.totalorder %s152, %s153
      %p162 = scmp.eq.s32.totalorder %s23, 0
      %p163 = por %p161, %p162
      %p164 = scmp.ne.s32.totalorder %s152, %s153
      %p165 = scmp.eq.s32.totalorder %s24, 3
      %p166 = por %p164, %p165
      %p168 = scmp.ne.s32.totalorder %s153, %s167
      %p169 = scmp.eq.s32.totalorder %s24, 0
      %p170 = por %p168, %p169
      %s172 = sadd.s32 %s171, 1
      %p175 = scmp.eq.s32.totalorder %s18, 3
      %p176 = scmp.ne.s32.totalorder %s171, %s173
      %p177 = scmp.eq.s32.totalorder %s18, 0
      %p178 = por %p176, %p177
      %p179 = scmp.ne.s32.totalorder %s171, %s173
      %p180 = scmp.eq.s32.totalorder %s23, 3
      %p181 = por %p179, %p180
      %p182 = scmp.ne.s32.totalorder %s173, %s174
      %p183 = scmp.eq.s32.totalorder %s23, 0
      %p184 = por %p182, %p183
      %p185 = scmp.ne.s32.totalorder %s173, %s174
      %p186 = scmp.eq.s32.totalorder %s24, 3
      %p187 = por %p185, %p186
      %p189 = scmp.ne.s32.totalorder %s174, %s188
      %p190 = scmp.eq.s32.totalorder %s24, 0
      %p191 = por %p189, %p190
      %s193 = sadd.s32 %s192, 1
      %p196 = scmp.eq.s32.totalorder %s18, 3
      %p197 = scmp.ne.s32.totalorder %s192, %s194
      %p198 = scmp.eq.s32.totalorder %s18, 0
      %p199 = por %p197, %p198
      %p200 = scmp.ne.s32.totalorder %s192, %s194
      %p201 = scmp.eq.s32.totalorder %s23, 3
      %p202 = por %p200, %p201
      %p203 = scmp.ne.s32.totalorder %s194, %s195
      %p204 = scmp.eq.s32.totalorder %s23, 0
      %p205 = por %p203, %p204
      %p206 = scmp.ne.s32.totalorder %s194, %s195
      %p207 = scmp.eq.s32.totalorder %s24, 3
      %p208 = por %p206, %p207
      %p210 = scmp.ne.s32.totalorder %s195, %s209
      %p211 = scmp.eq.s32.totalorder %s24, 0
      %p212 = por %p210, %p211
      %s214 = sadd.s32 %s213, 1
      %p217 = scmp.eq.s32.totalorder %s18, 3
      %p218 = scmp.ne.s32.totalorder %s213, %s215
      %p219 = scmp.eq.s32.totalorder %s18, 0
      %p220 = por %p218, %p219
      %p221 = scmp.ne.s32.totalorder %s213, %s215
      %p222 = scmp.eq.s32.totalorder %s23, 3
      %p223 = por %p221, %p222
      %p224 = scmp.ne.s32.totalorder %s215, %s216
      %p225 = scmp.eq.s32.totalorder %s23, 0
      %p226 = por %p224, %p225
      %p227 = scmp.ne.s32.totalorder %s215, %s216
      %p228 = scmp.eq.s32.totalorder %s24, 3
      %p229 = por %p227, %p228
      %p231 = scmp.ne.s32.totalorder %s216, %s230
      %p232 = scmp.eq.s32.totalorder %s24, 0
      %p233 = por %p231, %p232
      %s234 = ssub.s32 %s25, %s37
      %s235 = ssub.s32 %s26, %s33
      %s236 = sor.u32 %s234, %s235
      %p237 = scmp.eq.s32.totalorder %s236, 0
      %s239 = sadd.s32 %s238, 1
      %s240 = scalar_select %p237, %s238, %s239
      %p243 = pneg %p237
      %p244 = scmp.eq.s32.totalorder %s18, 3
      %p245 = por %p243, %p244
      %p246 = scmp.ne.s32.totalorder %s238, %s241
      %p247 = scmp.eq.s32.totalorder %s18, 0
      %p248 = por %p246, %p247
      %p249 = scmp.ne.s32.totalorder %s238, %s241
      %p250 = scmp.eq.s32.totalorder %s23, 3
      %p251 = por %p249, %p250
      %p252 = scmp.ne.s32.totalorder %s241, %s242
      %p253 = scmp.eq.s32.totalorder %s23, 0
      %p254 = por %p252, %p253
      %p255 = scmp.ne.s32.totalorder %s241, %s242
      %p256 = scmp.eq.s32.totalorder %s24, 3
      %p257 = por %p255, %p256
      %p259 = scmp.ne.s32.totalorder %s242, %s258
      %p260 = scmp.eq.s32.totalorder %s24, 0
      %p261 = por %p259, %p260
      %p262 = scmp.le.s32.totalorder 1, %s18
      %p263 = scmp.lt.s32.totalorder %s18, 5
      %p264 = pnand %p262, %p263
      %p265 = pneg %p264
      // Predicated region
      $region9: #{tpu_custom_call.1} parent=5 // pred_check
        _
      $region10: #{tpu_custom_call.1} parent=5 // pred_check_branch
        %267 = sbr.rel (%p264) target = $region12
      $region11: #{tpu_custom_call.1} parent=5 // pred_region
        %s268 = ssub.s32 %s18, 1
        // Predicated region
        $region13: #{tpu_custom_call.1} parent=11 // pred_check
          %p269 = pneg %p79
        $region14: #{tpu_custom_call.1} parent=11 // pred_check_branch
          %271 = sbr.rel (%p269) target = $region16
        $region15: #{tpu_custom_call.1} parent=11 // pred_region
          _
        $region16: #{tpu_custom_call.1} parent=11 // pred_fallthru
          _
        // Predicated region
        $region17: #{tpu_custom_call.1} parent=11 // pred_check
          %p272 = pneg %p100
        $region18: #{tpu_custom_call.1} parent=11 // pred_check_branch
          %274 = sbr.rel (%p272) target = $region20
        $region19: #{tpu_custom_call.1} parent=11 // pred_region
          _
        $region20: #{tpu_custom_call.1} parent=11 // pred_fallthru
          _
        // Predicated region
        $region21: #{tpu_custom_call.1} parent=11 // pred_check
          %p275 = pneg %p121
        $region22: #{tpu_custom_call.1} parent=11 // pred_check_branch
          %277 = sbr.rel (%p275) target = $region24
        $region23: #{tpu_custom_call.1} parent=11 // pred_region
          _
        $region24: #{tpu_custom_call.1} parent=11 // pred_fallthru
          _
        // Predicated region
        $region25: #{tpu_custom_call.1} parent=11 // pred_check
          %p278 = pneg %p142
        $region26: #{tpu_custom_call.1} parent=11 // pred_check_branch
          %280 = sbr.rel (%p278) target = $region28
        $region27: #{tpu_custom_call.1} parent=11 // pred_region
          _
        $region28: #{tpu_custom_call.1} parent=11 // pred_fallthru
          _
        // Predicated region
        $region29: #{tpu_custom_call.1} parent=11 // pred_check
          %p281 = pneg %p163
        $region30: #{tpu_custom_call.1} parent=11 // pred_check_branch
          %283 = sbr.rel (%p281) target = $region32
        $region31: #{tpu_custom_call.1} parent=11 // pred_region
          _
        $region32: #{tpu_custom_call.1} parent=11 // pred_fallthru
          _
        // Predicated region
        $region33: #{tpu_custom_call.1} parent=11 // pred_check
          %p284 = pneg %p184
        $region34: #{tpu_custom_call.1} parent=11 // pred_check_branch
          %286 = sbr.rel (%p284) target = $region36
        $region35: #{tpu_custom_call.1} parent=11 // pred_region
          _
        $region36: #{tpu_custom_call.1} parent=11 // pred_fallthru
          _
        // Predicated region
        $region37: #{tpu_custom_call.1} parent=11 // pred_check
          %p287 = pneg %p205
        $region38: #{tpu_custom_call.1} parent=11 // pred_check_branch
          %289 = sbr.rel (%p287) target = $region40
        $region39: #{tpu_custom_call.1} parent=11 // pred_region
          _
        $region40: #{tpu_custom_call.1} parent=11 // pred_fallthru
          _
        // Predicated region
        $region41: #{tpu_custom_call.1} parent=11 // pred_check
          %p290 = pneg %p226
        $region42: #{tpu_custom_call.1} parent=11 // pred_check_branch
          %292 = sbr.rel (%p290) target = $region44
        $region43: #{tpu_custom_call.1} parent=11 // pred_region
          _
        $region44: #{tpu_custom_call.1} parent=11 // pred_fallthru
          _
      $region12: #{tpu_custom_call.1} parent=5 // pred_fallthru
        _
      %p293 = scmp.lt.s32.totalorder %s18, 4
      // Predicated region
      $region45: #{tpu_custom_call.1} parent=5 // pred_check
        %p294 = pneg %p293
      $region46: #{tpu_custom_call.1} parent=5 // pred_check_branch
        %296 = sbr.rel (%p294) target = $region48
      $region47: #{tpu_custom_call.1} parent=5 // pred_region
        // Predicated region
        $region49: #{tpu_custom_call.1} parent=47 // pred_check
          %p297 = pneg %p52
        $region50: #{tpu_custom_call.1} parent=47 // pred_check_branch
          %299 = sbr.rel (%p297) target = $region52
        $region51: #{tpu_custom_call.1} parent=47 // pred_region
          %s300 = smul.u32 2, %s26
          %p301 = scmp.lt.s32.totalorder %s25, 3
          %s302 = scalar_select %p301, %s25, 3
          %p303 = scmp.lt.s32.totalorder %s300, 1
          %s304 = scalar_select %p303, %s300, 1
          %s305 = smul.addr %s302, 2
          %s306 = sadd.s32 %s304, %s305
          %s307 = smul.addr %s306, 4
          %s308 = scalar_lea.vmem %s0, %s307
          %s309 = smul.u32 2, %s26
        $region52: #{tpu_custom_call.1} parent=47 // pred_fallthru
          _
      $region48: #{tpu_custom_call.1} parent=5 // pred_fallthru
        _
      %p310 = scmp.le.s32.totalorder 1, %s18
      %p311 = scmp.lt.s32.totalorder %s18, 5
      %p312 = pnand %p310, %p311
      %p313 = pneg %p312
      // Predicated region
      $region53: #{tpu_custom_call.1} parent=5 // pred_check
        _
      $region54: #{tpu_custom_call.1} parent=5 // pred_check_branch
        %315 = sbr.rel (%p312) target = $region56
      $region55: #{tpu_custom_call.1} parent=5 // pred_region
        %s316 = ssub.s32 %s18, 1
        %s317 = smul.u32 2, %s28
        %p318 = scmp.lt.s32.totalorder %s27, 3
        %s319 = scalar_select %p318, %s27, 3
        %p320 = scmp.lt.s32.totalorder %s317, 1
        %s321 = scalar_select %p320, %s317, 1
        %s322 = smul.addr %s319, 2
        %s323 = sadd.s32 %s321, %s322
        %s324 = smul.addr %s323, 4
        %s325 = scalar_lea.vmem %s0, %s324
        %p326 = pneg %p58
        %p327 = pneg %p55
        %p328 = pneg %p79
        %p329 = pneg %p76
        %p330 = pneg %p100
        %p331 = pneg %p97
        %p332 = pneg %p121
        %p333 = pneg %p118
        %p334 = pneg %p142
        %p335 = pneg %p139
        %p336 = pneg %p163
        %p337 = pneg %p160
        %p338 = pneg %p184
        %p339 = pneg %p181
        %p340 = pneg %p205
        %p341 = pneg %p202
        %p342 = pneg %p226
        %p343 = pneg %p223
        %p344 = pneg %p254
        %p345 = pneg %p251
        %s346 = sand.u32 %s241, 1
        %s347 = scalar_lea.sflag [#allocation5], %s346
        %s348 = sand.u32 %s241, 1
        %s349 = smul.addr %s348, 8
        %s350 = scalar_lea.vmem [#allocation4], %s349
        %s351 = smul.u32 2, %s28
        %p352 = scmp.lt.s32.totalorder %s27, 3
        %s353 = scalar_select %p352, %s27, 3
        %p354 = scmp.lt.s32.totalorder %s351, 1
        %s355 = scalar_select %p354, %s351, 1
        %s356 = smul.addr %s353, 2
        %s357 = sadd.s32 %s355, %s356
        %s358 = smul.addr %s357, 4
        %s359 = scalar_lea.vmem %s0, %s358
        %s360 = smul.u32 2, %s28
        %s361 = smul.u32 2, %s28
        %p363 = scmp.eq.s32.totalorder %s28, 0
        // Predicated region
        $region57: #{tpu_custom_call.1} parent=55 // pred_check
          %p364 = pneg %p363
        $region58: #{tpu_custom_call.1} parent=55 // pred_check_branch
          %366 = sbr.rel (%p364) target = $region60
        $region59: #{tpu_custom_call.1} parent=55 // pred_region
          %vm367 = vcmask 7168
          %368 = vst.msk [vmem:[#allocation2] sm:$0xff] %vm367, 0.0
          %369 = vst.msk [vmem:[#allocation2 + $0x8] sm:$0xff] %vm367, 0.0
          %370 = vst.msk [vmem:[#allocation2 + $0x10] sm:$0xff] %vm367, 0.0
          %371 = vst.msk [vmem:[#allocation2 + $0x18] sm:$0xff] %vm367, 0.0
          %372 = vst.msk [vmem:[#allocation2 + $0x20] sm:$0xff] %vm367, 0.0
          %373 = vst.msk [vmem:[#allocation2 + $0x28] sm:$0xff] %vm367, 0.0
          %374 = vst.msk [vmem:[#allocation2 + $0x30] sm:$0xff] %vm367, 0.0
          %375 = vst.msk [vmem:[#allocation2 + $0x38] sm:$0xff] %vm367, 0.0
          %376 = vst.msk [vmem:[#allocation2 + $0x40] sm:$0xff] %vm367, 0.0
          %377 = vst.msk [vmem:[#allocation2 + $0x48] sm:$0xff] %vm367, 0.0
          %378 = vst.msk [vmem:[#allocation2 + $0x50] sm:$0xff] %vm367, 0.0
          %379 = vst.msk [vmem:[#allocation2 + $0x58] sm:$0xff] %vm367, 0.0
          %380 = vst.msk [vmem:[#allocation2 + $0x60] sm:$0xff] %vm367, 0.0
          %381 = vst.msk [vmem:[#allocation2 + $0x68] sm:$0xff] %vm367, 0.0
          %382 = vst.msk [vmem:[#allocation2 + $0x70] sm:$0xff] %vm367, 0.0
          %383 = vst.msk [vmem:[#allocation2 + $0x78] sm:$0xff] %vm367, 0.0
          %384 = vst [vmem:[#allocation3] sm:$0xff] 0.0
          %385 = vst [vmem:[#allocation3 + $0x8] sm:$0xff] 0.0
        $region60: #{tpu_custom_call.1} parent=55 // pred_fallthru
          _
        %v386 = vld [vmem:[%s359] sm:$0xff]
        %v387 = vld [vmem:[%s1] sm:$0xf]
        %v388 = vld [vmem:[%s1 + $0x4] sm:$0xf]
        %v390 = vcombine.high %v386, %v386
        %v392 = vpack.c.bf16 %v386, %v386
        %v393 = vpack.c.bf16 %v390, %v390
        %v396 = vunpack.c.l.b16 %v387
        %v397 = vunpack.c.l.b16 %v388
        %v398 = vpack.c.b16 %v397, %v396
        %vm399 = vcmask 31744
        %v401 = vsel %vm399, %v398, 0
        %vm403 = vcmask 1041408
        %v405 = vsel %vm403, %v392, 0
        %v408 = vsel %vm403, %v393, 0
        %410 = vmatprep.subr.bf16.mxu0 %v408
        %411 = vmatpush1.bf16.msra.mxu0 %v405
        %412 = vmatprep.subr.bf16.mxu0 0
        %413 = vmatpush1.bf16.msra.mxu0 0
        %414 = vmatprep.subr.bf16.mxu0 0
        %415 = vmatpush1.bf16.msra.mxu0 0
        %416 = vmatprep.subr.bf16.mxu0 0
        %417 = vmatpush1.bf16.msra.mxu0 0
        %418 = vmatprep.subr.bf16.mxu0 0
        %419 = vmatpush1.bf16.msra.mxu0 0
        %420 = vmatprep.subr.bf16.mxu0 0
        %421 = vmatpush1.bf16.msra.mxu0 0
        %422 = vmatprep.subr.bf16.mxu0 0
        %423 = vmatpush1.bf16.msra.mxu0 0
        %424 = vmatprep.subr.bf16.mxu0 0
        %425 = vmatpush1.bf16.msra.mxu0 0
        %426 = vmatprep.subr.bf16.mxu0 0
        %427 = vmatpush1.bf16.msra.mxu0 0
        %428 = vmatprep.subr.bf16.mxu0 0
        %429 = vmatpush1.bf16.msra.mxu0 0
        %430 = vmatprep.subr.bf16.mxu0 0
        %431 = vmatpush1.bf16.msra.mxu0 0
        %432 = vmatprep.subr.bf16.mxu0 0
        %433 = vmatpush1.bf16.msra.mxu0 0
        %434 = vmatprep.subr.bf16.mxu0 0
        %435 = vmatpush1.bf16.msra.mxu0 0
        %436 = vmatprep.subr.bf16.mxu0 0
        %437 = vmatpush1.bf16.msra.mxu0 0
        %438 = vmatprep.subr.bf16.mxu0 0
        %439 = vmatpush1.bf16.msra.mxu0 0
        %440 = vmatprep.subr.bf16.mxu0 0
        %441 = vmatpush1.bf16.msra.mxu0 0
        %442 = vmatprep.mubr.bf16.mxu0 0
        %443 = vmatmul.mubr.bf16.gmra.mrb[0].mxu0 %v401
        %v444 = vpop.f32.mrb[0].mxu0
        %v445 = vadd.f32 0.0, %v444
        %v446 = vpop.f32.mrb[0].mxu0
        %v447 = vadd.f32 0.0, %v446
        %v448 = vpop.f32.mrb[0].mxu0
        %v449 = vadd.f32 0.0, %v448
        %v450 = vpop.f32.mrb[0].mxu0
        %v451 = vadd.f32 0.0, %v450
        %452 = vdwg.mxu0
        %v453 = vld [vmem:[#allocation3] sm:$0xff]
        %v454 = vld [vmem:[#allocation3 + $0x8] sm:$0xff]
        %v455 = vlaneseq
        %v456 = vand.u32 %v455, 127
        %v457 = vadd.s32 %v456, 128
        %v458 = vld [vmem:[%s3] sm:$0xff]
        %vm459 = vcmp.ge.s32.totalorder %v456, 3
        %vm460 = vcmp.ge.s32.totalorder %v457, 3
        %461 = vrot.lane.b32.xlu0 %v445, 3
        %v462 = vpop.permute.xlu0 %461
        %463 = vrot.lane.b32.xlu0 %v447, 3
        %v464 = vpop.permute.xlu0 %463
        %vm465 = vcmp.lt.s32.totalorder %v456, 3
        %v466 = vsel %vm465, %v462, %v464
        %v467 = vsel %vm465, %v464, %v462
        %468 = vrot.lane.b32.xlu0 %v453, 3
        %v469 = vpop.permute.xlu0 %468
        %470 = vrot.lane.b32.xlu0 %v454, 3
        %v471 = vpop.permute.xlu0 %470
        %v472 = vsel %vm465, %v469, %v471
        %v473 = vsel %vm465, %v471, %v469
        %v474 = vsel %vm459, %v467, %v473
        %v475 = vsel %vm460, %v466, %v472
        %v476 = vld [vmem:[%s2] sm:$0xff]
        %478 = vset.pattern.permute.xlu0 0
        %479 = vperm.xlu0 %478, %v476
        %v480 = vpop.permute.xlu0 %479
        %v482 = vmul.f32 %v480, %v474
        %v483 = vmul.f32 %v480, %v475
        %485 = vset.pattern.permute.xlu0 0
        %486 = vperm.xlu0 %485, %v458
        %v487 = vpop.permute.xlu0 %486
        %v489 = vadd.f32 %v487, %v482
        %v490 = vadd.f32 %v487, %v483
        %vm491 = vcmp.ge.s32.totalorder %v456, 2
        %vm492 = vcmp.ge.s32.totalorder %v457, 2
        %493 = vrot.lane.b32.xlu0 %v445, 2
        %v494 = vpop.permute.xlu0 %493
        %495 = vrot.lane.b32.xlu0 %v447, 2
        %v496 = vpop.permute.xlu0 %495
        %vm497 = vcmp.lt.s32.totalorder %v456, 2
        %v498 = vsel %vm497, %v494, %v496
        %v499 = vsel %vm497, %v496, %v494
        %500 = vrot.lane.b32.xlu0 %v453, 2
        %v501 = vpop.permute.xlu0 %500
        %502 = vrot.lane.b32.xlu0 %v454, 2
        %v503 = vpop.permute.xlu0 %502
        %v504 = vsel %vm497, %v501, %v503
        %v505 = vsel %vm497, %v503, %v501
        %v506 = vsel %vm491, %v499, %v505
        %v507 = vsel %vm492, %v498, %v504
        %508 = vset.pattern.permute.xlu0 1
        %509 = vperm.xlu0 %508, %v476
        %v510 = vpop.permute.xlu0 %509
        %v512 = vmul.f32 %v510, %v506
        %v513 = vmul.f32 %v510, %v507
        %v514 = vadd.f32 %v489, %v512
        %v515 = vadd.f32 %v490, %v513
        %vm516 = vcmp.ge.s32.totalorder %v456, 1
        %vm517 = vcmp.ge.s32.totalorder %v457, 1
        %518 = vrot.lane.b32.xlu0 %v445, 1
        %v519 = vpop.permute.xlu0 %518
        %520 = vrot.lane.b32.xlu0 %v447, 1
        %v521 = vpop.permute.xlu0 %520
        %vm522 = vcmp.lt.s32.totalorder %v456, 1
        %v523 = vsel %vm522, %v519, %v521
        %v524 = vsel %vm522, %v521, %v519
        %525 = vrot.lane.b32.xlu0 %v453, 1
        %v526 = vpop.permute.xlu0 %525
        %527 = vrot.lane.b32.xlu0 %v454, 1
        %v528 = vpop.permute.xlu0 %527
        %v529 = vsel %vm522, %v526, %v528
        %v530 = vsel %vm522, %v528, %v526
        %v531 = vsel %vm516, %v524, %v530
        %v532 = vsel %vm517, %v523, %v529
        %533 = vset.pattern.permute.xlu0 2
        %534 = vperm.xlu0 %533, %v476
        %v535 = vpop.permute.xlu0 %534
        %v537 = vmul.f32 %v535, %v531
        %v538 = vmul.f32 %v535, %v532
        %v539 = vadd.f32 %v514, %v537
        %v540 = vadd.f32 %v515, %v538
        %541 = vset.pattern.permute.xlu0 3
        %542 = vperm.xlu0 %541, %v476
        %v543 = vpop.permute.xlu0 %542
        %v545 = vmul.f32 %v543, %v445
        %v546 = vmul.f32 %v543, %v447
        %v547 = vadd.f32 %v539, %v545
        %v548 = vadd.f32 %v540, %v546
        %549 = vst [vmem:[#allocation3] sm:$0xff] %v445
        %550 = vst [vmem:[#allocation3 + $0x8] sm:$0xff] %v447
        %v551 = vsub.f32 0.0, %v547
        %v552 = vsub.f32 0.0, %v548
        %v553 = vmul.f32 %v551, 1.442695
        %v554 = vpow.pop %v553
        %v555 = vmul.f32 %v552, 1.442695
        %v556 = vpow.pop %v555
        %v557 = vadd.f32 %v554, 1.0
        %v558 = vadd.f32 %v556, 1.0
        %v559 = vrcp.pop %v557
        %v560 = vrcp.pop %v558
        %v561 = vmul.f32 %v547, %v559
        %v562 = vmul.f32 %v548, %v560
        %v563 = vld [vmem:[%s4] sm:$0xf]
        %v564 = vld [vmem:[%s4 + $0x4] sm:$0xf]
        %v565 = vld [vmem:[%s4 + $0x8] sm:$0xf]
        %v566 = vld [vmem:[%s4 + $0xc] sm:$0xf]
        %v567 = vld [vmem:[%s4 + $0x10] sm:$0xf]
        %v568 = vpack.c.bf16 %v561, %v561
        %v569 = vpack.c.bf16 %v562, %v562
        %v575 = vunpack.c.l.b16 %v563
        %v576 = vunpack.c.l.b16 %v564
        %v577 = vunpack.c.l.b16 %v565
        %v578 = vunpack.c.l.b16 %v566
        %v579 = vunpack.c.l.b16 %v567
        %v580 = vpack.c.b16 %v576, %v575
        %v581 = vpack.c.b16 %v578, %v577
        %v582 = vpack.c.b16 %v579, %v579
        %vm583 = vcmask 64512
        %v585 = vsel %vm583, %v580, 0
        %v588 = vsel %vm583, %v581, 0
        %v591 = vsel %vm583, %v582, 0
        %vm593 = vcmask 1043456
        %v595 = vsel %vm593, %v568, 0
        %v598 = vsel %vm593, %v569, 0
        %600 = vmatprep.subr.bf16.mxu0 %v598
        %601 = vmatpush1.bf16.msra.mxu0 %v595
        %602 = vmatprep.subr.bf16.mxu0 0
        %603 = vmatpush1.bf16.msra.mxu0 0
        %604 = vmatprep.subr.bf16.mxu0 0
        %605 = vmatpush1.bf16.msra.mxu0 0
        %606 = vmatprep.subr.bf16.mxu0 0
        %607 = vmatpush1.bf16.msra.mxu0 0
        %608 = vmatprep.subr.bf16.mxu0 0
        %609 = vmatpush1.bf16.msra.mxu0 0
        %610 = vmatprep.subr.bf16.mxu0 0
        %611 = vmatpush1.bf16.msra.mxu0 0
        %612 = vmatprep.subr.bf16.mxu0 0
        %613 = vmatpush1.bf16.msra.mxu0 0
        %614 = vmatprep.subr.bf16.mxu0 0
        %615 = vmatpush1.bf16.msra.mxu0 0
        %616 = vmatprep.subr.bf16.mxu0 0
        %617 = vmatpush1.bf16.msra.mxu0 0
        %618 = vmatprep.subr.bf16.mxu0 0
        %619 = vmatpush1.bf16.msra.mxu0 0
        %620 = vmatprep.subr.bf16.mxu0 0
        %621 = vmatpush1.bf16.msra.mxu0 0
        %622 = vmatprep.subr.bf16.mxu0 0
        %623 = vmatpush1.bf16.msra.mxu0 0
        %624 = vmatprep.subr.bf16.mxu0 0
        %625 = vmatpush1.bf16.msra.mxu0 0
        %626 = vmatprep.subr.bf16.mxu0 0
        %627 = vmatpush1.bf16.msra.mxu0 0
        %628 = vmatprep.subr.bf16.mxu0 0
        %629 = vmatpush1.bf16.msra.mxu0 0
        %630 = vmatprep.subr.bf16.mxu0 0
        %631 = vmatpush1.bf16.msra.mxu0 0
        %632 = vmatprep.mubr.bf16.mxu0 0
        %633 = vmatmul.mubr.bf16.gmra.mrb[0].mxu0 %v585
        %v634 = vpop.f32.mrb[0].mxu0
        %v635 = vadd.f32 0.0, %v634
        %v636 = vpop.f32.mrb[0].mxu0
        %v637 = vadd.f32 0.0, %v636
        %v638 = vpop.f32.mrb[0].mxu0
        %v639 = vadd.f32 0.0, %v638
        %v640 = vpop.f32.mrb[0].mxu0
        %v641 = vadd.f32 0.0, %v640
        %642 = vmatprep.mubr.bf16.mxu0 0
        %643 = vmatmul.mubr.bf16.gmra.mrb[0].mxu0 %v588
        %v644 = vpop.f32.mrb[0].mxu0
        %v645 = vadd.f32 0.0, %v644
        %v646 = vpop.f32.mrb[0].mxu0
        %v647 = vadd.f32 0.0, %v646
        %v648 = vpop.f32.mrb[0].mxu0
        %v649 = vadd.f32 0.0, %v648
        %v650 = vpop.f32.mrb[0].mxu0
        %v651 = vadd.f32 0.0, %v650
        %652 = vmatprep.mubr.bf16.mxu0 0
        %653 = vmatmul.mubr.bf16.gmra.mrb[0].mxu0 %v591
        %v654 = vpop.f32.mrb[0].mxu0
        %v655 = vadd.f32 0.0, %v654
        %v656 = vpop.f32.mrb[0].mxu0
        %v657 = vadd.f32 0.0, %v656
        %v658 = vpop.f32.mrb[0].mxu0
        %v659 = vpop.f32.mrb[0].mxu0
        %660 = vdwg.mxu0
        %v661 = vld [vmem:[%s5] sm:$0xff]
        %663 = vset.pattern.permute.xlu0 0
        %664 = vperm.xlu0 %663, %v661
        %v665 = vpop.permute.xlu0 %664
        %v667 = vadd.f32 %v655, %v665
        %v668 = vadd.f32 %v657, %v665
        %v669 = vmax.f32 %v667, 0.0
        %v670 = vmax.f32 %v668, 0.0
        %v671 = vand.u32 2147483647, %v667
        %v672 = vand.u32 2147483647, %v668
        %v673 = vsub.f32 0.0, %v671
        %v674 = vsub.f32 0.0, %v672
        %v675 = vmul.f32 %v673, 1.442695
        %v676 = vpow.pop %v675
        %v677 = vmul.f32 %v674, 1.442695
        %v678 = vpow.pop %v677
        %v679 = vadd.f32 %v676, 1.0
        %v680 = vadd.f32 %v678, 1.0
        %v681 = vlog2.pop %v679
        %v682 = vmul.f32 %v681, 0.6931472
        %v683 = vlog2.pop %v680
        %v684 = vmul.f32 %v683, 0.6931472
        %v685 = vadd.f32 %v669, %v682
        %v686 = vadd.f32 %v670, %v684
        %v687 = vld [vmem:[%s6] sm:$0xff]
        %v688 = vld [vmem:[%s6 + $0x8] sm:$0xff]
        %v689 = vld [vmem:[%s6 + $0x10] sm:$0xff]
        %v690 = vld [vmem:[%s6 + $0x18] sm:$0xff]
        %v691 = vld [vmem:[%s6 + $0x20] sm:$0xff]
        %v692 = vld [vmem:[%s6 + $0x28] sm:$0xff]
        %v693 = vld [vmem:[%s6 + $0x30] sm:$0xff]
        %v694 = vld [vmem:[%s6 + $0x38] sm:$0xff]
        %v695 = vld [vmem:[%s6 + $0x40] sm:$0xff]
        %v696 = vld [vmem:[%s6 + $0x48] sm:$0xff]
        %v697 = vld [vmem:[%s6 + $0x50] sm:$0xff]
        %v698 = vld [vmem:[%s6 + $0x58] sm:$0xff]
        %v699 = vld [vmem:[%s6 + $0x60] sm:$0xff]
        %v700 = vld [vmem:[%s6 + $0x68] sm:$0xff]
        %v701 = vld [vmem:[%s6 + $0x70] sm:$0xff]
        %v702 = vld [vmem:[%s6 + $0x78] sm:$0xff]
        %704 = vset.pattern.permute.xlu0 0
        %705 = vperm.xlu0 %704, %v687
        %v706 = vpop.permute.xlu0 %705
        %709 = vset.pattern.permute.xlu0 0
        %710 = vperm.xlu0 %709, %v688
        %v711 = vpop.permute.xlu0 %710
        %714 = vset.pattern.permute.xlu0 0
        %715 = vperm.xlu0 %714, %v689
        %v716 = vpop.permute.xlu0 %715
        %719 = vset.pattern.permute.xlu0 0
        %720 = vperm.xlu0 %719, %v690
        %v721 = vpop.permute.xlu0 %720
        %724 = vset.pattern.permute.xlu0 0
        %725 = vperm.xlu0 %724, %v691
        %v726 = vpop.permute.xlu0 %725
        %729 = vset.pattern.permute.xlu0 0
        %730 = vperm.xlu0 %729, %v692
        %v731 = vpop.permute.xlu0 %730
        %734 = vset.pattern.permute.xlu0 0
        %735 = vperm.xlu0 %734, %v693
        %v736 = vpop.permute.xlu0 %735
        %739 = vset.pattern.permute.xlu0 0
        %740 = vperm.xlu0 %739, %v694
        %v741 = vpop.permute.xlu0 %740
        %744 = vset.pattern.permute.xlu0 0
        %745 = vperm.xlu0 %744, %v695
        %v746 = vpop.permute.xlu0 %745
        %749 = vset.pattern.permute.xlu0 0
        %750 = vperm.xlu0 %749, %v696
        %v751 = vpop.permute.xlu0 %750
        %754 = vset.pattern.permute.xlu0 0
        %755 = vperm.xlu0 %754, %v697
        %v756 = vpop.permute.xlu0 %755
        %759 = vset.pattern.permute.xlu0 0
        %760 = vperm.xlu0 %759, %v698
        %v761 = vpop.permute.xlu0 %760
        %764 = vset.pattern.permute.xlu0 0
        %765 = vperm.xlu0 %764, %v699
        %v766 = vpop.permute.xlu0 %765
        %769 = vset.pattern.permute.xlu0 0
        %770 = vperm.xlu0 %769, %v700
        %v771 = vpop.permute.xlu0 %770
        %774 = vset.pattern.permute.xlu0 0
        %775 = vperm.xlu0 %774, %v701
        %v776 = vpop.permute.xlu0 %775
        %779 = vset.pattern.permute.xlu0 0
        %780 = vperm.xlu0 %779, %v702
        %v781 = vpop.permute.xlu0 %780
        %v783 = vmul.f32 %v685, %v706
        %v784 = vmul.f32 %v686, %v706
        %v785 = vmul.f32 %v685, %v711
        %v786 = vmul.f32 %v686, %v711
        %v787 = vmul.f32 %v685, %v716
        %v788 = vmul.f32 %v686, %v716
        %v789 = vmul.f32 %v685, %v721
        %v790 = vmul.f32 %v686, %v721
        %v791 = vmul.f32 %v685, %v726
        %v792 = vmul.f32 %v686, %v726
        %v793 = vmul.f32 %v685, %v731
        %v794 = vmul.f32 %v686, %v731
        %v795 = vmul.f32 %v685, %v736
        %v796 = vmul.f32 %v686, %v736
        %v797 = vmul.f32 %v685, %v741
        %v798 = vmul.f32 %v686, %v741
        %v799 = vmul.f32 %v685, %v746
        %v800 = vmul.f32 %v686, %v746
        %v801 = vmul.f32 %v685, %v751
        %v802 = vmul.f32 %v686, %v751
        %v803 = vmul.f32 %v685, %v756
        %v804 = vmul.f32 %v686, %v756
        %v805 = vmul.f32 %v685, %v761
        %v806 = vmul.f32 %v686, %v761
        %v807 = vmul.f32 %v685, %v766
        %v808 = vmul.f32 %v686, %v766
        %v809 = vmul.f32 %v685, %v771
        %v810 = vmul.f32 %v686, %v771
        %v811 = vmul.f32 %v685, %v776
        %v812 = vmul.f32 %v686, %v776
        %v813 = vmul.f32 %v685, %v781
        %v814 = vmul.f32 %v686, %v781
        %v815 = vmul.f32 %v783, 1.442695
        %v816 = vpow.pop %v815
        %v817 = vmul.f32 %v784, 1.442695
        %v818 = vpow.pop %v817
        %v819 = vmul.f32 %v785, 1.442695
        %v820 = vpow.pop %v819
        %v821 = vmul.f32 %v786, 1.442695
        %v822 = vpow.pop %v821
        %v823 = vmul.f32 %v787, 1.442695
        %v824 = vpow.pop %v823
        %v825 = vmul.f32 %v788, 1.442695
        %v826 = vpow.pop %v825
        %v827 = vmul.f32 %v789, 1.442695
        %v828 = vpow.pop %v827
        %v829 = vmul.f32 %v790, 1.442695
        %v830 = vpow.pop %v829
        %v831 = vmul.f32 %v791, 1.442695
        %v832 = vpow.pop %v831
        %v833 = vmul.f32 %v792, 1.442695
        %v834 = vpow.pop %v833
        %v835 = vmul.f32 %v793, 1.442695
        %v836 = vpow.pop %v835
        %v837 = vmul.f32 %v794, 1.442695
        %v838 = vpow.pop %v837
        %v839 = vmul.f32 %v795, 1.442695
        %v840 = vpow.pop %v839
        %v841 = vmul.f32 %v796, 1.442695
        %v842 = vpow.pop %v841
        %v843 = vmul.f32 %v797, 1.442695
        %v844 = vpow.pop %v843
        %v845 = vmul.f32 %v798, 1.442695
        %v846 = vpow.pop %v845
        %v847 = vmul.f32 %v799, 1.442695
        %v848 = vpow.pop %v847
        %v849 = vmul.f32 %v800, 1.442695
        %v850 = vpow.pop %v849
        %v851 = vmul.f32 %v801, 1.442695
        %v852 = vpow.pop %v851
        %v853 = vmul.f32 %v802, 1.442695
        %v854 = vpow.pop %v853
        %v855 = vmul.f32 %v803, 1.442695
        %v856 = vpow.pop %v855
        %v857 = vmul.f32 %v804, 1.442695
        %v858 = vpow.pop %v857
        %v859 = vmul.f32 %v805, 1.442695
        %v860 = vpow.pop %v859
        %v861 = vmul.f32 %v806, 1.442695
        %v862 = vpow.pop %v861
        %v863 = vmul.f32 %v807, 1.442695
        %v864 = vpow.pop %v863
        %v865 = vmul.f32 %v808, 1.442695
        %v866 = vpow.pop %v865
        %v867 = vmul.f32 %v809, 1.442695
        %v868 = vpow.pop %v867
        %v869 = vmul.f32 %v810, 1.442695
        %v870 = vpow.pop %v869
        %v871 = vmul.f32 %v811, 1.442695
        %v872 = vpow.pop %v871
        %v873 = vmul.f32 %v812, 1.442695
        %v874 = vpow.pop %v873
        %v875 = vmul.f32 %v813, 1.442695
        %v876 = vpow.pop %v875
        %v877 = vmul.f32 %v814, 1.442695
        %v878 = vpow.pop %v877
        %v879 = vmul.f32 %v685, %v561
        %v880 = vmul.f32 %v686, %v562
        %v885 = vcombine.low %v635, %v637
        %v886 = vcombine.high %v635, %v637
        %v888 = vunpack.c.l.s4 1966171168
        %v889 = vunpack.c.0.s8 %v888
        %v890 = vlaneseq
        %v891 = vshrl.u32 %v890, 7
        %v892 = vsub.s32 %v889, %v891
        %v893 = vrot.slane %v885, %v892
        %v895 = vunpack.c.l.s4 1966171168
        %v896 = vunpack.c.0.s8 %v895
        %v897 = vlaneseq
        %v898 = vshrl.u32 %v897, 7
        %v899 = vsub.s32 %v896, %v898
        %v900 = vrot.slane %v886, %v899
        %v901 = vcombine.high %v893, %v893
        %v902 = vcombine.high %v900, %v900
        %v904 = vunpack.c.l.s4 1966171168
        %v905 = vunpack.c.0.s8 %v904
        %v906 = vlaneseq
        %v907 = vshrl.u32 %v906, 7
        %v908 = vsub.s32 %v905, %v907
        %v909 = vrot.slane %v893, %v908
        %v911 = vunpack.c.l.s4 1966171168
        %v912 = vunpack.c.0.s8 %v911
        %v913 = vlaneseq
        %v914 = vshrl.u32 %v913, 7
        %v915 = vsub.s32 %v912, %v914
        %v916 = vrot.slane %v900, %v915
        %v918 = vunpack.c.l.s4 1966171168
        %v919 = vunpack.c.0.s8 %v918
        %v920 = vlaneseq
        %v921 = vshrl.u32 %v920, 7
        %v922 = vsub.s32 %v919, %v921
        %v923 = vrot.slane %v901, %v922
        %v925 = vunpack.c.l.s4 1966171168
        %v926 = vunpack.c.0.s8 %v925
        %v927 = vlaneseq
        %v928 = vshrl.u32 %v927, 7
        %v929 = vsub.s32 %v926, %v928
        %v930 = vrot.slane %v902, %v929
        %v931 = vcombine.high %v909, %v909
        %v932 = vcombine.high %v916, %v916
        %v933 = vcombine.high %v923, %v923
        %v934 = vcombine.high %v930, %v930
        %v935 = vcombine.low %v639, %v641
        %v936 = vcombine.high %v639, %v641
        %v938 = vunpack.c.l.s4 1966171168
        %v939 = vunpack.c.0.s8 %v938
        %v940 = vlaneseq
        %v941 = vshrl.u32 %v940, 7
        %v942 = vsub.s32 %v939, %v941
        %v943 = vrot.slane %v935, %v942
        %v945 = vunpack.c.l.s4 1966171168
        %v946 = vunpack.c.0.s8 %v945
        %v947 = vlaneseq
        %v948 = vshrl.u32 %v947, 7
        %v949 = vsub.s32 %v946, %v948
        %v950 = vrot.slane %v936, %v949
        %v951 = vcombine.high %v943, %v943
        %v952 = vcombine.high %v950, %v950
        %v954 = vunpack.c.l.s4 1966171168
        %v955 = vunpack.c.0.s8 %v954
        %v956 = vlaneseq
        %v957 = vshrl.u32 %v956, 7
        %v958 = vsub.s32 %v955, %v957
        %v959 = vrot.slane %v943, %v958
        %v961 = vunpack.c.l.s4 1966171168
        %v962 = vunpack.c.0.s8 %v961
        %v963 = vlaneseq
        %v964 = vshrl.u32 %v963, 7
        %v965 = vsub.s32 %v962, %v964
        %v966 = vrot.slane %v950, %v965
        %v968 = vunpack.c.l.s4 1966171168
        %v969 = vunpack.c.0.s8 %v968
        %v970 = vlaneseq
        %v971 = vshrl.u32 %v970, 7
        %v972 = vsub.s32 %v969, %v971
        %v973 = vrot.slane %v951, %v972
        %v975 = vunpack.c.l.s4 1966171168
        %v976 = vunpack.c.0.s8 %v975
        %v977 = vlaneseq
        %v978 = vshrl.u32 %v977, 7
        %v979 = vsub.s32 %v976, %v978
        %v980 = vrot.slane %v952, %v979
        %v981 = vcombine.high %v959, %v959
        %v982 = vcombine.high %v966, %v966
        %v983 = vcombine.high %v973, %v973
        %v984 = vcombine.high %v980, %v980
        %v985 = vlaneseq
        %v986 = vshrl.u32 %v985, 7
        %v987 = vsub.s32 0, %v986
        %v988 = vrot.slane %v909, %v987
        %v989 = vlaneseq
        %v990 = vshrl.u32 %v989, 7
        %v991 = vsub.s32 1, %v990
        %v992 = vrot.slane %v909, %v991
        %v993 = vlaneseq
        %v994 = vshrl.u32 %v993, 7
        %v995 = vsub.s32 0, %v994
        %v996 = vrot.slane %v923, %v995
        %v997 = vlaneseq
        %v998 = vshrl.u32 %v997, 7
        %v999 = vsub.s32 1, %v998
        %v1000 = vrot.slane %v923, %v999
        %v1001 = vlaneseq
        %v1002 = vshrl.u32 %v1001, 7
        %v1003 = vsub.s32 0, %v1002
        %v1004 = vrot.slane %v931, %v1003
        %v1005 = vlaneseq
        %v1006 = vshrl.u32 %v1005, 7
        %v1007 = vsub.s32 1, %v1006
        %v1008 = vrot.slane %v931, %v1007
        %v1009 = vlaneseq
        %v1010 = vshrl.u32 %v1009, 7
        %v1011 = vsub.s32 0, %v1010
        %v1012 = vrot.slane %v933, %v1011
        %v1013 = vlaneseq
        %v1014 = vshrl.u32 %v1013, 7
        %v1015 = vsub.s32 1, %v1014
        %v1016 = vrot.slane %v933, %v1015
        %v1017 = vlaneseq
        %v1018 = vshrl.u32 %v1017, 7
        %v1019 = vsub.s32 0, %v1018
        %v1020 = vrot.slane %v916, %v1019
        %v1021 = vlaneseq
        %v1022 = vshrl.u32 %v1021, 7
        %v1023 = vsub.s32 1, %v1022
        %v1024 = vrot.slane %v916, %v1023
        %v1025 = vlaneseq
        %v1026 = vshrl.u32 %v1025, 7
        %v1027 = vsub.s32 0, %v1026
        %v1028 = vrot.slane %v930, %v1027
        %v1029 = vlaneseq
        %v1030 = vshrl.u32 %v1029, 7
        %v1031 = vsub.s32 1, %v1030
        %v1032 = vrot.slane %v930, %v1031
        %v1033 = vlaneseq
        %v1034 = vshrl.u32 %v1033, 7
        %v1035 = vsub.s32 0, %v1034
        %v1036 = vrot.slane %v932, %v1035
        %v1037 = vlaneseq
        %v1038 = vshrl.u32 %v1037, 7
        %v1039 = vsub.s32 1, %v1038
        %v1040 = vrot.slane %v932, %v1039
        %v1041 = vlaneseq
        %v1042 = vshrl.u32 %v1041, 7
        %v1043 = vsub.s32 0, %v1042
        %v1044 = vrot.slane %v934, %v1043
        %v1045 = vlaneseq
        %v1046 = vshrl.u32 %v1045, 7
        %v1047 = vsub.s32 1, %v1046
        %v1048 = vrot.slane %v934, %v1047
        %v1049 = vlaneseq
        %v1050 = vshrl.u32 %v1049, 7
        %v1051 = vsub.s32 0, %v1050
        %v1052 = vrot.slane %v959, %v1051
        %v1053 = vlaneseq
        %v1054 = vshrl.u32 %v1053, 7
        %v1055 = vsub.s32 1, %v1054
        %v1056 = vrot.slane %v959, %v1055
        %v1057 = vlaneseq
        %v1058 = vshrl.u32 %v1057, 7
        %v1059 = vsub.s32 0, %v1058
        %v1060 = vrot.slane %v973, %v1059
        %v1061 = vlaneseq
        %v1062 = vshrl.u32 %v1061, 7
        %v1063 = vsub.s32 1, %v1062
        %v1064 = vrot.slane %v973, %v1063
        %v1065 = vlaneseq
        %v1066 = vshrl.u32 %v1065, 7
        %v1067 = vsub.s32 0, %v1066
        %v1068 = vrot.slane %v981, %v1067
        %v1069 = vlaneseq
        %v1070 = vshrl.u32 %v1069, 7
        %v1071 = vsub.s32 1, %v1070
        %v1072 = vrot.slane %v981, %v1071
        %v1073 = vlaneseq
        %v1074 = vshrl.u32 %v1073, 7
        %v1075 = vsub.s32 0, %v1074
        %v1076 = vrot.slane %v983, %v1075
        %v1077 = vlaneseq
        %v1078 = vshrl.u32 %v1077, 7
        %v1079 = vsub.s32 1, %v1078
        %v1080 = vrot.slane %v983, %v1079
        %v1081 = vlaneseq
        %v1082 = vshrl.u32 %v1081, 7
        %v1083 = vsub.s32 0, %v1082
        %v1084 = vrot.slane %v966, %v1083
        %v1085 = vlaneseq
        %v1086 = vshrl.u32 %v1085, 7
        %v1087 = vsub.s32 1, %v1086
        %v1088 = vrot.slane %v966, %v1087
        %v1089 = vlaneseq
        %v1090 = vshrl.u32 %v1089, 7
        %v1091 = vsub.s32 0, %v1090
        %v1092 = vrot.slane %v980, %v1091
        %v1093 = vlaneseq
        %v1094 = vshrl.u32 %v1093, 7
        %v1095 = vsub.s32 1, %v1094
        %v1096 = vrot.slane %v980, %v1095
        %v1097 = vlaneseq
        %v1098 = vshrl.u32 %v1097, 7
        %v1099 = vsub.s32 0, %v1098
        %v1100 = vrot.slane %v982, %v1099
        %v1101 = vlaneseq
        %v1102 = vshrl.u32 %v1101, 7
        %v1103 = vsub.s32 1, %v1102
        %v1104 = vrot.slane %v982, %v1103
        %v1105 = vlaneseq
        %v1106 = vshrl.u32 %v1105, 7
        %v1107 = vsub.s32 0, %v1106
        %v1108 = vrot.slane %v984, %v1107
        %v1109 = vlaneseq
        %v1110 = vshrl.u32 %v1109, 7
        %v1111 = vsub.s32 1, %v1110
        %v1112 = vrot.slane %v984, %v1111
        %v1145 = vmul.f32 %v879, %v988
        %v1146 = vmul.f32 %v880, %v992
        %v1147 = vmul.f32 %v879, %v996
        %v1148 = vmul.f32 %v880, %v1000
        %v1149 = vmul.f32 %v879, %v1004
        %v1150 = vmul.f32 %v880, %v1008
        %v1151 = vmul.f32 %v879, %v1012
        %v1152 = vmul.f32 %v880, %v1016
        %v1153 = vmul.f32 %v879, %v1020
        %v1154 = vmul.f32 %v880, %v1024
        %v1155 = vmul.f32 %v879, %v1028
        %v1156 = vmul.f32 %v880, %v1032
        %v1157 = vmul.f32 %v879, %v1036
        %v1158 = vmul.f32 %v880, %v1040
        %v1159 = vmul.f32 %v879, %v1044
        %v1160 = vmul.f32 %v880, %v1048
        %v1161 = vmul.f32 %v879, %v1052
        %v1162 = vmul.f32 %v880, %v1056
        %v1163 = vmul.f32 %v879, %v1060
        %v1164 = vmul.f32 %v880, %v1064
        %v1165 = vmul.f32 %v879, %v1068
        %v1166 = vmul.f32 %v880, %v1072
        %v1167 = vmul.f32 %v879, %v1076
        %v1168 = vmul.f32 %v880, %v1080
        %v1169 = vmul.f32 %v879, %v1084
        %v1170 = vmul.f32 %v880, %v1088
        %v1171 = vmul.f32 %v879, %v1092
        %v1172 = vmul.f32 %v880, %v1096
        %v1173 = vmul.f32 %v879, %v1100
        %v1174 = vmul.f32 %v880, %v1104
        %v1175 = vmul.f32 %v879, %v1108
        %v1176 = vmul.f32 %v880, %v1112
        %1177 = vrot.lane.b32.xlu0 %v816, 1
        %v1178 = vpop.permute.xlu0 %1177
        %1179 = vrot.lane.b32.xlu0 %v820, 1
        %v1180 = vpop.permute.xlu0 %1179
        %1181 = vrot.lane.b32.xlu0 %v824, 1
        %v1182 = vpop.permute.xlu0 %1181
        %1183 = vrot.lane.b32.xlu0 %v828, 1
        %v1184 = vpop.permute.xlu0 %1183
        %1185 = vrot.lane.b32.xlu0 %v832, 1
        %v1186 = vpop.permute.xlu0 %1185
        %1187 = vrot.lane.b32.xlu0 %v836, 1
        %v1188 = vpop.permute.xlu0 %1187
        %1189 = vrot.lane.b32.xlu0 %v840, 1
        %v1190 = vpop.permute.xlu0 %1189
        %1191 = vrot.lane.b32.xlu0 %v844, 1
        %v1192 = vpop.permute.xlu0 %1191
        %1193 = vrot.lane.b32.xlu0 %v848, 1
        %v1194 = vpop.permute.xlu0 %1193
        %1195 = vrot.lane.b32.xlu0 %v852, 1
        %v1196 = vpop.permute.xlu0 %1195
        %1197 = vrot.lane.b32.xlu0 %v856, 1
        %v1198 = vpop.permute.xlu0 %1197
        %1199 = vrot.lane.b32.xlu0 %v860, 1
        %v1200 = vpop.permute.xlu0 %1199
        %1201 = vrot.lane.b32.xlu0 %v864, 1
        %v1202 = vpop.permute.xlu0 %1201
        %1203 = vrot.lane.b32.xlu0 %v868, 1
        %v1204 = vpop.permute.xlu0 %1203
        %1205 = vrot.lane.b32.xlu0 %v872, 1
        %v1206 = vpop.permute.xlu0 %1205
        %1207 = vrot.lane.b32.xlu0 %v876, 1
        %v1208 = vpop.permute.xlu0 %1207
        %1209 = vrot.lane.b32.xlu0 %v818, 1
        %v1210 = vpop.permute.xlu0 %1209
        %1211 = vrot.lane.b32.xlu0 %v822, 1
        %v1212 = vpop.permute.xlu0 %1211
        %1213 = vrot.lane.b32.xlu0 %v826, 1
        %v1214 = vpop.permute.xlu0 %1213
        %1215 = vrot.lane.b32.xlu0 %v830, 1
        %v1216 = vpop.permute.xlu0 %1215
        %1217 = vrot.lane.b32.xlu0 %v834, 1
        %v1218 = vpop.permute.xlu0 %1217
        %1219 = vrot.lane.b32.xlu0 %v838, 1
        %v1220 = vpop.permute.xlu0 %1219
        %1221 = vrot.lane.b32.xlu0 %v842, 1
        %v1222 = vpop.permute.xlu0 %1221
        %1223 = vrot.lane.b32.xlu0 %v846, 1
        %v1224 = vpop.permute.xlu0 %1223
        %1225 = vrot.lane.b32.xlu0 %v850, 1
        %v1226 = vpop.permute.xlu0 %1225
        %1227 = vrot.lane.b32.xlu0 %v854, 1
        %v1228 = vpop.permute.xlu0 %1227
        %1229 = vrot.lane.b32.xlu0 %v858, 1
        %v1230 = vpop.permute.xlu0 %1229
        %1231 = vrot.lane.b32.xlu0 %v862, 1
        %v1232 = vpop.permute.xlu0 %1231
        %1233 = vrot.lane.b32.xlu0 %v866, 1
        %v1234 = vpop.permute.xlu0 %1233
        %1235 = vrot.lane.b32.xlu0 %v870, 1
        %v1236 = vpop.permute.xlu0 %1235
        %1237 = vrot.lane.b32.xlu0 %v874, 1
        %v1238 = vpop.permute.xlu0 %1237
        %1239 = vrot.lane.b32.xlu0 %v878, 1
        %v1240 = vpop.permute.xlu0 %1239
        %v1241 = vsel %vm522, %v1178, %v1210
        %v1242 = vsel %vm522, %v1180, %v1212
        %v1243 = vsel %vm522, %v1182, %v1214
        %v1244 = vsel %vm522, %v1184, %v1216
        %v1245 = vsel %vm522, %v1186, %v1218
        %v1246 = vsel %vm522, %v1188, %v1220
        %v1247 = vsel %vm522, %v1190, %v1222
        %v1248 = vsel %vm522, %v1192, %v1224
        %v1249 = vsel %vm522, %v1194, %v1226
        %v1250 = vsel %vm522, %v1196, %v1228
        %v1251 = vsel %vm522, %v1198, %v1230
        %v1252 = vsel %vm522, %v1200, %v1232
        %v1253 = vsel %vm522, %v1202, %v1234
        %v1254 = vsel %vm522, %v1204, %v1236
        %v1255 = vsel %vm522, %v1206, %v1238
        %v1256 = vsel %vm522, %v1208, %v1240
        %v1257 = vsel %vm522, %v1210, %v1178
        %v1258 = vsel %vm522, %v1212, %v1180
        %v1259 = vsel %vm522, %v1214, %v1182
        %v1260 = vsel %vm522, %v1216, %v1184
        %v1261 = vsel %vm522, %v1218, %v1186
        %v1262 = vsel %vm522, %v1220, %v1188
        %v1263 = vsel %vm522, %v1222, %v1190
        %v1264 = vsel %vm522, %v1224, %v1192
        %v1265 = vsel %vm522, %v1226, %v1194
        %v1266 = vsel %vm522, %v1228, %v1196
        %v1267 = vsel %vm522, %v1230, %v1198
        %v1268 = vsel %vm522, %v1232, %v1200
        %v1269 = vsel %vm522, %v1234, %v1202
        %v1270 = vsel %vm522, %v1236, %v1204
        %v1271 = vsel %vm522, %v1238, %v1206
        %v1272 = vsel %vm522, %v1240, %v1208
        %v1273 = vsel %vm516, %v1257, 1.0
        %v1274 = vsel %vm517, %v1241, 1.0
        %v1275 = vsel %vm516, %v1258, 1.0
        %v1276 = vsel %vm517, %v1242, 1.0
        %v1277 = vsel %vm516, %v1259, 1.0
        %v1278 = vsel %vm517, %v1243, 1.0
        %v1279 = vsel %vm516, %v1260, 1.0
        %v1280 = vsel %vm517, %v1244, 1.0
        %v1281 = vsel %vm516, %v1261, 1.0
        %v1282 = vsel %vm517, %v1245, 1.0
        %v1283 = vsel %vm516, %v1262, 1.0
        %v1284 = vsel %vm517, %v1246, 1.0
        %v1285 = vsel %vm516, %v1263, 1.0
        %v1286 = vsel %vm517, %v1247, 1.0
        %v1287 = vsel %vm516, %v1264, 1.0
        %v1288 = vsel %vm517, %v1248, 1.0
        %v1289 = vsel %vm516, %v1265, 1.0
        %v1290 = vsel %vm517, %v1249, 1.0
        %v1291 = vsel %vm516, %v1266, 1.0
        %v1292 = vsel %vm517, %v1250, 1.0
        %v1293 = vsel %vm516, %v1267, 1.0
        %v1294 = vsel %vm517, %v1251, 1.0
        %v1295 = vsel %vm516, %v1268, 1.0
        %v1296 = vsel %vm517, %v1252, 1.0
        %v1297 = vsel %vm516, %v1269, 1.0
        %v1298 = vsel %vm517, %v1253, 1.0
        %v1299 = vsel %vm516, %v1270, 1.0
        %v1300 = vsel %vm517, %v1254, 1.0
        %v1301 = vsel %vm516, %v1271, 1.0
        %v1302 = vsel %vm517, %v1255, 1.0
        %v1303 = vsel %vm516, %v1272, 1.0
        %v1304 = vsel %vm517, %v1256, 1.0
        %1305 = vrot.lane.b32.xlu0 %v1145, 1
        %v1306 = vpop.permute.xlu0 %1305
        %1307 = vrot.lane.b32.xlu0 %v1147, 1
        %v1308 = vpop.permute.xlu0 %1307
        %1309 = vrot.lane.b32.xlu0 %v1149, 1
        %v1310 = vpop.permute.xlu0 %1309
        %1311 = vrot.lane.b32.xlu0 %v1151, 1
        %v1312 = vpop.permute.xlu0 %1311
        %1313 = vrot.lane.b32.xlu0 %v1153, 1
        %v1314 = vpop.permute.xlu0 %1313
        %1315 = vrot.lane.b32.xlu0 %v1155, 1
        %v1316 = vpop.permute.xlu0 %1315
        %1317 = vrot.lane.b32.xlu0 %v1157, 1
        %v1318 = vpop.permute.xlu0 %1317
        %1319 = vrot.lane.b32.xlu0 %v1159, 1
        %v1320 = vpop.permute.xlu0 %1319
        %1321 = vrot.lane.b32.xlu0 %v1161, 1
        %v1322 = vpop.permute.xlu0 %1321
        %1323 = vrot.lane.b32.xlu0 %v1163, 1
        %v1324 = vpop.permute.xlu0 %1323
        %1325 = vrot.lane.b32.xlu0 %v1165, 1
        %v1326 = vpop.permute.xlu0 %1325
        %1327 = vrot.lane.b32.xlu0 %v1167, 1
        %v1328 = vpop.permute.xlu0 %1327
        %1329 = vrot.lane.b32.xlu0 %v1169, 1
        %v1330 = vpop.permute.xlu0 %1329
        %1331 = vrot.lane.b32.xlu0 %v1171, 1
        %v1332 = vpop.permute.xlu0 %1331
        %1333 = vrot.lane.b32.xlu0 %v1173, 1
        %v1334 = vpop.permute.xlu0 %1333
        %1335 = vrot.lane.b32.xlu0 %v1175, 1
        %v1336 = vpop.permute.xlu0 %1335
        %1337 = vrot.lane.b32.xlu0 %v1146, 1
        %v1338 = vpop.permute.xlu0 %1337
        %1339 = vrot.lane.b32.xlu0 %v1148, 1
        %v1340 = vpop.permute.xlu0 %1339
        %1341 = vrot.lane.b32.xlu0 %v1150, 1
        %v1342 = vpop.permute.xlu0 %1341
        %1343 = vrot.lane.b32.xlu0 %v1152, 1
        %v1344 = vpop.permute.xlu0 %1343
        %1345 = vrot.lane.b32.xlu0 %v1154, 1
        %v1346 = vpop.permute.xlu0 %1345
        %1347 = vrot.lane.b32.xlu0 %v1156, 1
        %v1348 = vpop.permute.xlu0 %1347
        %1349 = vrot.lane.b32.xlu0 %v1158, 1
        %v1350 = vpop.permute.xlu0 %1349
        %1351 = vrot.lane.b32.xlu0 %v1160, 1
        %v1352 = vpop.permute.xlu0 %1351
        %1353 = vrot.lane.b32.xlu0 %v1162, 1
        %v1354 = vpop.permute.xlu0 %1353
        %1355 = vrot.lane.b32.xlu0 %v1164, 1
        %v1356 = vpop.permute.xlu0 %1355
        %1357 = vrot.lane.b32.xlu0 %v1166, 1
        %v1358 = vpop.permute.xlu0 %1357
        %1359 = vrot.lane.b32.xlu0 %v1168, 1
        %v1360 = vpop.permute.xlu0 %1359
        %1361 = vrot.lane.b32.xlu0 %v1170, 1
        %v1362 = vpop.permute.xlu0 %1361
        %1363 = vrot.lane.b32.xlu0 %v1172, 1
        %v1364 = vpop.permute.xlu0 %1363
        %1365 = vrot.lane.b32.xlu0 %v1174, 1
        %v1366 = vpop.permute.xlu0 %1365
        %1367 = vrot.lane.b32.xlu0 %v1176, 1
        %v1368 = vpop.permute.xlu0 %1367
        %v1369 = vsel %vm522, %v1306, %v1338
        %v1370 = vsel %vm522, %v1308, %v1340
        %v1371 = vsel %vm522, %v1310, %v1342
        %v1372 = vsel %vm522, %v1312, %v1344
        %v1373 = vsel %vm522, %v1314, %v1346
        %v1374 = vsel %vm522, %v1316, %v1348
        %v1375 = vsel %vm522, %v1318, %v1350
        %v1376 = vsel %vm522, %v1320, %v1352
        %v1377 = vsel %vm522, %v1322, %v1354
        %v1378 = vsel %vm522, %v1324, %v1356
        %v1379 = vsel %vm522, %v1326, %v1358
        %v1380 = vsel %vm522, %v1328, %v1360
        %v1381 = vsel %vm522, %v1330, %v1362
        %v1382 = vsel %vm522, %v1332, %v1364
        %v1383 = vsel %vm522, %v1334, %v1366
        %v1384 = vsel %vm522, %v1336, %v1368
        %v1385 = vsel %vm522, %v1338, %v1306
        %v1386 = vsel %vm522, %v1340, %v1308
        %v1387 = vsel %vm522, %v1342, %v1310
        %v1388 = vsel %vm522, %v1344, %v1312
        %v1389 = vsel %vm522, %v1346, %v1314
        %v1390 = vsel %vm522, %v1348, %v1316
        %v1391 = vsel %vm522, %v1350, %v1318
        %v1392 = vsel %vm522, %v1352, %v1320
        %v1393 = vsel %vm522, %v1354, %v1322
        %v1394 = vsel %vm522, %v1356, %v1324
        %v1395 = vsel %vm522, %v1358, %v1326
        %v1396 = vsel %vm522, %v1360, %v1328
        %v1397 = vsel %vm522, %v1362, %v1330
        %v1398 = vsel %vm522, %v1364, %v1332
        %v1399 = vsel %vm522, %v1366, %v1334
        %v1400 = vsel %vm522, %v1368, %v1336
        %v1401 = vsel %vm516, %v1385, 0.0
        %v1402 = vsel %vm517, %v1369, 0.0
        %v1403 = vsel %vm516, %v1386, 0.0
        %v1404 = vsel %vm517, %v1370, 0.0
        %v1405 = vsel %vm516, %v1387, 0.0
        %v1406 = vsel %vm517, %v1371, 0.0
        %v1407 = vsel %vm516, %v1388, 0.0
        %v1408 = vsel %vm517, %v1372, 0.0
        %v1409 = vsel %vm516, %v1389, 0.0
        %v1410 = vsel %vm517, %v1373, 0.0
        %v1411 = vsel %vm516, %v1390, 0.0
        %v1412 = vsel %vm517, %v1374, 0.0
        %v1413 = vsel %vm516, %v1391, 0.0
        %v1414 = vsel %vm517, %v1375, 0.0
        %v1415 = vsel %vm516, %v1392, 0.0
        %v1416 = vsel %vm517, %v1376, 0.0
        %v1417 = vsel %vm516, %v1393, 0.0
        %v1418 = vsel %vm517, %v1377, 0.0
        %v1419 = vsel %vm516, %v1394, 0.0
        %v1420 = vsel %vm517, %v1378, 0.0
        %v1421 = vsel %vm516, %v1395, 0.0
        %v1422 = vsel %vm517, %v1379, 0.0
        %v1423 = vsel %vm516, %v1396, 0.0
        %v1424 = vsel %vm517, %v1380, 0.0
        %v1425 = vsel %vm516, %v1397, 0.0
        %v1426 = vsel %vm517, %v1381, 0.0
        %v1427 = vsel %vm516, %v1398, 0.0
        %v1428 = vsel %vm517, %v1382, 0.0
        %v1429 = vsel %vm516, %v1399, 0.0
        %v1430 = vsel %vm517, %v1383, 0.0
        %v1431 = vsel %vm516, %v1400, 0.0
        %v1432 = vsel %vm517, %v1384, 0.0
        %v1433 = vmul.f32 %v816, %v1401
        %v1434 = vmul.f32 %v818, %v1402
        %v1435 = vmul.f32 %v820, %v1403
        %v1436 = vmul.f32 %v822, %v1404
        %v1437 = vmul.f32 %v824, %v1405
        %v1438 = vmul.f32 %v826, %v1406
        %v1439 = vmul.f32 %v828, %v1407
        %v1440 = vmul.f32 %v830, %v1408
        %v1441 = vmul.f32 %v832, %v1409
        %v1442 = vmul.f32 %v834, %v1410
        %v1443 = vmul.f32 %v836, %v1411
        %v1444 = vmul.f32 %v838, %v1412
        %v1445 = vmul.f32 %v840, %v1413
        %v1446 = vmul.f32 %v842, %v1414
        %v1447 = vmul.f32 %v844, %v1415
        %v1448 = vmul.f32 %v846, %v1416
        %v1449 = vmul.f32 %v848, %v1417
        %v1450 = vmul.f32 %v850, %v1418
        %v1451 = vmul.f32 %v852, %v1419
        %v1452 = vmul.f32 %v854, %v1420
        %v1453 = vmul.f32 %v856, %v1421
        %v1454 = vmul.f32 %v858, %v1422
        %v1455 = vmul.f32 %v860, %v1423
        %v1456 = vmul.f32 %v862, %v1424
        %v1457 = vmul.f32 %v864, %v1425
        %v1458 = vmul.f32 %v866, %v1426
        %v1459 = vmul.f32 %v868, %v1427
        %v1460 = vmul.f32 %v870, %v1428
        %v1461 = vmul.f32 %v872, %v1429
        %v1462 = vmul.f32 %v874, %v1430
        %v1463 = vmul.f32 %v876, %v1431
        %v1464 = vmul.f32 %v878, %v1432
        %v1465 = vadd.f32 %v1433, %v1145
        %v1466 = vadd.f32 %v1434, %v1146
        %v1467 = vadd.f32 %v1435, %v1147
        %v1468 = vadd.f32 %v1436, %v1148
        %v1469 = vadd.f32 %v1437, %v1149
        %v1470 = vadd.f32 %v1438, %v1150
        %v1471 = vadd.f32 %v1439, %v1151
        %v1472 = vadd.f32 %v1440, %v1152
        %v1473 = vadd.f32 %v1441, %v1153
        %v1474 = vadd.f32 %v1442, %v1154
        %v1475 = vadd.f32 %v1443, %v1155
        %v1476 = vadd.f32 %v1444, %v1156
        %v1477 = vadd.f32 %v1445, %v1157
        %v1478 = vadd.f32 %v1446, %v1158
        %v1479 = vadd.f32 %v1447, %v1159
        %v1480 = vadd.f32 %v1448, %v1160
        %v1481 = vadd.f32 %v1449, %v1161
        %v1482 = vadd.f32 %v1450, %v1162
        %v1483 = vadd.f32 %v1451, %v1163
        %v1484 = vadd.f32 %v1452, %v1164
        %v1485 = vadd.f32 %v1453, %v1165
        %v1486 = vadd.f32 %v1454, %v1166
        %v1487 = vadd.f32 %v1455, %v1167
        %v1488 = vadd.f32 %v1456, %v1168
        %v1489 = vadd.f32 %v1457, %v1169
        %v1490 = vadd.f32 %v1458, %v1170
        %v1491 = vadd.f32 %v1459, %v1171
        %v1492 = vadd.f32 %v1460, %v1172
        %v1493 = vadd.f32 %v1461, %v1173
        %v1494 = vadd.f32 %v1462, %v1174
        %v1495 = vadd.f32 %v1463, %v1175
        %v1496 = vadd.f32 %v1464, %v1176
        %v1497 = vmul.f32 %v816, %v1273
        %v1498 = vmul.f32 %v818, %v1274
        %v1499 = vmul.f32 %v820, %v1275
        %v1500 = vmul.f32 %v822, %v1276
        %v1501 = vmul.f32 %v824, %v1277
        %v1502 = vmul.f32 %v826, %v1278
        %v1503 = vmul.f32 %v828, %v1279
        %v1504 = vmul.f32 %v830, %v1280
        %v1505 = vmul.f32 %v832, %v1281
        %v1506 = vmul.f32 %v834, %v1282
        %v1507 = vmul.f32 %v836, %v1283
        %v1508 = vmul.f32 %v838, %v1284
        %v1509 = vmul.f32 %v840, %v1285
        %v1510 = vmul.f32 %v842, %v1286
        %v1511 = vmul.f32 %v844, %v1287
        %v1512 = vmul.f32 %v846, %v1288
        %v1513 = vmul.f32 %v848, %v1289
        %v1514 = vmul.f32 %v850, %v1290
        %v1515 = vmul.f32 %v852, %v1291
        %v1516 = vmul.f32 %v854, %v1292
        %v1517 = vmul.f32 %v856, %v1293
        %v1518 = vmul.f32 %v858, %v1294
        %v1519 = vmul.f32 %v860, %v1295
        %v1520 = vmul.f32 %v862, %v1296
        %v1521 = vmul.f32 %v864, %v1297
        %v1522 = vmul.f32 %v866, %v1298
        %v1523 = vmul.f32 %v868, %v1299
        %v1524 = vmul.f32 %v870, %v1300
        %v1525 = vmul.f32 %v872, %v1301
        %v1526 = vmul.f32 %v874, %v1302
        %v1527 = vmul.f32 %v876, %v1303
        %v1528 = vmul.f32 %v878, %v1304
        %1529 = vrot.lane.b32.xlu0 %v1497, 2
        %v1530 = vpop.permute.xlu0 %1529
        %1531 = vrot.lane.b32.xlu0 %v1499, 2
        %v1532 = vpop.permute.xlu0 %1531
        %1533 = vrot.lane.b32.xlu0 %v1501, 2
        %v1534 = vpop.permute.xlu0 %1533
        %1535 = vrot.lane.b32.xlu0 %v1503, 2
        %v1536 = vpop.permute.xlu0 %1535
        %1537 = vrot.lane.b32.xlu0 %v1505, 2
        %v1538 = vpop.permute.xlu0 %1537
        %1539 = vrot.lane.b32.xlu0 %v1507, 2
        %v1540 = vpop.permute.xlu0 %1539
        %1541 = vrot.lane.b32.xlu0 %v1509, 2
        %v1542 = vpop.permute.xlu0 %1541
        %1543 = vrot.lane.b32.xlu0 %v1511, 2
        %v1544 = vpop.permute.xlu0 %1543
        %1545 = vrot.lane.b32.xlu0 %v1513, 2
        %v1546 = vpop.permute.xlu0 %1545
        %1547 = vrot.lane.b32.xlu0 %v1515, 2
        %v1548 = vpop.permute.xlu0 %1547
        %1549 = vrot.lane.b32.xlu0 %v1517, 2
        %v1550 = vpop.permute.xlu0 %1549
        %1551 = vrot.lane.b32.xlu0 %v1519, 2
        %v1552 = vpop.permute.xlu0 %1551
        %1553 = vrot.lane.b32.xlu0 %v1521, 2
        %v1554 = vpop.permute.xlu0 %1553
        %1555 = vrot.lane.b32.xlu0 %v1523, 2
        %v1556 = vpop.permute.xlu0 %1555
        %1557 = vrot.lane.b32.xlu0 %v1525, 2
        %v1558 = vpop.permute.xlu0 %1557
        %1559 = vrot.lane.b32.xlu0 %v1527, 2
        %v1560 = vpop.permute.xlu0 %1559
        %1561 = vrot.lane.b32.xlu0 %v1498, 2
        %v1562 = vpop.permute.xlu0 %1561
        %1563 = vrot.lane.b32.xlu0 %v1500, 2
        %v1564 = vpop.permute.xlu0 %1563
        %1565 = vrot.lane.b32.xlu0 %v1502, 2
        %v1566 = vpop.permute.xlu0 %1565
        %1567 = vrot.lane.b32.xlu0 %v1504, 2
        %v1568 = vpop.permute.xlu0 %1567
        %1569 = vrot.lane.b32.xlu0 %v1506, 2
        %v1570 = vpop.permute.xlu0 %1569
        %1571 = vrot.lane.b32.xlu0 %v1508, 2
        %v1572 = vpop.permute.xlu0 %1571
        %1573 = vrot.lane.b32.xlu0 %v1510, 2
        %v1574 = vpop.permute.xlu0 %1573
        %1575 = vrot.lane.b32.xlu0 %v1512, 2
        %v1576 = vpop.permute.xlu0 %1575
        %1577 = vrot.lane.b32.xlu0 %v1514, 2
        %v1578 = vpop.permute.xlu0 %1577
        %1579 = vrot.lane.b32.xlu0 %v1516, 2
        %v1580 = vpop.permute.xlu0 %1579
        %1581 = vrot.lane.b32.xlu0 %v1518, 2
        %v1582 = vpop.permute.xlu0 %1581
        %1583 = vrot.lane.b32.xlu0 %v1520, 2
        %v1584 = vpop.permute.xlu0 %1583
        %1585 = vrot.lane.b32.xlu0 %v1522, 2
        %v1586 = vpop.permute.xlu0 %1585
        %1587 = vrot.lane.b32.xlu0 %v1524, 2
        %v1588 = vpop.permute.xlu0 %1587
        %1589 = vrot.lane.b32.xlu0 %v1526, 2
        %v1590 = vpop.permute.xlu0 %1589
        %1591 = vrot.lane.b32.xlu0 %v1528, 2
        %v1592 = vpop.permute.xlu0 %1591
        %v1593 = vsel %vm497, %v1530, %v1562
        %v1594 = vsel %vm497, %v1532, %v1564
        %v1595 = vsel %vm497, %v1534, %v1566
        %v1596 = vsel %vm497, %v1536, %v1568
        %v1597 = vsel %vm497, %v1538, %v1570
        %v1598 = vsel %vm497, %v1540, %v1572
        %v1599 = vsel %vm497, %v1542, %v1574
        %v1600 = vsel %vm497, %v1544, %v1576
        %v1601 = vsel %vm497, %v1546, %v1578
        %v1602 = vsel %vm497, %v1548, %v1580
        %v1603 = vsel %vm497, %v1550, %v1582
        %v1604 = vsel %vm497, %v1552, %v1584
        %v1605 = vsel %vm497, %v1554, %v1586
        %v1606 = vsel %vm497, %v1556, %v1588
        %v1607 = vsel %vm497, %v1558, %v1590
        %v1608 = vsel %vm497, %v1560, %v1592
        %v1609 = vsel %vm497, %v1562, %v1530
        %v1610 = vsel %vm497, %v1564, %v1532
        %v1611 = vsel %vm497, %v1566, %v1534
        %v1612 = vsel %vm497, %v1568, %v1536
        %v1613 = vsel %vm497, %v1570, %v1538
        %v1614 = vsel %vm497, %v1572, %v1540
        %v1615 = vsel %vm497, %v1574, %v1542
        %v1616 = vsel %vm497, %v1576, %v1544
        %v1617 = vsel %vm497, %v1578, %v1546
        %v1618 = vsel %vm497, %v1580, %v1548
        %v1619 = vsel %vm497, %v1582, %v1550
        %v1620 = vsel %vm497, %v1584, %v1552
        %v1621 = vsel %vm497, %v1586, %v1554
        %v1622 = vsel %vm497, %v1588, %v1556
        %v1623 = vsel %vm497, %v1590, %v1558
        %v1624 = vsel %vm497, %v1592, %v1560
        %v1625 = vsel %vm491, %v1609, 1.0
        %v1626 = vsel %vm492, %v1593, 1.0
        %v1627 = vsel %vm491, %v1610, 1.0
        %v1628 = vsel %vm492, %v1594, 1.0
        %v1629 = vsel %vm491, %v1611, 1.0
        %v1630 = vsel %vm492, %v1595, 1.0
        %v1631 = vsel %vm491, %v1612, 1.0
        %v1632 = vsel %vm492, %v1596, 1.0
        %v1633 = vsel %vm491, %v1613, 1.0
        %v1634 = vsel %vm492, %v1597, 1.0
        %v1635 = vsel %vm491, %v1614, 1.0
        %v1636 = vsel %vm492, %v1598, 1.0
        %v1637 = vsel %vm491, %v1615, 1.0
        %v1638 = vsel %vm492, %v1599, 1.0
        %v1639 = vsel %vm491, %v1616, 1.0
        %v1640 = vsel %vm492, %v1600, 1.0
        %v1641 = vsel %vm491, %v1617, 1.0
        %v1642 = vsel %vm492, %v1601, 1.0
        %v1643 = vsel %vm491, %v1618, 1.0
        %v1644 = vsel %vm492, %v1602, 1.0
        %v1645 = vsel %vm491, %v1619, 1.0
        %v1646 = vsel %vm492, %v1603, 1.0
        %v1647 = vsel %vm491, %v1620, 1.0
        %v1648 = vsel %vm492, %v1604, 1.0
        %v1649 = vsel %vm491, %v1621, 1.0
        %v1650 = vsel %vm492, %v1605, 1.0
        %v1651 = vsel %vm491, %v1622, 1.0
        %v1652 = vsel %vm492, %v1606, 1.0
        %v1653 = vsel %vm491, %v1623, 1.0
        %v1654 = vsel %vm492, %v1607, 1.0
        %v1655 = vsel %vm491, %v1624, 1.0
        %v1656 = vsel %vm492, %v1608, 1.0
        %1657 = vrot.lane.b32.xlu0 %v1465, 2
        %v1658 = vpop.permute.xlu0 %1657
        %1659 = vrot.lane.b32.xlu0 %v1467, 2
        %v1660 = vpop.permute.xlu0 %1659
        %1661 = vrot.lane.b32.xlu0 %v1469, 2
        %v1662 = vpop.permute.xlu0 %1661
        %1663 = vrot.lane.b32.xlu0 %v1471, 2
        %v1664 = vpop.permute.xlu0 %1663
        %1665 = vrot.lane.b32.xlu0 %v1473, 2
        %v1666 = vpop.permute.xlu0 %1665
        %1667 = vrot.lane.b32.xlu0 %v1475, 2
        %v1668 = vpop.permute.xlu0 %1667
        %1669 = vrot.lane.b32.xlu0 %v1477, 2
        %v1670 = vpop.permute.xlu0 %1669
        %1671 = vrot.lane.b32.xlu0 %v1479, 2
        %v1672 = vpop.permute.xlu0 %1671
        %1673 = vrot.lane.b32.xlu0 %v1481, 2
        %v1674 = vpop.permute.xlu0 %1673
        %1675 = vrot.lane.b32.xlu0 %v1483, 2
        %v1676 = vpop.permute.xlu0 %1675
        %1677 = vrot.lane.b32.xlu0 %v1485, 2
        %v1678 = vpop.permute.xlu0 %1677
        %1679 = vrot.lane.b32.xlu0 %v1487, 2
        %v1680 = vpop.permute.xlu0 %1679
        %1681 = vrot.lane.b32.xlu0 %v1489, 2
        %v1682 = vpop.permute.xlu0 %1681
        %1683 = vrot.lane.b32.xlu0 %v1491, 2
        %v1684 = vpop.permute.xlu0 %1683
        %1685 = vrot.lane.b32.xlu0 %v1493, 2
        %v1686 = vpop.permute.xlu0 %1685
        %1687 = vrot.lane.b32.xlu0 %v1495, 2
        %v1688 = vpop.permute.xlu0 %1687
        %1689 = vrot.lane.b32.xlu0 %v1466, 2
        %v1690 = vpop.permute.xlu0 %1689
        %1691 = vrot.lane.b32.xlu0 %v1468, 2
        %v1692 = vpop.permute.xlu0 %1691
        %1693 = vrot.lane.b32.xlu0 %v1470, 2
        %v1694 = vpop.permute.xlu0 %1693
        %1695 = vrot.lane.b32.xlu0 %v1472, 2
        %v1696 = vpop.permute.xlu0 %1695
        %1697 = vrot.lane.b32.xlu0 %v1474, 2
        %v1698 = vpop.permute.xlu0 %1697
        %1699 = vrot.lane.b32.xlu0 %v1476, 2
        %v1700 = vpop.permute.xlu0 %1699
        %1701 = vrot.lane.b32.xlu0 %v1478, 2
        %v1702 = vpop.permute.xlu0 %1701
        %1703 = vrot.lane.b32.xlu0 %v1480, 2
        %v1704 = vpop.permute.xlu0 %1703
        %1705 = vrot.lane.b32.xlu0 %v1482, 2
        %v1706 = vpop.permute.xlu0 %1705
        %1707 = vrot.lane.b32.xlu0 %v1484, 2
        %v1708 = vpop.permute.xlu0 %1707
        %1709 = vrot.lane.b32.xlu0 %v1486, 2
        %v1710 = vpop.permute.xlu0 %1709
        %1711 = vrot.lane.b32.xlu0 %v1488, 2
        %v1712 = vpop.permute.xlu0 %1711
        %1713 = vrot.lane.b32.xlu0 %v1490, 2
        %v1714 = vpop.permute.xlu0 %1713
        %1715 = vrot.lane.b32.xlu0 %v1492, 2
        %v1716 = vpop.permute.xlu0 %1715
        %1717 = vrot.lane.b32.xlu0 %v1494, 2
        %v1718 = vpop.permute.xlu0 %1717
        %1719 = vrot.lane.b32.xlu0 %v1496, 2
        %v1720 = vpop.permute.xlu0 %1719
        %v1721 = vsel %vm497, %v1658, %v1690
        %v1722 = vsel %vm497, %v1660, %v1692
        %v1723 = vsel %vm497, %v1662, %v1694
        %v1724 = vsel %vm497, %v1664, %v1696
        %v1725 = vsel %vm497, %v1666, %v1698
        %v1726 = vsel %vm497, %v1668, %v1700
        %v1727 = vsel %vm497, %v1670, %v1702
        %v1728 = vsel %vm497, %v1672, %v1704
        %v1729 = vsel %vm497, %v1674, %v1706
        %v1730 = vsel %vm497, %v1676, %v1708
        %v1731 = vsel %vm497, %v1678, %v1710
        %v1732 = vsel %vm497, %v1680, %v1712
        %v1733 = vsel %vm497, %v1682, %v1714
        %v1734 = vsel %vm497, %v1684, %v1716
        %v1735 = vsel %vm497, %v1686, %v1718
        %v1736 = vsel %vm497, %v1688, %v1720
        %v1737 = vsel %vm497, %v1690, %v1658
        %v1738 = vsel %vm497, %v1692, %v1660
        %v1739 = vsel %vm497, %v1694, %v1662
        %v1740 = vsel %vm497, %v1696, %v1664
        %v1741 = vsel %vm497, %v1698, %v1666
        %v1742 = vsel %vm497, %v1700, %v1668
        %v1743 = vsel %vm497, %v1702, %v1670
        %v1744 = vsel %vm497, %v1704, %v1672
        %v1745 = vsel %vm497, %v1706, %v1674
        %v1746 = vsel %vm497, %v1708, %v1676
        %v1747 = vsel %vm497, %v1710, %v1678
        %v1748 = vsel %vm497, %v1712, %v1680
        %v1749 = vsel %vm497, %v1714, %v1682
        %v1750 = vsel %vm497, %v1716, %v1684
        %v1751 = vsel %vm497, %v1718, %v1686
        %v1752 = vsel %vm497, %v1720, %v1688
        %v1753 = vsel %vm491, %v1737, 0.0
        %v1754 = vsel %vm492, %v1721, 0.0
        %v1755 = vsel %vm491, %v1738, 0.0
        %v1756 = vsel %vm492, %v1722, 0.0
        %v1757 = vsel %vm491, %v1739, 0.0
        %v1758 = vsel %vm492, %v1723, 0.0
        %v1759 = vsel %vm491, %v1740, 0.0
        %v1760 = vsel %vm492, %v1724, 0.0
        %v1761 = vsel %vm491, %v1741, 0.0
        %v1762 = vsel %vm492, %v1725, 0.0
        %v1763 = vsel %vm491, %v1742, 0.0
        %v1764 = vsel %vm492, %v1726, 0.0
        %v1765 = vsel %vm491, %v1743, 0.0
        %v1766 = vsel %vm492, %v1727, 0.0
        %v1767 = vsel %vm491, %v1744, 0.0
        %v1768 = vsel %vm492, %v1728, 0.0
        %v1769 = vsel %vm491, %v1745, 0.0
        %v1770 = vsel %vm492, %v1729, 0.0
        %v1771 = vsel %vm491, %v1746, 0.0
        %v1772 = vsel %vm492, %v1730, 0.0
        %v1773 = vsel %vm491, %v1747, 0.0
        %v1774 = vsel %vm492, %v1731, 0.0
        %v1775 = vsel %vm491, %v1748, 0.0
        %v1776 = vsel %vm492, %v1732, 0.0
        %v1777 = vsel %vm491, %v1749, 0.0
        %v1778 = vsel %vm492, %v1733, 0.0
        %v1779 = vsel %vm491, %v1750, 0.0
        %v1780 = vsel %vm492, %v1734, 0.0
        %v1781 = vsel %vm491, %v1751, 0.0
        %v1782 = vsel %vm492, %v1735, 0.0
        %v1783 = vsel %vm491, %v1752, 0.0
        %v1784 = vsel %vm492, %v1736, 0.0
        %v1785 = vmul.f32 %v1497, %v1753
        %v1786 = vmul.f32 %v1498, %v1754
        %v1787 = vmul.f32 %v1499, %v1755
        %v1788 = vmul.f32 %v1500, %v1756
        %v1789 = vmul.f32 %v1501, %v1757
        %v1790 = vmul.f32 %v1502, %v1758
        %v1791 = vmul.f32 %v1503, %v1759
        %v1792 = vmul.f32 %v1504, %v1760
        %v1793 = vmul.f32 %v1505, %v1761
        %v1794 = vmul.f32 %v1506, %v1762
        %v1795 = vmul.f32 %v1507, %v1763
        %v1796 = vmul.f32 %v1508, %v1764
        %v1797 = vmul.f32 %v1509, %v1765
        %v1798 = vmul.f32 %v1510, %v1766
        %v1799 = vmul.f32 %v1511, %v1767
        %v1800 = vmul.f32 %v1512, %v1768
        %v1801 = vmul.f32 %v1513, %v1769
        %v1802 = vmul.f32 %v1514, %v1770
        %v1803 = vmul.f32 %v1515, %v1771
        %v1804 = vmul.f32 %v1516, %v1772
        %v1805 = vmul.f32 %v1517, %v1773
        %v1806 = vmul.f32 %v1518, %v1774
        %v1807 = vmul.f32 %v1519, %v1775
        %v1808 = vmul.f32 %v1520, %v1776
        %v1809 = vmul.f32 %v1521, %v1777
        %v1810 = vmul.f32 %v1522, %v1778
        %v1811 = vmul.f32 %v1523, %v1779
        %v1812 = vmul.f32 %v1524, %v1780
        %v1813 = vmul.f32 %v1525, %v1781
        %v1814 = vmul.f32 %v1526, %v1782
        %v1815 = vmul.f32 %v1527, %v1783
        %v1816 = vmul.f32 %v1528, %v1784
        %v1817 = vadd.f32 %v1785, %v1465
        %v1818 = vadd.f32 %v1786, %v1466
        %v1819 = vadd.f32 %v1787, %v1467
        %v1820 = vadd.f32 %v1788, %v1468
        %v1821 = vadd.f32 %v1789, %v1469
        %v1822 = vadd.f32 %v1790, %v1470
        %v1823 = vadd.f32 %v1791, %v1471
        %v1824 = vadd.f32 %v1792, %v1472
        %v1825 = vadd.f32 %v1793, %v1473
        %v1826 = vadd.f32 %v1794, %v1474
        %v1827 = vadd.f32 %v1795, %v1475
        %v1828 = vadd.f32 %v1796, %v1476
        %v1829 = vadd.f32 %v1797, %v1477
        %v1830 = vadd.f32 %v1798, %v1478
        %v1831 = vadd.f32 %v1799, %v1479
        %v1832 = vadd.f32 %v1800, %v1480
        %v1833 = vadd.f32 %v1801, %v1481
        %v1834 = vadd.f32 %v1802, %v1482
        %v1835 = vadd.f32 %v1803, %v1483
        %v1836 = vadd.f32 %v1804, %v1484
        %v1837 = vadd.f32 %v1805, %v1485
        %v1838 = vadd.f32 %v1806, %v1486
        %v1839 = vadd.f32 %v1807, %v1487
        %v1840 = vadd.f32 %v1808, %v1488
        %v1841 = vadd.f32 %v1809, %v1489
        %v1842 = vadd.f32 %v1810, %v1490
        %v1843 = vadd.f32 %v1811, %v1491
        %v1844 = vadd.f32 %v1812, %v1492
        %v1845 = vadd.f32 %v1813, %v1493
        %v1846 = vadd.f32 %v1814, %v1494
        %v1847 = vadd.f32 %v1815, %v1495
        %v1848 = vadd.f32 %v1816, %v1496
        %v1849 = vmul.f32 %v1497, %v1625
        %v1850 = vmul.f32 %v1498, %v1626
        %v1851 = vmul.f32 %v1499, %v1627
        %v1852 = vmul.f32 %v1500, %v1628
        %v1853 = vmul.f32 %v1501, %v1629
        %v1854 = vmul.f32 %v1502, %v1630
        %v1855 = vmul.f32 %v1503, %v1631
        %v1856 = vmul.f32 %v1504, %v1632
        %v1857 = vmul.f32 %v1505, %v1633
        %v1858 = vmul.f32 %v1506, %v1634
        %v1859 = vmul.f32 %v1507, %v1635
        %v1860 = vmul.f32 %v1508, %v1636
        %v1861 = vmul.f32 %v1509, %v1637
        %v1862 = vmul.f32 %v1510, %v1638
        %v1863 = vmul.f32 %v1511, %v1639
        %v1864 = vmul.f32 %v1512, %v1640
        %v1865 = vmul.f32 %v1513, %v1641
        %v1866 = vmul.f32 %v1514, %v1642
        %v1867 = vmul.f32 %v1515, %v1643
        %v1868 = vmul.f32 %v1516, %v1644
        %v1869 = vmul.f32 %v1517, %v1645
        %v1870 = vmul.f32 %v1518, %v1646
        %v1871 = vmul.f32 %v1519, %v1647
        %v1872 = vmul.f32 %v1520, %v1648
        %v1873 = vmul.f32 %v1521, %v1649
        %v1874 = vmul.f32 %v1522, %v1650
        %v1875 = vmul.f32 %v1523, %v1651
        %v1876 = vmul.f32 %v1524, %v1652
        %v1877 = vmul.f32 %v1525, %v1653
        %v1878 = vmul.f32 %v1526, %v1654
        %v1879 = vmul.f32 %v1527, %v1655
        %v1880 = vmul.f32 %v1528, %v1656
        %vm1881 = vcmp.ge.s32.totalorder %v456, 4
        %vm1882 = vcmp.ge.s32.totalorder %v457, 4
        %1883 = vrot.lane.b32.xlu0 %v1849, 4
        %v1884 = vpop.permute.xlu0 %1883
        %1885 = vrot.lane.b32.xlu0 %v1851, 4
        %v1886 = vpop.permute.xlu0 %1885
        %1887 = vrot.lane.b32.xlu0 %v1853, 4
        %v1888 = vpop.permute.xlu0 %1887
        %1889 = vrot.lane.b32.xlu0 %v1855, 4
        %v1890 = vpop.permute.xlu0 %1889
        %1891 = vrot.lane.b32.xlu0 %v1857, 4
        %v1892 = vpop.permute.xlu0 %1891
        %1893 = vrot.lane.b32.xlu0 %v1859, 4
        %v1894 = vpop.permute.xlu0 %1893
        %1895 = vrot.lane.b32.xlu0 %v1861, 4
        %v1896 = vpop.permute.xlu0 %1895
        %1897 = vrot.lane.b32.xlu0 %v1863, 4
        %v1898 = vpop.permute.xlu0 %1897
        %1899 = vrot.lane.b32.xlu0 %v1865, 4
        %v1900 = vpop.permute.xlu0 %1899
        %1901 = vrot.lane.b32.xlu0 %v1867, 4
        %v1902 = vpop.permute.xlu0 %1901
        %1903 = vrot.lane.b32.xlu0 %v1869, 4
        %v1904 = vpop.permute.xlu0 %1903
        %1905 = vrot.lane.b32.xlu0 %v1871, 4
        %v1906 = vpop.permute.xlu0 %1905
        %1907 = vrot.lane.b32.xlu0 %v1873, 4
        %v1908 = vpop.permute.xlu0 %1907
        %1909 = vrot.lane.b32.xlu0 %v1875, 4
        %v1910 = vpop.permute.xlu0 %1909
        %1911 = vrot.lane.b32.xlu0 %v1877, 4
        %v1912 = vpop.permute.xlu0 %1911
        %1913 = vrot.lane.b32.xlu0 %v1879, 4
        %v1914 = vpop.permute.xlu0 %1913
        %1915 = vrot.lane.b32.xlu0 %v1850, 4
        %v1916 = vpop.permute.xlu0 %1915
        %1917 = vrot.lane.b32.xlu0 %v1852, 4
        %v1918 = vpop.permute.xlu0 %1917
        %1919 = vrot.lane.b32.xlu0 %v1854, 4
        %v1920 = vpop.permute.xlu0 %1919
        %1921 = vrot.lane.b32.xlu0 %v1856, 4
        %v1922 = vpop.permute.xlu0 %1921
        %1923 = vrot.lane.b32.xlu0 %v1858, 4
        %v1924 = vpop.permute.xlu0 %1923
        %1925 = vrot.lane.b32.xlu0 %v1860, 4
        %v1926 = vpop.permute.xlu0 %1925
        %1927 = vrot.lane.b32.xlu0 %v1862, 4
        %v1928 = vpop.permute.xlu0 %1927
        %1929 = vrot.lane.b32.xlu0 %v1864, 4
        %v1930 = vpop.permute.xlu0 %1929
        %1931 = vrot.lane.b32.xlu0 %v1866, 4
        %v1932 = vpop.permute.xlu0 %1931
        %1933 = vrot.lane.b32.xlu0 %v1868, 4
        %v1934 = vpop.permute.xlu0 %1933
        %1935 = vrot.lane.b32.xlu0 %v1870, 4
        %v1936 = vpop.permute.xlu0 %1935
        %1937 = vrot.lane.b32.xlu0 %v1872, 4
        %v1938 = vpop.permute.xlu0 %1937
        %1939 = vrot.lane.b32.xlu0 %v1874, 4
        %v1940 = vpop.permute.xlu0 %1939
        %1941 = vrot.lane.b32.xlu0 %v1876, 4
        %v1942 = vpop.permute.xlu0 %1941
        %1943 = vrot.lane.b32.xlu0 %v1878, 4
        %v1944 = vpop.permute.xlu0 %1943
        %1945 = vrot.lane.b32.xlu0 %v1880, 4
        %v1946 = vpop.permute.xlu0 %1945
        %vm1947 = vcmp.lt.s32.totalorder %v456, 4
        %v1948 = vsel %vm1947, %v1884, %v1916
        %v1949 = vsel %vm1947, %v1886, %v1918
        %v1950 = vsel %vm1947, %v1888, %v1920
        %v1951 = vsel %vm1947, %v1890, %v1922
        %v1952 = vsel %vm1947, %v1892, %v1924
        %v1953 = vsel %vm1947, %v1894, %v1926
        %v1954 = vsel %vm1947, %v1896, %v1928
        %v1955 = vsel %vm1947, %v1898, %v1930
        %v1956 = vsel %vm1947, %v1900, %v1932
        %v1957 = vsel %vm1947, %v1902, %v1934
        %v1958 = vsel %vm1947, %v1904, %v1936
        %v1959 = vsel %vm1947, %v1906, %v1938
        %v1960 = vsel %vm1947, %v1908, %v1940
        %v1961 = vsel %vm1947, %v1910, %v1942
        %v1962 = vsel %vm1947, %v1912, %v1944
        %v1963 = vsel %vm1947, %v1914, %v1946
        %v1964 = vsel %vm1947, %v1916, %v1884
        %v1965 = vsel %vm1947, %v1918, %v1886
        %v1966 = vsel %vm1947, %v1920, %v1888
        %v1967 = vsel %vm1947, %v1922, %v1890
        %v1968 = vsel %vm1947, %v1924, %v1892
        %v1969 = vsel %vm1947, %v1926, %v1894
        %v1970 = vsel %vm1947, %v1928, %v1896
        %v1971 = vsel %vm1947, %v1930, %v1898
        %v1972 = vsel %vm1947, %v1932, %v1900
        %v1973 = vsel %vm1947, %v1934, %v1902
        %v1974 = vsel %vm1947, %v1936, %v1904
        %v1975 = vsel %vm1947, %v1938, %v1906
        %v1976 = vsel %vm1947, %v1940, %v1908
        %v1977 = vsel %vm1947, %v1942, %v1910
        %v1978 = vsel %vm1947, %v1944, %v1912
        %v1979 = vsel %vm1947, %v1946, %v1914
        %v1980 = vsel %vm1881, %v1964, 1.0
        %v1981 = vsel %vm1882, %v1948, 1.0
        %v1982 = vsel %vm1881, %v1965, 1.0
        %v1983 = vsel %vm1882, %v1949, 1.0
        %v1984 = vsel %vm1881, %v1966, 1.0
        %v1985 = vsel %vm1882, %v1950, 1.0
        %v1986 = vsel %vm1881, %v1967, 1.0
        %v1987 = vsel %vm1882, %v1951, 1.0
        %v1988 = vsel %vm1881, %v1968, 1.0
        %v1989 = vsel %vm1882, %v1952, 1.0
        %v1990 = vsel %vm1881, %v1969, 1.0
        %v1991 = vsel %vm1882, %v1953, 1.0
        %v1992 = vsel %vm1881, %v1970, 1.0
        %v1993 = vsel %vm1882, %v1954, 1.0
        %v1994 = vsel %vm1881, %v1971, 1.0
        %v1995 = vsel %vm1882, %v1955, 1.0
        %v1996 = vsel %vm1881, %v1972, 1.0
        %v1997 = vsel %vm1882, %v1956, 1.0
        %v1998 = vsel %vm1881, %v1973, 1.0
        %v1999 = vsel %vm1882, %v1957, 1.0
        %v2000 = vsel %vm1881, %v1974, 1.0
        %v2001 = vsel %vm1882, %v1958, 1.0
        %v2002 = vsel %vm1881, %v1975, 1.0
        %v2003 = vsel %vm1882, %v1959, 1.0
        %v2004 = vsel %vm1881, %v1976, 1.0
        %v2005 = vsel %vm1882, %v1960, 1.0
        %v2006 = vsel %vm1881, %v1977, 1.0
        %v2007 = vsel %vm1882, %v1961, 1.0
        %v2008 = vsel %vm1881, %v1978, 1.0
        %v2009 = vsel %vm1882, %v1962, 1.0
        %v2010 = vsel %vm1881, %v1979, 1.0
        %v2011 = vsel %vm1882, %v1963, 1.0
        %2012 = vrot.lane.b32.xlu0 %v1817, 4
        %v2013 = vpop.permute.xlu0 %2012
        %2014 = vrot.lane.b32.xlu0 %v1819, 4
        %v2015 = vpop.permute.xlu0 %2014
        %2016 = vrot.lane.b32.xlu0 %v1821, 4
        %v2017 = vpop.permute.xlu0 %2016
        %2018 = vrot.lane.b32.xlu0 %v1823, 4
        %v2019 = vpop.permute.xlu0 %2018
        %2020 = vrot.lane.b32.xlu0 %v1825, 4
        %v2021 = vpop.permute.xlu0 %2020
        %2022 = vrot.lane.b32.xlu0 %v1827, 4
        %v2023 = vpop.permute.xlu0 %2022
        %2024 = vrot.lane.b32.xlu0 %v1829, 4
        %v2025 = vpop.permute.xlu0 %2024
        %2026 = vrot.lane.b32.xlu0 %v1831, 4
        %v2027 = vpop.permute.xlu0 %2026
        %2028 = vrot.lane.b32.xlu0 %v1833, 4
        %v2029 = vpop.permute.xlu0 %2028
        %2030 = vrot.lane.b32.xlu0 %v1835, 4
        %v2031 = vpop.permute.xlu0 %2030
        %2032 = vrot.lane.b32.xlu0 %v1837, 4
        %v2033 = vpop.permute.xlu0 %2032
        %2034 = vrot.lane.b32.xlu0 %v1839, 4
        %v2035 = vpop.permute.xlu0 %2034
        %2036 = vrot.lane.b32.xlu0 %v1841, 4
        %v2037 = vpop.permute.xlu0 %2036
        %2038 = vrot.lane.b32.xlu0 %v1843, 4
        %v2039 = vpop.permute.xlu0 %2038
        %2040 = vrot.lane.b32.xlu0 %v1845, 4
        %v2041 = vpop.permute.xlu0 %2040
        %2042 = vrot.lane.b32.xlu0 %v1847, 4
        %v2043 = vpop.permute.xlu0 %2042
        %2044 = vrot.lane.b32.xlu0 %v1818, 4
        %v2045 = vpop.permute.xlu0 %2044
        %2046 = vrot.lane.b32.xlu0 %v1820, 4
        %v2047 = vpop.permute.xlu0 %2046
        %2048 = vrot.lane.b32.xlu0 %v1822, 4
        %v2049 = vpop.permute.xlu0 %2048
        %2050 = vrot.lane.b32.xlu0 %v1824, 4
        %v2051 = vpop.permute.xlu0 %2050
        %2052 = vrot.lane.b32.xlu0 %v1826, 4
        %v2053 = vpop.permute.xlu0 %2052
        %2054 = vrot.lane.b32.xlu0 %v1828, 4
        %v2055 = vpop.permute.xlu0 %2054
        %2056 = vrot.lane.b32.xlu0 %v1830, 4
        %v2057 = vpop.permute.xlu0 %2056
        %2058 = vrot.lane.b32.xlu0 %v1832, 4
        %v2059 = vpop.permute.xlu0 %2058
        %2060 = vrot.lane.b32.xlu0 %v1834, 4
        %v2061 = vpop.permute.xlu0 %2060
        %2062 = vrot.lane.b32.xlu0 %v1836, 4
        %v2063 = vpop.permute.xlu0 %2062
        %2064 = vrot.lane.b32.xlu0 %v1838, 4
        %v2065 = vpop.permute.xlu0 %2064
        %2066 = vrot.lane.b32.xlu0 %v1840, 4
        %v2067 = vpop.permute.xlu0 %2066
        %2068 = vrot.lane.b32.xlu0 %v1842, 4
        %v2069 = vpop.permute.xlu0 %2068
        %2070 = vrot.lane.b32.xlu0 %v1844, 4
        %v2071 = vpop.permute.xlu0 %2070
        %2072 = vrot.lane.b32.xlu0 %v1846, 4
        %v2073 = vpop.permute.xlu0 %2072
        %2074 = vrot.lane.b32.xlu0 %v1848, 4
        %v2075 = vpop.permute.xlu0 %2074
        %v2076 = vsel %vm1947, %v2013, %v2045
        %v2077 = vsel %vm1947, %v2015, %v2047
        %v2078 = vsel %vm1947, %v2017, %v2049
        %v2079 = vsel %vm1947, %v2019, %v2051
        %v2080 = vsel %vm1947, %v2021, %v2053
        %v2081 = vsel %vm1947, %v2023, %v2055
        %v2082 = vsel %vm1947, %v2025, %v2057
        %v2083 = vsel %vm1947, %v2027, %v2059
        %v2084 = vsel %vm1947, %v2029, %v2061
        %v2085 = vsel %vm1947, %v2031, %v2063
        %v2086 = vsel %vm1947, %v2033, %v2065
        %v2087 = vsel %vm1947, %v2035, %v2067
        %v2088 = vsel %vm1947, %v2037, %v2069
        %v2089 = vsel %vm1947, %v2039, %v2071
        %v2090 = vsel %vm1947, %v2041, %v2073
        %v2091 = vsel %vm1947, %v2043, %v2075
        %v2092 = vsel %vm1947, %v2045, %v2013
        %v2093 = vsel %vm1947, %v2047, %v2015
        %v2094 = vsel %vm1947, %v2049, %v2017
        %v2095 = vsel %vm1947, %v2051, %v2019
        %v2096 = vsel %vm1947, %v2053, %v2021
        %v2097 = vsel %vm1947, %v2055, %v2023
        %v2098 = vsel %vm1947, %v2057, %v2025
        %v2099 = vsel %vm1947, %v2059, %v2027
        %v2100 = vsel %vm1947, %v2061, %v2029
        %v2101 = vsel %vm1947, %v2063, %v2031
        %v2102 = vsel %vm1947, %v2065, %v2033
        %v2103 = vsel %vm1947, %v2067, %v2035
        %v2104 = vsel %vm1947, %v2069, %v2037
        %v2105 = vsel %vm1947, %v2071, %v2039
        %v2106 = vsel %vm1947, %v2073, %v2041
        %v2107 = vsel %vm1947, %v2075, %v2043
        %v2108 = vsel %vm1881, %v2092, 0.0
        %v2109 = vsel %vm1882, %v2076, 0.0
        %v2110 = vsel %vm1881, %v2093, 0.0
        %v2111 = vsel %vm1882, %v2077, 0.0
        %v2112 = vsel %vm1881, %v2094, 0.0
        %v2113 = vsel %vm1882, %v2078, 0.0
        %v2114 = vsel %vm1881, %v2095, 0.0
        %v2115 = vsel %vm1882, %v2079, 0.0
        %v2116 = vsel %vm1881, %v2096, 0.0
        %v2117 = vsel %vm1882, %v2080, 0.0
        %v2118 = vsel %vm1881, %v2097, 0.0
        %v2119 = vsel %vm1882, %v2081, 0.0
        %v2120 = vsel %vm1881, %v2098, 0.0
        %v2121 = vsel %vm1882, %v2082, 0.0
        %v2122 = vsel %vm1881, %v2099, 0.0
        %v2123 = vsel %vm1882, %v2083, 0.0
        %v2124 = vsel %vm1881, %v2100, 0.0
        %v2125 = vsel %vm1882, %v2084, 0.0
        %v2126 = vsel %vm1881, %v2101, 0.0
        %v2127 = vsel %vm1882, %v2085, 0.0
        %v2128 = vsel %vm1881, %v2102, 0.0
        %v2129 = vsel %vm1882, %v2086, 0.0
        %v2130 = vsel %vm1881, %v2103, 0.0
        %v2131 = vsel %vm1882, %v2087, 0.0
        %v2132 = vsel %vm1881, %v2104, 0.0
        %v2133 = vsel %vm1882, %v2088, 0.0
        %v2134 = vsel %vm1881, %v2105, 0.0
        %v2135 = vsel %vm1882, %v2089, 0.0
        %v2136 = vsel %vm1881, %v2106, 0.0
        %v2137 = vsel %vm1882, %v2090, 0.0
        %v2138 = vsel %vm1881, %v2107, 0.0
        %v2139 = vsel %vm1882, %v2091, 0.0
        %v2140 = vmul.f32 %v1849, %v2108
        %v2141 = vmul.f32 %v1850, %v2109
        %v2142 = vmul.f32 %v1851, %v2110
        %v2143 = vmul.f32 %v1852, %v2111
        %v2144 = vmul.f32 %v1853, %v2112
        %v2145 = vmul.f32 %v1854, %v2113
        %v2146 = vmul.f32 %v1855, %v2114
        %v2147 = vmul.f32 %v1856, %v2115
        %v2148 = vmul.f32 %v1857, %v2116
        %v2149 = vmul.f32 %v1858, %v2117
        %v2150 = vmul.f32 %v1859, %v2118
        %v2151 = vmul.f32 %v1860, %v2119
        %v2152 = vmul.f32 %v1861, %v2120
        %v2153 = vmul.f32 %v1862, %v2121
        %v2154 = vmul.f32 %v1863, %v2122
        %v2155 = vmul.f32 %v1864, %v2123
        %v2156 = vmul.f32 %v1865, %v2124
        %v2157 = vmul.f32 %v1866, %v2125
        %v2158 = vmul.f32 %v1867, %v2126
        %v2159 = vmul.f32 %v1868, %v2127
        %v2160 = vmul.f32 %v1869, %v2128
        %v2161 = vmul.f32 %v1870, %v2129
        %v2162 = vmul.f32 %v1871, %v2130
        %v2163 = vmul.f32 %v1872, %v2131
        %v2164 = vmul.f32 %v1873, %v2132
        %v2165 = vmul.f32 %v1874, %v2133
        %v2166 = vmul.f32 %v1875, %v2134
        %v2167 = vmul.f32 %v1876, %v2135
        %v2168 = vmul.f32 %v1877, %v2136
        %v2169 = vmul.f32 %v1878, %v2137
        %v2170 = vmul.f32 %v1879, %v2138
        %v2171 = vmul.f32 %v1880, %v2139
        %v2172 = vadd.f32 %v2140, %v1817
        %v2173 = vadd.f32 %v2141, %v1818
        %v2174 = vadd.f32 %v2142, %v1819
        %v2175 = vadd.f32 %v2143, %v1820
        %v2176 = vadd.f32 %v2144, %v1821
        %v2177 = vadd.f32 %v2145, %v1822
        %v2178 = vadd.f32 %v2146, %v1823
        %v2179 = vadd.f32 %v2147, %v1824
        %v2180 = vadd.f32 %v2148, %v1825
        %v2181 = vadd.f32 %v2149, %v1826
        %v2182 = vadd.f32 %v2150, %v1827
        %v2183 = vadd.f32 %v2151, %v1828
        %v2184 = vadd.f32 %v2152, %v1829
        %v2185 = vadd.f32 %v2153, %v1830
        %v2186 = vadd.f32 %v2154, %v1831
        %v2187 = vadd.f32 %v2155, %v1832
        %v2188 = vadd.f32 %v2156, %v1833
        %v2189 = vadd.f32 %v2157, %v1834
        %v2190 = vadd.f32 %v2158, %v1835
        %v2191 = vadd.f32 %v2159, %v1836
        %v2192 = vadd.f32 %v2160, %v1837
        %v2193 = vadd.f32 %v2161, %v1838
        %v2194 = vadd.f32 %v2162, %v1839
        %v2195 = vadd.f32 %v2163, %v1840
        %v2196 = vadd.f32 %v2164, %v1841
        %v2197 = vadd.f32 %v2165, %v1842
        %v2198 = vadd.f32 %v2166, %v1843
        %v2199 = vadd.f32 %v2167, %v1844
        %v2200 = vadd.f32 %v2168, %v1845
        %v2201 = vadd.f32 %v2169, %v1846
        %v2202 = vadd.f32 %v2170, %v1847
        %v2203 = vadd.f32 %v2171, %v1848
        %v2204 = vmul.f32 %v1849, %v1980
        %v2205 = vmul.f32 %v1850, %v1981
        %v2206 = vmul.f32 %v1851, %v1982
        %v2207 = vmul.f32 %v1852, %v1983
        %v2208 = vmul.f32 %v1853, %v1984
        %v2209 = vmul.f32 %v1854, %v1985
        %v2210 = vmul.f32 %v1855, %v1986
        %v2211 = vmul.f32 %v1856, %v1987
        %v2212 = vmul.f32 %v1857, %v1988
        %v2213 = vmul.f32 %v1858, %v1989
        %v2214 = vmul.f32 %v1859, %v1990
        %v2215 = vmul.f32 %v1860, %v1991
        %v2216 = vmul.f32 %v1861, %v1992
        %v2217 = vmul.f32 %v1862, %v1993
        %v2218 = vmul.f32 %v1863, %v1994
        %v2219 = vmul.f32 %v1864, %v1995
        %v2220 = vmul.f32 %v1865, %v1996
        %v2221 = vmul.f32 %v1866, %v1997
        %v2222 = vmul.f32 %v1867, %v1998
        %v2223 = vmul.f32 %v1868, %v1999
        %v2224 = vmul.f32 %v1869, %v2000
        %v2225 = vmul.f32 %v1870, %v2001
        %v2226 = vmul.f32 %v1871, %v2002
        %v2227 = vmul.f32 %v1872, %v2003
        %v2228 = vmul.f32 %v1873, %v2004
        %v2229 = vmul.f32 %v1874, %v2005
        %v2230 = vmul.f32 %v1875, %v2006
        %v2231 = vmul.f32 %v1876, %v2007
        %v2232 = vmul.f32 %v1877, %v2008
        %v2233 = vmul.f32 %v1878, %v2009
        %v2234 = vmul.f32 %v1879, %v2010
        %v2235 = vmul.f32 %v1880, %v2011
        %vm2236 = vcmp.ge.s32.totalorder %v456, 8
        %vm2237 = vcmp.ge.s32.totalorder %v457, 8
        %2238 = vrot.lane.b32.xlu0 %v2204, 8
        %v2239 = vpop.permute.xlu0 %2238
        %2240 = vrot.lane.b32.xlu0 %v2206, 8
        %v2241 = vpop.permute.xlu0 %2240
        %2242 = vrot.lane.b32.xlu0 %v2208, 8
        %v2243 = vpop.permute.xlu0 %2242
        %2244 = vrot.lane.b32.xlu0 %v2210, 8
        %v2245 = vpop.permute.xlu0 %2244
        %2246 = vrot.lane.b32.xlu0 %v2212, 8
        %v2247 = vpop.permute.xlu0 %2246
        %2248 = vrot.lane.b32.xlu0 %v2214, 8
        %v2249 = vpop.permute.xlu0 %2248
        %2250 = vrot.lane.b32.xlu0 %v2216, 8
        %v2251 = vpop.permute.xlu0 %2250
        %2252 = vrot.lane.b32.xlu0 %v2218, 8
        %v2253 = vpop.permute.xlu0 %2252
        %2254 = vrot.lane.b32.xlu0 %v2220, 8
        %v2255 = vpop.permute.xlu0 %2254
        %2256 = vrot.lane.b32.xlu0 %v2222, 8
        %v2257 = vpop.permute.xlu0 %2256
        %2258 = vrot.lane.b32.xlu0 %v2224, 8
        %v2259 = vpop.permute.xlu0 %2258
        %2260 = vrot.lane.b32.xlu0 %v2226, 8
        %v2261 = vpop.permute.xlu0 %2260
        %2262 = vrot.lane.b32.xlu0 %v2228, 8
        %v2263 = vpop.permute.xlu0 %2262
        %2264 = vrot.lane.b32.xlu0 %v2230, 8
        %v2265 = vpop.permute.xlu0 %2264
        %2266 = vrot.lane.b32.xlu0 %v2232, 8
        %v2267 = vpop.permute.xlu0 %2266
        %2268 = vrot.lane.b32.xlu0 %v2234, 8
        %v2269 = vpop.permute.xlu0 %2268
        %2270 = vrot.lane.b32.xlu0 %v2205, 8
        %v2271 = vpop.permute.xlu0 %2270
        %2272 = vrot.lane.b32.xlu0 %v2207, 8
        %v2273 = vpop.permute.xlu0 %2272
        %2274 = vrot.lane.b32.xlu0 %v2209, 8
        %v2275 = vpop.permute.xlu0 %2274
        %2276 = vrot.lane.b32.xlu0 %v2211, 8
        %v2277 = vpop.permute.xlu0 %2276
        %2278 = vrot.lane.b32.xlu0 %v2213, 8
        %v2279 = vpop.permute.xlu0 %2278
        %2280 = vrot.lane.b32.xlu0 %v2215, 8
        %v2281 = vpop.permute.xlu0 %2280
        %2282 = vrot.lane.b32.xlu0 %v2217, 8
        %v2283 = vpop.permute.xlu0 %2282
        %2284 = vrot.lane.b32.xlu0 %v2219, 8
        %v2285 = vpop.permute.xlu0 %2284
        %2286 = vrot.lane.b32.xlu0 %v2221, 8
        %v2287 = vpop.permute.xlu0 %2286
        %2288 = vrot.lane.b32.xlu0 %v2223, 8
        %v2289 = vpop.permute.xlu0 %2288
        %2290 = vrot.lane.b32.xlu0 %v2225, 8
        %v2291 = vpop.permute.xlu0 %2290
        %2292 = vrot.lane.b32.xlu0 %v2227, 8
        %v2293 = vpop.permute.xlu0 %2292
        %2294 = vrot.lane.b32.xlu0 %v2229, 8
        %v2295 = vpop.permute.xlu0 %2294
        %2296 = vrot.lane.b32.xlu0 %v2231, 8
        %v2297 = vpop.permute.xlu0 %2296
        %2298 = vrot.lane.b32.xlu0 %v2233, 8
        %v2299 = vpop.permute.xlu0 %2298
        %2300 = vrot.lane.b32.xlu0 %v2235, 8
        %v2301 = vpop.permute.xlu0 %2300
        %vm2302 = vcmp.lt.s32.totalorder %v456, 8
        %v2303 = vsel %vm2302, %v2239, %v2271
        %v2304 = vsel %vm2302, %v2241, %v2273
        %v2305 = vsel %vm2302, %v2243, %v2275
        %v2306 = vsel %vm2302, %v2245, %v2277
        %v2307 = vsel %vm2302, %v2247, %v2279
        %v2308 = vsel %vm2302, %v2249, %v2281
        %v2309 = vsel %vm2302, %v2251, %v2283
        %v2310 = vsel %vm2302, %v2253, %v2285
        %v2311 = vsel %vm2302, %v2255, %v2287
        %v2312 = vsel %vm2302, %v2257, %v2289
        %v2313 = vsel %vm2302, %v2259, %v2291
        %v2314 = vsel %vm2302, %v2261, %v2293
        %v2315 = vsel %vm2302, %v2263, %v2295
        %v2316 = vsel %vm2302, %v2265, %v2297
        %v2317 = vsel %vm2302, %v2267, %v2299
        %v2318 = vsel %vm2302, %v2269, %v2301
        %v2319 = vsel %vm2302, %v2271, %v2239
        %v2320 = vsel %vm2302, %v2273, %v2241
        %v2321 = vsel %vm2302, %v2275, %v2243
        %v2322 = vsel %vm2302, %v2277, %v2245
        %v2323 = vsel %vm2302, %v2279, %v2247
        %v2324 = vsel %vm2302, %v2281, %v2249
        %v2325 = vsel %vm2302, %v2283, %v2251
        %v2326 = vsel %vm2302, %v2285, %v2253
        %v2327 = vsel %vm2302, %v2287, %v2255
        %v2328 = vsel %vm2302, %v2289, %v2257
        %v2329 = vsel %vm2302, %v2291, %v2259
        %v2330 = vsel %vm2302, %v2293, %v2261
        %v2331 = vsel %vm2302, %v2295, %v2263
        %v2332 = vsel %vm2302, %v2297, %v2265
        %v2333 = vsel %vm2302, %v2299, %v2267
        %v2334 = vsel %vm2302, %v2301, %v2269
        %v2335 = vsel %vm2236, %v2319, 1.0
        %v2336 = vsel %vm2237, %v2303, 1.0
        %v2337 = vsel %vm2236, %v2320, 1.0
        %v2338 = vsel %vm2237, %v2304, 1.0
        %v2339 = vsel %vm2236, %v2321, 1.0
        %v2340 = vsel %vm2237, %v2305, 1.0
        %v2341 = vsel %vm2236, %v2322, 1.0
        %v2342 = vsel %vm2237, %v2306, 1.0
        %v2343 = vsel %vm2236, %v2323, 1.0
        %v2344 = vsel %vm2237, %v2307, 1.0
        %v2345 = vsel %vm2236, %v2324, 1.0
        %v2346 = vsel %vm2237, %v2308, 1.0
        %v2347 = vsel %vm2236, %v2325, 1.0
        %v2348 = vsel %vm2237, %v2309, 1.0
        %v2349 = vsel %vm2236, %v2326, 1.0
        %v2350 = vsel %vm2237, %v2310, 1.0
        %v2351 = vsel %vm2236, %v2327, 1.0
        %v2352 = vsel %vm2237, %v2311, 1.0
        %v2353 = vsel %vm2236, %v2328, 1.0
        %v2354 = vsel %vm2237, %v2312, 1.0
        %v2355 = vsel %vm2236, %v2329, 1.0
        %v2356 = vsel %vm2237, %v2313, 1.0
        %v2357 = vsel %vm2236, %v2330, 1.0
        %v2358 = vsel %vm2237, %v2314, 1.0
        %v2359 = vsel %vm2236, %v2331, 1.0
        %v2360 = vsel %vm2237, %v2315, 1.0
        %v2361 = vsel %vm2236, %v2332, 1.0
        %v2362 = vsel %vm2237, %v2316, 1.0
        %v2363 = vsel %vm2236, %v2333, 1.0
        %v2364 = vsel %vm2237, %v2317, 1.0
        %v2365 = vsel %vm2236, %v2334, 1.0
        %v2366 = vsel %vm2237, %v2318, 1.0
        %2367 = vrot.lane.b32.xlu0 %v2172, 8
        %v2368 = vpop.permute.xlu0 %2367
        %2369 = vrot.lane.b32.xlu0 %v2174, 8
        %v2370 = vpop.permute.xlu0 %2369
        %2371 = vrot.lane.b32.xlu0 %v2176, 8
        %v2372 = vpop.permute.xlu0 %2371
        %2373 = vrot.lane.b32.xlu0 %v2178, 8
        %v2374 = vpop.permute.xlu0 %2373
        %2375 = vrot.lane.b32.xlu0 %v2180, 8
        %v2376 = vpop.permute.xlu0 %2375
        %2377 = vrot.lane.b32.xlu0 %v2182, 8
        %v2378 = vpop.permute.xlu0 %2377
        %2379 = vrot.lane.b32.xlu0 %v2184, 8
        %v2380 = vpop.permute.xlu0 %2379
        %2381 = vrot.lane.b32.xlu0 %v2186, 8
        %v2382 = vpop.permute.xlu0 %2381
        %2383 = vrot.lane.b32.xlu0 %v2188, 8
        %v2384 = vpop.permute.xlu0 %2383
        %2385 = vrot.lane.b32.xlu0 %v2190, 8
        %v2386 = vpop.permute.xlu0 %2385
        %2387 = vrot.lane.b32.xlu0 %v2192, 8
        %v2388 = vpop.permute.xlu0 %2387
        %2389 = vrot.lane.b32.xlu0 %v2194, 8
        %v2390 = vpop.permute.xlu0 %2389
        %2391 = vrot.lane.b32.xlu0 %v2196, 8
        %v2392 = vpop.permute.xlu0 %2391
        %2393 = vrot.lane.b32.xlu0 %v2198, 8
        %v2394 = vpop.permute.xlu0 %2393
        %2395 = vrot.lane.b32.xlu0 %v2200, 8
        %v2396 = vpop.permute.xlu0 %2395
        %2397 = vrot.lane.b32.xlu0 %v2202, 8
        %v2398 = vpop.permute.xlu0 %2397
        %2399 = vrot.lane.b32.xlu0 %v2173, 8
        %v2400 = vpop.permute.xlu0 %2399
        %2401 = vrot.lane.b32.xlu0 %v2175, 8
        %v2402 = vpop.permute.xlu0 %2401
        %2403 = vrot.lane.b32.xlu0 %v2177, 8
        %v2404 = vpop.permute.xlu0 %2403
        %2405 = vrot.lane.b32.xlu0 %v2179, 8
        %v2406 = vpop.permute.xlu0 %2405
        %2407 = vrot.lane.b32.xlu0 %v2181, 8
        %v2408 = vpop.permute.xlu0 %2407
        %2409 = vrot.lane.b32.xlu0 %v2183, 8
        %v2410 = vpop.permute.xlu0 %2409
        %2411 = vrot.lane.b32.xlu0 %v2185, 8
        %v2412 = vpop.permute.xlu0 %2411
        %2413 = vrot.lane.b32.xlu0 %v2187, 8
        %v2414 = vpop.permute.xlu0 %2413
        %2415 = vrot.lane.b32.xlu0 %v2189, 8
        %v2416 = vpop.permute.xlu0 %2415
        %2417 = vrot.lane.b32.xlu0 %v2191, 8
        %v2418 = vpop.permute.xlu0 %2417
        %2419 = vrot.lane.b32.xlu0 %v2193, 8
        %v2420 = vpop.permute.xlu0 %2419
        %2421 = vrot.lane.b32.xlu0 %v2195, 8
        %v2422 = vpop.permute.xlu0 %2421
        %2423 = vrot.lane.b32.xlu0 %v2197, 8
        %v2424 = vpop.permute.xlu0 %2423
        %2425 = vrot.lane.b32.xlu0 %v2199, 8
        %v2426 = vpop.permute.xlu0 %2425
        %2427 = vrot.lane.b32.xlu0 %v2201, 8
        %v2428 = vpop.permute.xlu0 %2427
        %2429 = vrot.lane.b32.xlu0 %v2203, 8
        %v2430 = vpop.permute.xlu0 %2429
        %v2431 = vsel %vm2302, %v2368, %v2400
        %v2432 = vsel %vm2302, %v2370, %v2402
        %v2433 = vsel %vm2302, %v2372, %v2404
        %v2434 = vsel %vm2302, %v2374, %v2406
        %v2435 = vsel %vm2302, %v2376, %v2408
        %v2436 = vsel %vm2302, %v2378, %v2410
        %v2437 = vsel %vm2302, %v2380, %v2412
        %v2438 = vsel %vm2302, %v2382, %v2414
        %v2439 = vsel %vm2302, %v2384, %v2416
        %v2440 = vsel %vm2302, %v2386, %v2418
        %v2441 = vsel %vm2302, %v2388, %v2420
        %v2442 = vsel %vm2302, %v2390, %v2422
        %v2443 = vsel %vm2302, %v2392, %v2424
        %v2444 = vsel %vm2302, %v2394, %v2426
        %v2445 = vsel %vm2302, %v2396, %v2428
        %v2446 = vsel %vm2302, %v2398, %v2430
        %v2447 = vsel %vm2302, %v2400, %v2368
        %v2448 = vsel %vm2302, %v2402, %v2370
        %v2449 = vsel %vm2302, %v2404, %v2372
        %v2450 = vsel %vm2302, %v2406, %v2374
        %v2451 = vsel %vm2302, %v2408, %v2376
        %v2452 = vsel %vm2302, %v2410, %v2378
        %v2453 = vsel %vm2302, %v2412, %v2380
        %v2454 = vsel %vm2302, %v2414, %v2382
        %v2455 = vsel %vm2302, %v2416, %v2384
        %v2456 = vsel %vm2302, %v2418, %v2386
        %v2457 = vsel %vm2302, %v2420, %v2388
        %v2458 = vsel %vm2302, %v2422, %v2390
        %v2459 = vsel %vm2302, %v2424, %v2392
        %v2460 = vsel %vm2302, %v2426, %v2394
        %v2461 = vsel %vm2302, %v2428, %v2396
        %v2462 = vsel %vm2302, %v2430, %v2398
        %v2463 = vsel %vm2236, %v2447, 0.0
        %v2464 = vsel %vm2237, %v2431, 0.0
        %v2465 = vsel %vm2236, %v2448, 0.0
        %v2466 = vsel %vm2237, %v2432, 0.0
        %v2467 = vsel %vm2236, %v2449, 0.0
        %v2468 = vsel %vm2237, %v2433, 0.0
        %v2469 = vsel %vm2236, %v2450, 0.0
        %v2470 = vsel %vm2237, %v2434, 0.0
        %v2471 = vsel %vm2236, %v2451, 0.0
        %v2472 = vsel %vm2237, %v2435, 0.0
        %v2473 = vsel %vm2236, %v2452, 0.0
        %v2474 = vsel %vm2237, %v2436, 0.0
        %v2475 = vsel %vm2236, %v2453, 0.0
        %v2476 = vsel %vm2237, %v2437, 0.0
        %v2477 = vsel %vm2236, %v2454, 0.0
        %v2478 = vsel %vm2237, %v2438, 0.0
        %v2479 = vsel %vm2236, %v2455, 0.0
        %v2480 = vsel %vm2237, %v2439, 0.0
        %v2481 = vsel %vm2236, %v2456, 0.0
        %v2482 = vsel %vm2237, %v2440, 0.0
        %v2483 = vsel %vm2236, %v2457, 0.0
        %v2484 = vsel %vm2237, %v2441, 0.0
        %v2485 = vsel %vm2236, %v2458, 0.0
        %v2486 = vsel %vm2237, %v2442, 0.0
        %v2487 = vsel %vm2236, %v2459, 0.0
        %v2488 = vsel %vm2237, %v2443, 0.0
        %v2489 = vsel %vm2236, %v2460, 0.0
        %v2490 = vsel %vm2237, %v2444, 0.0
        %v2491 = vsel %vm2236, %v2461, 0.0
        %v2492 = vsel %vm2237, %v2445, 0.0
        %v2493 = vsel %vm2236, %v2462, 0.0
        %v2494 = vsel %vm2237, %v2446, 0.0
        %v2495 = vmul.f32 %v2204, %v2463
        %v2496 = vmul.f32 %v2205, %v2464
        %v2497 = vmul.f32 %v2206, %v2465
        %v2498 = vmul.f32 %v2207, %v2466
        %v2499 = vmul.f32 %v2208, %v2467
        %v2500 = vmul.f32 %v2209, %v2468
        %v2501 = vmul.f32 %v2210, %v2469
        %v2502 = vmul.f32 %v2211, %v2470
        %v2503 = vmul.f32 %v2212, %v2471
        %v2504 = vmul.f32 %v2213, %v2472
        %v2505 = vmul.f32 %v2214, %v2473
        %v2506 = vmul.f32 %v2215, %v2474
        %v2507 = vmul.f32 %v2216, %v2475
        %v2508 = vmul.f32 %v2217, %v2476
        %v2509 = vmul.f32 %v2218, %v2477
        %v2510 = vmul.f32 %v2219, %v2478
        %v2511 = vmul.f32 %v2220, %v2479
        %v2512 = vmul.f32 %v2221, %v2480
        %v2513 = vmul.f32 %v2222, %v2481
        %v2514 = vmul.f32 %v2223, %v2482
        %v2515 = vmul.f32 %v2224, %v2483
        %v2516 = vmul.f32 %v2225, %v2484
        %v2517 = vmul.f32 %v2226, %v2485
        %v2518 = vmul.f32 %v2227, %v2486
        %v2519 = vmul.f32 %v2228, %v2487
        %v2520 = vmul.f32 %v2229, %v2488
        %v2521 = vmul.f32 %v2230, %v2489
        %v2522 = vmul.f32 %v2231, %v2490
        %v2523 = vmul.f32 %v2232, %v2491
        %v2524 = vmul.f32 %v2233, %v2492
        %v2525 = vmul.f32 %v2234, %v2493
        %v2526 = vmul.f32 %v2235, %v2494
        %v2527 = vadd.f32 %v2495, %v2172
        %v2528 = vadd.f32 %v2496, %v2173
        %v2529 = vadd.f32 %v2497, %v2174
        %v2530 = vadd.f32 %v2498, %v2175
        %v2531 = vadd.f32 %v2499, %v2176
        %v2532 = vadd.f32 %v2500, %v2177
        %v2533 = vadd.f32 %v2501, %v2178
        %v2534 = vadd.f32 %v2502, %v2179
        %v2535 = vadd.f32 %v2503, %v2180
        %v2536 = vadd.f32 %v2504, %v2181
        %v2537 = vadd.f32 %v2505, %v2182
        %v2538 = vadd.f32 %v2506, %v2183
        %v2539 = vadd.f32 %v2507, %v2184
        %v2540 = vadd.f32 %v2508, %v2185
        %v2541 = vadd.f32 %v2509, %v2186
        %v2542 = vadd.f32 %v2510, %v2187
        %v2543 = vadd.f32 %v2511, %v2188
        %v2544 = vadd.f32 %v2512, %v2189
        %v2545 = vadd.f32 %v2513, %v2190
        %v2546 = vadd.f32 %v2514, %v2191
        %v2547 = vadd.f32 %v2515, %v2192
        %v2548 = vadd.f32 %v2516, %v2193
        %v2549 = vadd.f32 %v2517, %v2194
        %v2550 = vadd.f32 %v2518, %v2195
        %v2551 = vadd.f32 %v2519, %v2196
        %v2552 = vadd.f32 %v2520, %v2197
        %v2553 = vadd.f32 %v2521, %v2198
        %v2554 = vadd.f32 %v2522, %v2199
        %v2555 = vadd.f32 %v2523, %v2200
        %v2556 = vadd.f32 %v2524, %v2201
        %v2557 = vadd.f32 %v2525, %v2202
        %v2558 = vadd.f32 %v2526, %v2203
        %v2559 = vmul.f32 %v2204, %v2335
        %v2560 = vmul.f32 %v2205, %v2336
        %v2561 = vmul.f32 %v2206, %v2337
        %v2562 = vmul.f32 %v2207, %v2338
        %v2563 = vmul.f32 %v2208, %v2339
        %v2564 = vmul.f32 %v2209, %v2340
        %v2565 = vmul.f32 %v2210, %v2341
        %v2566 = vmul.f32 %v2211, %v2342
        %v2567 = vmul.f32 %v2212, %v2343
        %v2568 = vmul.f32 %v2213, %v2344
        %v2569 = vmul.f32 %v2214, %v2345
        %v2570 = vmul.f32 %v2215, %v2346
        %v2571 = vmul.f32 %v2216, %v2347
        %v2572 = vmul.f32 %v2217, %v2348
        %v2573 = vmul.f32 %v2218, %v2349
        %v2574 = vmul.f32 %v2219, %v2350
        %v2575 = vmul.f32 %v2220, %v2351
        %v2576 = vmul.f32 %v2221, %v2352
        %v2577 = vmul.f32 %v2222, %v2353
        %v2578 = vmul.f32 %v2223, %v2354
        %v2579 = vmul.f32 %v2224, %v2355
        %v2580 = vmul.f32 %v2225, %v2356
        %v2581 = vmul.f32 %v2226, %v2357
        %v2582 = vmul.f32 %v2227, %v2358
        %v2583 = vmul.f32 %v2228, %v2359
        %v2584 = vmul.f32 %v2229, %v2360
        %v2585 = vmul.f32 %v2230, %v2361
        %v2586 = vmul.f32 %v2231, %v2362
        %v2587 = vmul.f32 %v2232, %v2363
        %v2588 = vmul.f32 %v2233, %v2364
        %v2589 = vmul.f32 %v2234, %v2365
        %v2590 = vmul.f32 %v2235, %v2366
        %vm2591 = vcmp.ge.s32.totalorder %v456, 16
        %vm2592 = vcmp.ge.s32.totalorder %v457, 16
        %2593 = vrot.lane.b32.xlu0 %v2559, 16
        %v2594 = vpop.permute.xlu0 %2593
        %2595 = vrot.lane.b32.xlu0 %v2561, 16
        %v2596 = vpop.permute.xlu0 %2595
        %2597 = vrot.lane.b32.xlu0 %v2563, 16
        %v2598 = vpop.permute.xlu0 %2597
        %2599 = vrot.lane.b32.xlu0 %v2565, 16
        %v2600 = vpop.permute.xlu0 %2599
        %2601 = vrot.lane.b32.xlu0 %v2567, 16
        %v2602 = vpop.permute.xlu0 %2601
        %2603 = vrot.lane.b32.xlu0 %v2569, 16
        %v2604 = vpop.permute.xlu0 %2603
        %2605 = vrot.lane.b32.xlu0 %v2571, 16
        %v2606 = vpop.permute.xlu0 %2605
        %2607 = vrot.lane.b32.xlu0 %v2573, 16
        %v2608 = vpop.permute.xlu0 %2607
        %2609 = vrot.lane.b32.xlu0 %v2575, 16
        %v2610 = vpop.permute.xlu0 %2609
        %2611 = vrot.lane.b32.xlu0 %v2577, 16
        %v2612 = vpop.permute.xlu0 %2611
        %2613 = vrot.lane.b32.xlu0 %v2579, 16
        %v2614 = vpop.permute.xlu0 %2613
        %2615 = vrot.lane.b32.xlu0 %v2581, 16
        %v2616 = vpop.permute.xlu0 %2615
        %2617 = vrot.lane.b32.xlu0 %v2583, 16
        %v2618 = vpop.permute.xlu0 %2617
        %2619 = vrot.lane.b32.xlu0 %v2585, 16
        %v2620 = vpop.permute.xlu0 %2619
        %2621 = vrot.lane.b32.xlu0 %v2587, 16
        %v2622 = vpop.permute.xlu0 %2621
        %2623 = vrot.lane.b32.xlu0 %v2589, 16
        %v2624 = vpop.permute.xlu0 %2623
        %2625 = vrot.lane.b32.xlu0 %v2560, 16
        %v2626 = vpop.permute.xlu0 %2625
        %2627 = vrot.lane.b32.xlu0 %v2562, 16
        %v2628 = vpop.permute.xlu0 %2627
        %2629 = vrot.lane.b32.xlu0 %v2564, 16
        %v2630 = vpop.permute.xlu0 %2629
        %2631 = vrot.lane.b32.xlu0 %v2566, 16
        %v2632 = vpop.permute.xlu0 %2631
        %2633 = vrot.lane.b32.xlu0 %v2568, 16
        %v2634 = vpop.permute.xlu0 %2633
        %2635 = vrot.lane.b32.xlu0 %v2570, 16
        %v2636 = vpop.permute.xlu0 %2635
        %2637 = vrot.lane.b32.xlu0 %v2572, 16
        %v2638 = vpop.permute.xlu0 %2637
        %2639 = vrot.lane.b32.xlu0 %v2574, 16
        %v2640 = vpop.permute.xlu0 %2639
        %2641 = vrot.lane.b32.xlu0 %v2576, 16
        %v2642 = vpop.permute.xlu0 %2641
        %2643 = vrot.lane.b32.xlu0 %v2578, 16
        %v2644 = vpop.permute.xlu0 %2643
        %2645 = vrot.lane.b32.xlu0 %v2580, 16
        %v2646 = vpop.permute.xlu0 %2645
        %2647 = vrot.lane.b32.xlu0 %v2582, 16
        %v2648 = vpop.permute.xlu0 %2647
        %2649 = vrot.lane.b32.xlu0 %v2584, 16
        %v2650 = vpop.permute.xlu0 %2649
        %2651 = vrot.lane.b32.xlu0 %v2586, 16
        %v2652 = vpop.permute.xlu0 %2651
        %2653 = vrot.lane.b32.xlu0 %v2588, 16
        %v2654 = vpop.permute.xlu0 %2653
        %2655 = vrot.lane.b32.xlu0 %v2590, 16
        %v2656 = vpop.permute.xlu0 %2655
        %vm2657 = vcmp.lt.s32.totalorder %v456, 16
        %v2658 = vsel %vm2657, %v2594, %v2626
        %v2659 = vsel %vm2657, %v2596, %v2628
        %v2660 = vsel %vm2657, %v2598, %v2630
        %v2661 = vsel %vm2657, %v2600, %v2632
        %v2662 = vsel %vm2657, %v2602, %v2634
        %v2663 = vsel %vm2657, %v2604, %v2636
        %v2664 = vsel %vm2657, %v2606, %v2638
        %v2665 = vsel %vm2657, %v2608, %v2640
        %v2666 = vsel %vm2657, %v2610, %v2642
        %v2667 = vsel %vm2657, %v2612, %v2644
        %v2668 = vsel %vm2657, %v2614, %v2646
        %v2669 = vsel %vm2657, %v2616, %v2648
        %v2670 = vsel %vm2657, %v2618, %v2650
        %v2671 = vsel %vm2657, %v2620, %v2652
        %v2672 = vsel %vm2657, %v2622, %v2654
        %v2673 = vsel %vm2657, %v2624, %v2656
        %v2674 = vsel %vm2657, %v2626, %v2594
        %v2675 = vsel %vm2657, %v2628, %v2596
        %v2676 = vsel %vm2657, %v2630, %v2598
        %v2677 = vsel %vm2657, %v2632, %v2600
        %v2678 = vsel %vm2657, %v2634, %v2602
        %v2679 = vsel %vm2657, %v2636, %v2604
        %v2680 = vsel %vm2657, %v2638, %v2606
        %v2681 = vsel %vm2657, %v2640, %v2608
        %v2682 = vsel %vm2657, %v2642, %v2610
        %v2683 = vsel %vm2657, %v2644, %v2612
        %v2684 = vsel %vm2657, %v2646, %v2614
        %v2685 = vsel %vm2657, %v2648, %v2616
        %v2686 = vsel %vm2657, %v2650, %v2618
        %v2687 = vsel %vm2657, %v2652, %v2620
        %v2688 = vsel %vm2657, %v2654, %v2622
        %v2689 = vsel %vm2657, %v2656, %v2624
        %v2690 = vsel %vm2591, %v2674, 1.0
        %v2691 = vsel %vm2592, %v2658, 1.0
        %v2692 = vsel %vm2591, %v2675, 1.0
        %v2693 = vsel %vm2592, %v2659, 1.0
        %v2694 = vsel %vm2591, %v2676, 1.0
        %v2695 = vsel %vm2592, %v2660, 1.0
        %v2696 = vsel %vm2591, %v2677, 1.0
        %v2697 = vsel %vm2592, %v2661, 1.0
        %v2698 = vsel %vm2591, %v2678, 1.0
        %v2699 = vsel %vm2592, %v2662, 1.0
        %v2700 = vsel %vm2591, %v2679, 1.0
        %v2701 = vsel %vm2592, %v2663, 1.0
        %v2702 = vsel %vm2591, %v2680, 1.0
        %v2703 = vsel %vm2592, %v2664, 1.0
        %v2704 = vsel %vm2591, %v2681, 1.0
        %v2705 = vsel %vm2592, %v2665, 1.0
        %v2706 = vsel %vm2591, %v2682, 1.0
        %v2707 = vsel %vm2592, %v2666, 1.0
        %v2708 = vsel %vm2591, %v2683, 1.0
        %v2709 = vsel %vm2592, %v2667, 1.0
        %v2710 = vsel %vm2591, %v2684, 1.0
        %v2711 = vsel %vm2592, %v2668, 1.0
        %v2712 = vsel %vm2591, %v2685, 1.0
        %v2713 = vsel %vm2592, %v2669, 1.0
        %v2714 = vsel %vm2591, %v2686, 1.0
        %v2715 = vsel %vm2592, %v2670, 1.0
        %v2716 = vsel %vm2591, %v2687, 1.0
        %v2717 = vsel %vm2592, %v2671, 1.0
        %v2718 = vsel %vm2591, %v2688, 1.0
        %v2719 = vsel %vm2592, %v2672, 1.0
        %v2720 = vsel %vm2591, %v2689, 1.0
        %v2721 = vsel %vm2592, %v2673, 1.0
        %2722 = vrot.lane.b32.xlu0 %v2527, 16
        %v2723 = vpop.permute.xlu0 %2722
        %2724 = vrot.lane.b32.xlu0 %v2529, 16
        %v2725 = vpop.permute.xlu0 %2724
        %2726 = vrot.lane.b32.xlu0 %v2531, 16
        %v2727 = vpop.permute.xlu0 %2726
        %2728 = vrot.lane.b32.xlu0 %v2533, 16
        %v2729 = vpop.permute.xlu0 %2728
        %2730 = vrot.lane.b32.xlu0 %v2535, 16
        %v2731 = vpop.permute.xlu0 %2730
        %2732 = vrot.lane.b32.xlu0 %v2537, 16
        %v2733 = vpop.permute.xlu0 %2732
        %2734 = vrot.lane.b32.xlu0 %v2539, 16
        %v2735 = vpop.permute.xlu0 %2734
        %2736 = vrot.lane.b32.xlu0 %v2541, 16
        %v2737 = vpop.permute.xlu0 %2736
        %2738 = vrot.lane.b32.xlu0 %v2543, 16
        %v2739 = vpop.permute.xlu0 %2738
        %2740 = vrot.lane.b32.xlu0 %v2545, 16
        %v2741 = vpop.permute.xlu0 %2740
        %2742 = vrot.lane.b32.xlu0 %v2547, 16
        %v2743 = vpop.permute.xlu0 %2742
        %2744 = vrot.lane.b32.xlu0 %v2549, 16
        %v2745 = vpop.permute.xlu0 %2744
        %2746 = vrot.lane.b32.xlu0 %v2551, 16
        %v2747 = vpop.permute.xlu0 %2746
        %2748 = vrot.lane.b32.xlu0 %v2553, 16
        %v2749 = vpop.permute.xlu0 %2748
        %2750 = vrot.lane.b32.xlu0 %v2555, 16
        %v2751 = vpop.permute.xlu0 %2750
        %2752 = vrot.lane.b32.xlu0 %v2557, 16
        %v2753 = vpop.permute.xlu0 %2752
        %2754 = vrot.lane.b32.xlu0 %v2528, 16
        %v2755 = vpop.permute.xlu0 %2754
        %2756 = vrot.lane.b32.xlu0 %v2530, 16
        %v2757 = vpop.permute.xlu0 %2756
        %2758 = vrot.lane.b32.xlu0 %v2532, 16
        %v2759 = vpop.permute.xlu0 %2758
        %2760 = vrot.lane.b32.xlu0 %v2534, 16
        %v2761 = vpop.permute.xlu0 %2760
        %2762 = vrot.lane.b32.xlu0 %v2536, 16
        %v2763 = vpop.permute.xlu0 %2762
        %2764 = vrot.lane.b32.xlu0 %v2538, 16
        %v2765 = vpop.permute.xlu0 %2764
        %2766 = vrot.lane.b32.xlu0 %v2540, 16
        %v2767 = vpop.permute.xlu0 %2766
        %2768 = vrot.lane.b32.xlu0 %v2542, 16
        %v2769 = vpop.permute.xlu0 %2768
        %2770 = vrot.lane.b32.xlu0 %v2544, 16
        %v2771 = vpop.permute.xlu0 %2770
        %2772 = vrot.lane.b32.xlu0 %v2546, 16
        %v2773 = vpop.permute.xlu0 %2772
        %2774 = vrot.lane.b32.xlu0 %v2548, 16
        %v2775 = vpop.permute.xlu0 %2774
        %2776 = vrot.lane.b32.xlu0 %v2550, 16
        %v2777 = vpop.permute.xlu0 %2776
        %2778 = vrot.lane.b32.xlu0 %v2552, 16
        %v2779 = vpop.permute.xlu0 %2778
        %2780 = vrot.lane.b32.xlu0 %v2554, 16
        %v2781 = vpop.permute.xlu0 %2780
        %2782 = vrot.lane.b32.xlu0 %v2556, 16
        %v2783 = vpop.permute.xlu0 %2782
        %2784 = vrot.lane.b32.xlu0 %v2558, 16
        %v2785 = vpop.permute.xlu0 %2784
        %v2786 = vsel %vm2657, %v2723, %v2755
        %v2787 = vsel %vm2657, %v2725, %v2757
        %v2788 = vsel %vm2657, %v2727, %v2759
        %v2789 = vsel %vm2657, %v2729, %v2761
        %v2790 = vsel %vm2657, %v2731, %v2763
        %v2791 = vsel %vm2657, %v2733, %v2765
        %v2792 = vsel %vm2657, %v2735, %v2767
        %v2793 = vsel %vm2657, %v2737, %v2769
        %v2794 = vsel %vm2657, %v2739, %v2771
        %v2795 = vsel %vm2657, %v2741, %v2773
        %v2796 = vsel %vm2657, %v2743, %v2775
        %v2797 = vsel %vm2657, %v2745, %v2777
        %v2798 = vsel %vm2657, %v2747, %v2779
        %v2799 = vsel %vm2657, %v2749, %v2781
        %v2800 = vsel %vm2657, %v2751, %v2783
        %v2801 = vsel %vm2657, %v2753, %v2785
        %v2802 = vsel %vm2657, %v2755, %v2723
        %v2803 = vsel %vm2657, %v2757, %v2725
        %v2804 = vsel %vm2657, %v2759, %v2727
        %v2805 = vsel %vm2657, %v2761, %v2729
        %v2806 = vsel %vm2657, %v2763, %v2731
        %v2807 = vsel %vm2657, %v2765, %v2733
        %v2808 = vsel %vm2657, %v2767, %v2735
        %v2809 = vsel %vm2657, %v2769, %v2737
        %v2810 = vsel %vm2657, %v2771, %v2739
        %v2811 = vsel %vm2657, %v2773, %v2741
        %v2812 = vsel %vm2657, %v2775, %v2743
        %v2813 = vsel %vm2657, %v2777, %v2745
        %v2814 = vsel %vm2657, %v2779, %v2747
        %v2815 = vsel %vm2657, %v2781, %v2749
        %v2816 = vsel %vm2657, %v2783, %v2751
        %v2817 = vsel %vm2657, %v2785, %v2753
        %v2818 = vsel %vm2591, %v2802, 0.0
        %v2819 = vsel %vm2592, %v2786, 0.0
        %v2820 = vsel %vm2591, %v2803, 0.0
        %v2821 = vsel %vm2592, %v2787, 0.0
        %v2822 = vsel %vm2591, %v2804, 0.0
        %v2823 = vsel %vm2592, %v2788, 0.0
        %v2824 = vsel %vm2591, %v2805, 0.0
        %v2825 = vsel %vm2592, %v2789, 0.0
        %v2826 = vsel %vm2591, %v2806, 0.0
        %v2827 = vsel %vm2592, %v2790, 0.0
        %v2828 = vsel %vm2591, %v2807, 0.0
        %v2829 = vsel %vm2592, %v2791, 0.0
        %v2830 = vsel %vm2591, %v2808, 0.0
        %v2831 = vsel %vm2592, %v2792, 0.0
        %v2832 = vsel %vm2591, %v2809, 0.0
        %v2833 = vsel %vm2592, %v2793, 0.0
        %v2834 = vsel %vm2591, %v2810, 0.0
        %v2835 = vsel %vm2592, %v2794, 0.0
        %v2836 = vsel %vm2591, %v2811, 0.0
        %v2837 = vsel %vm2592, %v2795, 0.0
        %v2838 = vsel %vm2591, %v2812, 0.0
        %v2839 = vsel %vm2592, %v2796, 0.0
        %v2840 = vsel %vm2591, %v2813, 0.0
        %v2841 = vsel %vm2592, %v2797, 0.0
        %v2842 = vsel %vm2591, %v2814, 0.0
        %v2843 = vsel %vm2592, %v2798, 0.0
        %v2844 = vsel %vm2591, %v2815, 0.0
        %v2845 = vsel %vm2592, %v2799, 0.0
        %v2846 = vsel %vm2591, %v2816, 0.0
        %v2847 = vsel %vm2592, %v2800, 0.0
        %v2848 = vsel %vm2591, %v2817, 0.0
        %v2849 = vsel %vm2592, %v2801, 0.0
        %v2850 = vmul.f32 %v2559, %v2818
        %v2851 = vmul.f32 %v2560, %v2819
        %v2852 = vmul.f32 %v2561, %v2820
        %v2853 = vmul.f32 %v2562, %v2821
        %v2854 = vmul.f32 %v2563, %v2822
        %v2855 = vmul.f32 %v2564, %v2823
        %v2856 = vmul.f32 %v2565, %v2824
        %v2857 = vmul.f32 %v2566, %v2825
        %v2858 = vmul.f32 %v2567, %v2826
        %v2859 = vmul.f32 %v2568, %v2827
        %v2860 = vmul.f32 %v2569, %v2828
        %v2861 = vmul.f32 %v2570, %v2829
        %v2862 = vmul.f32 %v2571, %v2830
        %v2863 = vmul.f32 %v2572, %v2831
        %v2864 = vmul.f32 %v2573, %v2832
        %v2865 = vmul.f32 %v2574, %v2833
        %v2866 = vmul.f32 %v2575, %v2834
        %v2867 = vmul.f32 %v2576, %v2835
        %v2868 = vmul.f32 %v2577, %v2836
        %v2869 = vmul.f32 %v2578, %v2837
        %v2870 = vmul.f32 %v2579, %v2838
        %v2871 = vmul.f32 %v2580, %v2839
        %v2872 = vmul.f32 %v2581, %v2840
        %v2873 = vmul.f32 %v2582, %v2841
        %v2874 = vmul.f32 %v2583, %v2842
        %v2875 = vmul.f32 %v2584, %v2843
        %v2876 = vmul.f32 %v2585, %v2844
        %v2877 = vmul.f32 %v2586, %v2845
        %v2878 = vmul.f32 %v2587, %v2846
        %v2879 = vmul.f32 %v2588, %v2847
        %v2880 = vmul.f32 %v2589, %v2848
        %v2881 = vmul.f32 %v2590, %v2849
        %v2882 = vadd.f32 %v2850, %v2527
        %v2883 = vadd.f32 %v2851, %v2528
        %v2884 = vadd.f32 %v2852, %v2529
        %v2885 = vadd.f32 %v2853, %v2530
        %v2886 = vadd.f32 %v2854, %v2531
        %v2887 = vadd.f32 %v2855, %v2532
        %v2888 = vadd.f32 %v2856, %v2533
        %v2889 = vadd.f32 %v2857, %v2534
        %v2890 = vadd.f32 %v2858, %v2535
        %v2891 = vadd.f32 %v2859, %v2536
        %v2892 = vadd.f32 %v2860, %v2537
        %v2893 = vadd.f32 %v2861, %v2538
        %v2894 = vadd.f32 %v2862, %v2539
        %v2895 = vadd.f32 %v2863, %v2540
        %v2896 = vadd.f32 %v2864, %v2541
        %v2897 = vadd.f32 %v2865, %v2542
        %v2898 = vadd.f32 %v2866, %v2543
        %v2899 = vadd.f32 %v2867, %v2544
        %v2900 = vadd.f32 %v2868, %v2545
        %v2901 = vadd.f32 %v2869, %v2546
        %v2902 = vadd.f32 %v2870, %v2547
        %v2903 = vadd.f32 %v2871, %v2548
        %v2904 = vadd.f32 %v2872, %v2549
        %v2905 = vadd.f32 %v2873, %v2550
        %v2906 = vadd.f32 %v2874, %v2551
        %v2907 = vadd.f32 %v2875, %v2552
        %v2908 = vadd.f32 %v2876, %v2553
        %v2909 = vadd.f32 %v2877, %v2554
        %v2910 = vadd.f32 %v2878, %v2555
        %v2911 = vadd.f32 %v2879, %v2556
        %v2912 = vadd.f32 %v2880, %v2557
        %v2913 = vadd.f32 %v2881, %v2558
        %v2914 = vmul.f32 %v2559, %v2690
        %v2915 = vmul.f32 %v2560, %v2691
        %v2916 = vmul.f32 %v2561, %v2692
        %v2917 = vmul.f32 %v2562, %v2693
        %v2918 = vmul.f32 %v2563, %v2694
        %v2919 = vmul.f32 %v2564, %v2695
        %v2920 = vmul.f32 %v2565, %v2696
        %v2921 = vmul.f32 %v2566, %v2697
        %v2922 = vmul.f32 %v2567, %v2698
        %v2923 = vmul.f32 %v2568, %v2699
        %v2924 = vmul.f32 %v2569, %v2700
        %v2925 = vmul.f32 %v2570, %v2701
        %v2926 = vmul.f32 %v2571, %v2702
        %v2927 = vmul.f32 %v2572, %v2703
        %v2928 = vmul.f32 %v2573, %v2704
        %v2929 = vmul.f32 %v2574, %v2705
        %v2930 = vmul.f32 %v2575, %v2706
        %v2931 = vmul.f32 %v2576, %v2707
        %v2932 = vmul.f32 %v2577, %v2708
        %v2933 = vmul.f32 %v2578, %v2709
        %v2934 = vmul.f32 %v2579, %v2710
        %v2935 = vmul.f32 %v2580, %v2711
        %v2936 = vmul.f32 %v2581, %v2712
        %v2937 = vmul.f32 %v2582, %v2713
        %v2938 = vmul.f32 %v2583, %v2714
        %v2939 = vmul.f32 %v2584, %v2715
        %v2940 = vmul.f32 %v2585, %v2716
        %v2941 = vmul.f32 %v2586, %v2717
        %v2942 = vmul.f32 %v2587, %v2718
        %v2943 = vmul.f32 %v2588, %v2719
        %v2944 = vmul.f32 %v2589, %v2720
        %v2945 = vmul.f32 %v2590, %v2721
        %vm2946 = vcmp.ge.s32.totalorder %v456, 32
        %vm2947 = vcmp.ge.s32.totalorder %v457, 32
        %2948 = vrot.lane.b32.xlu0 %v2914, 32
        %v2949 = vpop.permute.xlu0 %2948
        %2950 = vrot.lane.b32.xlu0 %v2916, 32
        %v2951 = vpop.permute.xlu0 %2950
        %2952 = vrot.lane.b32.xlu0 %v2918, 32
        %v2953 = vpop.permute.xlu0 %2952
        %2954 = vrot.lane.b32.xlu0 %v2920, 32
        %v2955 = vpop.permute.xlu0 %2954
        %2956 = vrot.lane.b32.xlu0 %v2922, 32
        %v2957 = vpop.permute.xlu0 %2956
        %2958 = vrot.lane.b32.xlu0 %v2924, 32
        %v2959 = vpop.permute.xlu0 %2958
        %2960 = vrot.lane.b32.xlu0 %v2926, 32
        %v2961 = vpop.permute.xlu0 %2960
        %2962 = vrot.lane.b32.xlu0 %v2928, 32
        %v2963 = vpop.permute.xlu0 %2962
        %2964 = vrot.lane.b32.xlu0 %v2930, 32
        %v2965 = vpop.permute.xlu0 %2964
        %2966 = vrot.lane.b32.xlu0 %v2932, 32
        %v2967 = vpop.permute.xlu0 %2966
        %2968 = vrot.lane.b32.xlu0 %v2934, 32
        %v2969 = vpop.permute.xlu0 %2968
        %2970 = vrot.lane.b32.xlu0 %v2936, 32
        %v2971 = vpop.permute.xlu0 %2970
        %2972 = vrot.lane.b32.xlu0 %v2938, 32
        %v2973 = vpop.permute.xlu0 %2972
        %2974 = vrot.lane.b32.xlu0 %v2940, 32
        %v2975 = vpop.permute.xlu0 %2974
        %2976 = vrot.lane.b32.xlu0 %v2942, 32
        %v2977 = vpop.permute.xlu0 %2976
        %2978 = vrot.lane.b32.xlu0 %v2944, 32
        %v2979 = vpop.permute.xlu0 %2978
        %2980 = vrot.lane.b32.xlu0 %v2915, 32
        %v2981 = vpop.permute.xlu0 %2980
        %2982 = vrot.lane.b32.xlu0 %v2917, 32
        %v2983 = vpop.permute.xlu0 %2982
        %2984 = vrot.lane.b32.xlu0 %v2919, 32
        %v2985 = vpop.permute.xlu0 %2984
        %2986 = vrot.lane.b32.xlu0 %v2921, 32
        %v2987 = vpop.permute.xlu0 %2986
        %2988 = vrot.lane.b32.xlu0 %v2923, 32
        %v2989 = vpop.permute.xlu0 %2988
        %2990 = vrot.lane.b32.xlu0 %v2925, 32
        %v2991 = vpop.permute.xlu0 %2990
        %2992 = vrot.lane.b32.xlu0 %v2927, 32
        %v2993 = vpop.permute.xlu0 %2992
        %2994 = vrot.lane.b32.xlu0 %v2929, 32
        %v2995 = vpop.permute.xlu0 %2994
        %2996 = vrot.lane.b32.xlu0 %v2931, 32
        %v2997 = vpop.permute.xlu0 %2996
        %2998 = vrot.lane.b32.xlu0 %v2933, 32
        %v2999 = vpop.permute.xlu0 %2998
        %3000 = vrot.lane.b32.xlu0 %v2935, 32
        %v3001 = vpop.permute.xlu0 %3000
        %3002 = vrot.lane.b32.xlu0 %v2937, 32
        %v3003 = vpop.permute.xlu0 %3002
        %3004 = vrot.lane.b32.xlu0 %v2939, 32
        %v3005 = vpop.permute.xlu0 %3004
        %3006 = vrot.lane.b32.xlu0 %v2941, 32
        %v3007 = vpop.permute.xlu0 %3006
        %3008 = vrot.lane.b32.xlu0 %v2943, 32
        %v3009 = vpop.permute.xlu0 %3008
        %3010 = vrot.lane.b32.xlu0 %v2945, 32
        %v3011 = vpop.permute.xlu0 %3010
        %vm3012 = vcmp.lt.s32.totalorder %v456, 32
        %v3013 = vsel %vm3012, %v2949, %v2981
        %v3014 = vsel %vm3012, %v2951, %v2983
        %v3015 = vsel %vm3012, %v2953, %v2985
        %v3016 = vsel %vm3012, %v2955, %v2987
        %v3017 = vsel %vm3012, %v2957, %v2989
        %v3018 = vsel %vm3012, %v2959, %v2991
        %v3019 = vsel %vm3012, %v2961, %v2993
        %v3020 = vsel %vm3012, %v2963, %v2995
        %v3021 = vsel %vm3012, %v2965, %v2997
        %v3022 = vsel %vm3012, %v2967, %v2999
        %v3023 = vsel %vm3012, %v2969, %v3001
        %v3024 = vsel %vm3012, %v2971, %v3003
        %v3025 = vsel %vm3012, %v2973, %v3005
        %v3026 = vsel %vm3012, %v2975, %v3007
        %v3027 = vsel %vm3012, %v2977, %v3009
        %v3028 = vsel %vm3012, %v2979, %v3011
        %v3029 = vsel %vm3012, %v2981, %v2949
        %v3030 = vsel %vm3012, %v2983, %v2951
        %v3031 = vsel %vm3012, %v2985, %v2953
        %v3032 = vsel %vm3012, %v2987, %v2955
        %v3033 = vsel %vm3012, %v2989, %v2957
        %v3034 = vsel %vm3012, %v2991, %v2959
        %v3035 = vsel %vm3012, %v2993, %v2961
        %v3036 = vsel %vm3012, %v2995, %v2963
        %v3037 = vsel %vm3012, %v2997, %v2965
        %v3038 = vsel %vm3012, %v2999, %v2967
        %v3039 = vsel %vm3012, %v3001, %v2969
        %v3040 = vsel %vm3012, %v3003, %v2971
        %v3041 = vsel %vm3012, %v3005, %v2973
        %v3042 = vsel %vm3012, %v3007, %v2975
        %v3043 = vsel %vm3012, %v3009, %v2977
        %v3044 = vsel %vm3012, %v3011, %v2979
        %v3045 = vsel %vm2946, %v3029, 1.0
        %v3046 = vsel %vm2947, %v3013, 1.0
        %v3047 = vsel %vm2946, %v3030, 1.0
        %v3048 = vsel %vm2947, %v3014, 1.0
        %v3049 = vsel %vm2946, %v3031, 1.0
        %v3050 = vsel %vm2947, %v3015, 1.0
        %v3051 = vsel %vm2946, %v3032, 1.0
        %v3052 = vsel %vm2947, %v3016, 1.0
        %v3053 = vsel %vm2946, %v3033, 1.0
        %v3054 = vsel %vm2947, %v3017, 1.0
        %v3055 = vsel %vm2946, %v3034, 1.0
        %v3056 = vsel %vm2947, %v3018, 1.0
        %v3057 = vsel %vm2946, %v3035, 1.0
        %v3058 = vsel %vm2947, %v3019, 1.0
        %v3059 = vsel %vm2946, %v3036, 1.0
        %v3060 = vsel %vm2947, %v3020, 1.0
        %v3061 = vsel %vm2946, %v3037, 1.0
        %v3062 = vsel %vm2947, %v3021, 1.0
        %v3063 = vsel %vm2946, %v3038, 1.0
        %v3064 = vsel %vm2947, %v3022, 1.0
        %v3065 = vsel %vm2946, %v3039, 1.0
        %v3066 = vsel %vm2947, %v3023, 1.0
        %v3067 = vsel %vm2946, %v3040, 1.0
        %v3068 = vsel %vm2947, %v3024, 1.0
        %v3069 = vsel %vm2946, %v3041, 1.0
        %v3070 = vsel %vm2947, %v3025, 1.0
        %v3071 = vsel %vm2946, %v3042, 1.0
        %v3072 = vsel %vm2947, %v3026, 1.0
        %v3073 = vsel %vm2946, %v3043, 1.0
        %v3074 = vsel %vm2947, %v3027, 1.0
        %v3075 = vsel %vm2946, %v3044, 1.0
        %v3076 = vsel %vm2947, %v3028, 1.0
        %3077 = vrot.lane.b32.xlu0 %v2882, 32
        %v3078 = vpop.permute.xlu0 %3077
        %3079 = vrot.lane.b32.xlu0 %v2884, 32
        %v3080 = vpop.permute.xlu0 %3079
        %3081 = vrot.lane.b32.xlu0 %v2886, 32
        %v3082 = vpop.permute.xlu0 %3081
        %3083 = vrot.lane.b32.xlu0 %v2888, 32
        %v3084 = vpop.permute.xlu0 %3083
        %3085 = vrot.lane.b32.xlu0 %v2890, 32
        %v3086 = vpop.permute.xlu0 %3085
        %3087 = vrot.lane.b32.xlu0 %v2892, 32
        %v3088 = vpop.permute.xlu0 %3087
        %3089 = vrot.lane.b32.xlu0 %v2894, 32
        %v3090 = vpop.permute.xlu0 %3089
        %3091 = vrot.lane.b32.xlu0 %v2896, 32
        %v3092 = vpop.permute.xlu0 %3091
        %3093 = vrot.lane.b32.xlu0 %v2898, 32
        %v3094 = vpop.permute.xlu0 %3093
        %3095 = vrot.lane.b32.xlu0 %v2900, 32
        %v3096 = vpop.permute.xlu0 %3095
        %3097 = vrot.lane.b32.xlu0 %v2902, 32
        %v3098 = vpop.permute.xlu0 %3097
        %3099 = vrot.lane.b32.xlu0 %v2904, 32
        %v3100 = vpop.permute.xlu0 %3099
        %3101 = vrot.lane.b32.xlu0 %v2906, 32
        %v3102 = vpop.permute.xlu0 %3101
        %3103 = vrot.lane.b32.xlu0 %v2908, 32
        %v3104 = vpop.permute.xlu0 %3103
        %3105 = vrot.lane.b32.xlu0 %v2910, 32
        %v3106 = vpop.permute.xlu0 %3105
        %3107 = vrot.lane.b32.xlu0 %v2912, 32
        %v3108 = vpop.permute.xlu0 %3107
        %3109 = vrot.lane.b32.xlu0 %v2883, 32
        %v3110 = vpop.permute.xlu0 %3109
        %3111 = vrot.lane.b32.xlu0 %v2885, 32
        %v3112 = vpop.permute.xlu0 %3111
        %3113 = vrot.lane.b32.xlu0 %v2887, 32
        %v3114 = vpop.permute.xlu0 %3113
        %3115 = vrot.lane.b32.xlu0 %v2889, 32
        %v3116 = vpop.permute.xlu0 %3115
        %3117 = vrot.lane.b32.xlu0 %v2891, 32
        %v3118 = vpop.permute.xlu0 %3117
        %3119 = vrot.lane.b32.xlu0 %v2893, 32
        %v3120 = vpop.permute.xlu0 %3119
        %3121 = vrot.lane.b32.xlu0 %v2895, 32
        %v3122 = vpop.permute.xlu0 %3121
        %3123 = vrot.lane.b32.xlu0 %v2897, 32
        %v3124 = vpop.permute.xlu0 %3123
        %3125 = vrot.lane.b32.xlu0 %v2899, 32
        %v3126 = vpop.permute.xlu0 %3125
        %3127 = vrot.lane.b32.xlu0 %v2901, 32
        %v3128 = vpop.permute.xlu0 %3127
        %3129 = vrot.lane.b32.xlu0 %v2903, 32
        %v3130 = vpop.permute.xlu0 %3129
        %3131 = vrot.lane.b32.xlu0 %v2905, 32
        %v3132 = vpop.permute.xlu0 %3131
        %3133 = vrot.lane.b32.xlu0 %v2907, 32
        %v3134 = vpop.permute.xlu0 %3133
        %3135 = vrot.lane.b32.xlu0 %v2909, 32
        %v3136 = vpop.permute.xlu0 %3135
        %3137 = vrot.lane.b32.xlu0 %v2911, 32
        %v3138 = vpop.permute.xlu0 %3137
        %3139 = vrot.lane.b32.xlu0 %v2913, 32
        %v3140 = vpop.permute.xlu0 %3139
        %v3141 = vsel %vm3012, %v3078, %v3110
        %v3142 = vsel %vm3012, %v3080, %v3112
        %v3143 = vsel %vm3012, %v3082, %v3114
        %v3144 = vsel %vm3012, %v3084, %v3116
        %v3145 = vsel %vm3012, %v3086, %v3118
        %v3146 = vsel %vm3012, %v3088, %v3120
        %v3147 = vsel %vm3012, %v3090, %v3122
        %v3148 = vsel %vm3012, %v3092, %v3124
        %v3149 = vsel %vm3012, %v3094, %v3126
        %v3150 = vsel %vm3012, %v3096, %v3128
        %v3151 = vsel %vm3012, %v3098, %v3130
        %v3152 = vsel %vm3012, %v3100, %v3132
        %v3153 = vsel %vm3012, %v3102, %v3134
        %v3154 = vsel %vm3012, %v3104, %v3136
        %v3155 = vsel %vm3012, %v3106, %v3138
        %v3156 = vsel %vm3012, %v3108, %v3140
        %v3157 = vsel %vm3012, %v3110, %v3078
        %v3158 = vsel %vm3012, %v3112, %v3080
        %v3159 = vsel %vm3012, %v3114, %v3082
        %v3160 = vsel %vm3012, %v3116, %v3084
        %v3161 = vsel %vm3012, %v3118, %v3086
        %v3162 = vsel %vm3012, %v3120, %v3088
        %v3163 = vsel %vm3012, %v3122, %v3090
        %v3164 = vsel %vm3012, %v3124, %v3092
        %v3165 = vsel %vm3012, %v3126, %v3094
        %v3166 = vsel %vm3012, %v3128, %v3096
        %v3167 = vsel %vm3012, %v3130, %v3098
        %v3168 = vsel %vm3012, %v3132, %v3100
        %v3169 = vsel %vm3012, %v3134, %v3102
        %v3170 = vsel %vm3012, %v3136, %v3104
        %v3171 = vsel %vm3012, %v3138, %v3106
        %v3172 = vsel %vm3012, %v3140, %v3108
        %v3173 = vsel %vm2946, %v3157, 0.0
        %v3174 = vsel %vm2947, %v3141, 0.0
        %v3175 = vsel %vm2946, %v3158, 0.0
        %v3176 = vsel %vm2947, %v3142, 0.0
        %v3177 = vsel %vm2946, %v3159, 0.0
        %v3178 = vsel %vm2947, %v3143, 0.0
        %v3179 = vsel %vm2946, %v3160, 0.0
        %v3180 = vsel %vm2947, %v3144, 0.0
        %v3181 = vsel %vm2946, %v3161, 0.0
        %v3182 = vsel %vm2947, %v3145, 0.0
        %v3183 = vsel %vm2946, %v3162, 0.0
        %v3184 = vsel %vm2947, %v3146, 0.0
        %v3185 = vsel %vm2946, %v3163, 0.0
        %v3186 = vsel %vm2947, %v3147, 0.0
        %v3187 = vsel %vm2946, %v3164, 0.0
        %v3188 = vsel %vm2947, %v3148, 0.0
        %v3189 = vsel %vm2946, %v3165, 0.0
        %v3190 = vsel %vm2947, %v3149, 0.0
        %v3191 = vsel %vm2946, %v3166, 0.0
        %v3192 = vsel %vm2947, %v3150, 0.0
        %v3193 = vsel %vm2946, %v3167, 0.0
        %v3194 = vsel %vm2947, %v3151, 0.0
        %v3195 = vsel %vm2946, %v3168, 0.0
        %v3196 = vsel %vm2947, %v3152, 0.0
        %v3197 = vsel %vm2946, %v3169, 0.0
        %v3198 = vsel %vm2947, %v3153, 0.0
        %v3199 = vsel %vm2946, %v3170, 0.0
        %v3200 = vsel %vm2947, %v3154, 0.0
        %v3201 = vsel %vm2946, %v3171, 0.0
        %v3202 = vsel %vm2947, %v3155, 0.0
        %v3203 = vsel %vm2946, %v3172, 0.0
        %v3204 = vsel %vm2947, %v3156, 0.0
        %v3205 = vmul.f32 %v2914, %v3173
        %v3206 = vmul.f32 %v2915, %v3174
        %v3207 = vmul.f32 %v2916, %v3175
        %v3208 = vmul.f32 %v2917, %v3176
        %v3209 = vmul.f32 %v2918, %v3177
        %v3210 = vmul.f32 %v2919, %v3178
        %v3211 = vmul.f32 %v2920, %v3179
        %v3212 = vmul.f32 %v2921, %v3180
        %v3213 = vmul.f32 %v2922, %v3181
        %v3214 = vmul.f32 %v2923, %v3182
        %v3215 = vmul.f32 %v2924, %v3183
        %v3216 = vmul.f32 %v2925, %v3184
        %v3217 = vmul.f32 %v2926, %v3185
        %v3218 = vmul.f32 %v2927, %v3186
        %v3219 = vmul.f32 %v2928, %v3187
        %v3220 = vmul.f32 %v2929, %v3188
        %v3221 = vmul.f32 %v2930, %v3189
        %v3222 = vmul.f32 %v2931, %v3190
        %v3223 = vmul.f32 %v2932, %v3191
        %v3224 = vmul.f32 %v2933, %v3192
        %v3225 = vmul.f32 %v2934, %v3193
        %v3226 = vmul.f32 %v2935, %v3194
        %v3227 = vmul.f32 %v2936, %v3195
        %v3228 = vmul.f32 %v2937, %v3196
        %v3229 = vmul.f32 %v2938, %v3197
        %v3230 = vmul.f32 %v2939, %v3198
        %v3231 = vmul.f32 %v2940, %v3199
        %v3232 = vmul.f32 %v2941, %v3200
        %v3233 = vmul.f32 %v2942, %v3201
        %v3234 = vmul.f32 %v2943, %v3202
        %v3235 = vmul.f32 %v2944, %v3203
        %v3236 = vmul.f32 %v2945, %v3204
        %v3237 = vadd.f32 %v3205, %v2882
        %v3238 = vadd.f32 %v3206, %v2883
        %v3239 = vadd.f32 %v3207, %v2884
        %v3240 = vadd.f32 %v3208, %v2885
        %v3241 = vadd.f32 %v3209, %v2886
        %v3242 = vadd.f32 %v3210, %v2887
        %v3243 = vadd.f32 %v3211, %v2888
        %v3244 = vadd.f32 %v3212, %v2889
        %v3245 = vadd.f32 %v3213, %v2890
        %v3246 = vadd.f32 %v3214, %v2891
        %v3247 = vadd.f32 %v3215, %v2892
        %v3248 = vadd.f32 %v3216, %v2893
        %v3249 = vadd.f32 %v3217, %v2894
        %v3250 = vadd.f32 %v3218, %v2895
        %v3251 = vadd.f32 %v3219, %v2896
        %v3252 = vadd.f32 %v3220, %v2897
        %v3253 = vadd.f32 %v3221, %v2898
        %v3254 = vadd.f32 %v3222, %v2899
        %v3255 = vadd.f32 %v3223, %v2900
        %v3256 = vadd.f32 %v3224, %v2901
        %v3257 = vadd.f32 %v3225, %v2902
        %v3258 = vadd.f32 %v3226, %v2903
        %v3259 = vadd.f32 %v3227, %v2904
        %v3260 = vadd.f32 %v3228, %v2905
        %v3261 = vadd.f32 %v3229, %v2906
        %v3262 = vadd.f32 %v3230, %v2907
        %v3263 = vadd.f32 %v3231, %v2908
        %v3264 = vadd.f32 %v3232, %v2909
        %v3265 = vadd.f32 %v3233, %v2910
        %v3266 = vadd.f32 %v3234, %v2911
        %v3267 = vadd.f32 %v3235, %v2912
        %v3268 = vadd.f32 %v3236, %v2913
        %v3269 = vmul.f32 %v2914, %v3045
        %v3270 = vmul.f32 %v2915, %v3046
        %v3271 = vmul.f32 %v2916, %v3047
        %v3272 = vmul.f32 %v2917, %v3048
        %v3273 = vmul.f32 %v2918, %v3049
        %v3274 = vmul.f32 %v2919, %v3050
        %v3275 = vmul.f32 %v2920, %v3051
        %v3276 = vmul.f32 %v2921, %v3052
        %v3277 = vmul.f32 %v2922, %v3053
        %v3278 = vmul.f32 %v2923, %v3054
        %v3279 = vmul.f32 %v2924, %v3055
        %v3280 = vmul.f32 %v2925, %v3056
        %v3281 = vmul.f32 %v2926, %v3057
        %v3282 = vmul.f32 %v2927, %v3058
        %v3283 = vmul.f32 %v2928, %v3059
        %v3284 = vmul.f32 %v2929, %v3060
        %v3285 = vmul.f32 %v2930, %v3061
        %v3286 = vmul.f32 %v2931, %v3062
        %v3287 = vmul.f32 %v2932, %v3063
        %v3288 = vmul.f32 %v2933, %v3064
        %v3289 = vmul.f32 %v2934, %v3065
        %v3290 = vmul.f32 %v2935, %v3066
        %v3291 = vmul.f32 %v2936, %v3067
        %v3292 = vmul.f32 %v2937, %v3068
        %v3293 = vmul.f32 %v2938, %v3069
        %v3294 = vmul.f32 %v2939, %v3070
        %v3295 = vmul.f32 %v2940, %v3071
        %v3296 = vmul.f32 %v2941, %v3072
        %v3297 = vmul.f32 %v2942, %v3073
        %v3298 = vmul.f32 %v2943, %v3074
        %v3299 = vmul.f32 %v2944, %v3075
        %v3300 = vmul.f32 %v2945, %v3076
        %vm3301 = vcmp.ge.s32.totalorder %v456, 64
        %vm3302 = vcmp.ge.s32.totalorder %v457, 64
        %3303 = vrot.lane.b32.xlu0 %v3269, 64
        %v3304 = vpop.permute.xlu0 %3303
        %3305 = vrot.lane.b32.xlu0 %v3271, 64
        %v3306 = vpop.permute.xlu0 %3305
        %3307 = vrot.lane.b32.xlu0 %v3273, 64
        %v3308 = vpop.permute.xlu0 %3307
        %3309 = vrot.lane.b32.xlu0 %v3275, 64
        %v3310 = vpop.permute.xlu0 %3309
        %3311 = vrot.lane.b32.xlu0 %v3277, 64
        %v3312 = vpop.permute.xlu0 %3311
        %3313 = vrot.lane.b32.xlu0 %v3279, 64
        %v3314 = vpop.permute.xlu0 %3313
        %3315 = vrot.lane.b32.xlu0 %v3281, 64
        %v3316 = vpop.permute.xlu0 %3315
        %3317 = vrot.lane.b32.xlu0 %v3283, 64
        %v3318 = vpop.permute.xlu0 %3317
        %3319 = vrot.lane.b32.xlu0 %v3285, 64
        %v3320 = vpop.permute.xlu0 %3319
        %3321 = vrot.lane.b32.xlu0 %v3287, 64
        %v3322 = vpop.permute.xlu0 %3321
        %3323 = vrot.lane.b32.xlu0 %v3289, 64
        %v3324 = vpop.permute.xlu0 %3323
        %3325 = vrot.lane.b32.xlu0 %v3291, 64
        %v3326 = vpop.permute.xlu0 %3325
        %3327 = vrot.lane.b32.xlu0 %v3293, 64
        %v3328 = vpop.permute.xlu0 %3327
        %3329 = vrot.lane.b32.xlu0 %v3295, 64
        %v3330 = vpop.permute.xlu0 %3329
        %3331 = vrot.lane.b32.xlu0 %v3297, 64
        %v3332 = vpop.permute.xlu0 %3331
        %3333 = vrot.lane.b32.xlu0 %v3299, 64
        %v3334 = vpop.permute.xlu0 %3333
        %3335 = vrot.lane.b32.xlu0 %v3270, 64
        %v3336 = vpop.permute.xlu0 %3335
        %3337 = vrot.lane.b32.xlu0 %v3272, 64
        %v3338 = vpop.permute.xlu0 %3337
        %3339 = vrot.lane.b32.xlu0 %v3274, 64
        %v3340 = vpop.permute.xlu0 %3339
        %3341 = vrot.lane.b32.xlu0 %v3276, 64
        %v3342 = vpop.permute.xlu0 %3341
        %3343 = vrot.lane.b32.xlu0 %v3278, 64
        %v3344 = vpop.permute.xlu0 %3343
        %3345 = vrot.lane.b32.xlu0 %v3280, 64
        %v3346 = vpop.permute.xlu0 %3345
        %3347 = vrot.lane.b32.xlu0 %v3282, 64
        %v3348 = vpop.permute.xlu0 %3347
        %3349 = vrot.lane.b32.xlu0 %v3284, 64
        %v3350 = vpop.permute.xlu0 %3349
        %3351 = vrot.lane.b32.xlu0 %v3286, 64
        %v3352 = vpop.permute.xlu0 %3351
        %3353 = vrot.lane.b32.xlu0 %v3288, 64
        %v3354 = vpop.permute.xlu0 %3353
        %3355 = vrot.lane.b32.xlu0 %v3290, 64
        %v3356 = vpop.permute.xlu0 %3355
        %3357 = vrot.lane.b32.xlu0 %v3292, 64
        %v3358 = vpop.permute.xlu0 %3357
        %3359 = vrot.lane.b32.xlu0 %v3294, 64
        %v3360 = vpop.permute.xlu0 %3359
        %3361 = vrot.lane.b32.xlu0 %v3296, 64
        %v3362 = vpop.permute.xlu0 %3361
        %3363 = vrot.lane.b32.xlu0 %v3298, 64
        %v3364 = vpop.permute.xlu0 %3363
        %3365 = vrot.lane.b32.xlu0 %v3300, 64
        %v3366 = vpop.permute.xlu0 %3365
        %vm3367 = vcmp.lt.s32.totalorder %v456, 64
        %v3368 = vsel %vm3367, %v3304, %v3336
        %v3369 = vsel %vm3367, %v3306, %v3338
        %v3370 = vsel %vm3367, %v3308, %v3340
        %v3371 = vsel %vm3367, %v3310, %v3342
        %v3372 = vsel %vm3367, %v3312, %v3344
        %v3373 = vsel %vm3367, %v3314, %v3346
        %v3374 = vsel %vm3367, %v3316, %v3348
        %v3375 = vsel %vm3367, %v3318, %v3350
        %v3376 = vsel %vm3367, %v3320, %v3352
        %v3377 = vsel %vm3367, %v3322, %v3354
        %v3378 = vsel %vm3367, %v3324, %v3356
        %v3379 = vsel %vm3367, %v3326, %v3358
        %v3380 = vsel %vm3367, %v3328, %v3360
        %v3381 = vsel %vm3367, %v3330, %v3362
        %v3382 = vsel %vm3367, %v3332, %v3364
        %v3383 = vsel %vm3367, %v3334, %v3366
        %v3384 = vsel %vm3367, %v3336, %v3304
        %v3385 = vsel %vm3367, %v3338, %v3306
        %v3386 = vsel %vm3367, %v3340, %v3308
        %v3387 = vsel %vm3367, %v3342, %v3310
        %v3388 = vsel %vm3367, %v3344, %v3312
        %v3389 = vsel %vm3367, %v3346, %v3314
        %v3390 = vsel %vm3367, %v3348, %v3316
        %v3391 = vsel %vm3367, %v3350, %v3318
        %v3392 = vsel %vm3367, %v3352, %v3320
        %v3393 = vsel %vm3367, %v3354, %v3322
        %v3394 = vsel %vm3367, %v3356, %v3324
        %v3395 = vsel %vm3367, %v3358, %v3326
        %v3396 = vsel %vm3367, %v3360, %v3328
        %v3397 = vsel %vm3367, %v3362, %v3330
        %v3398 = vsel %vm3367, %v3364, %v3332
        %v3399 = vsel %vm3367, %v3366, %v3334
        %v3400 = vsel %vm3301, %v3384, 1.0
        %v3401 = vsel %vm3302, %v3368, 1.0
        %v3402 = vsel %vm3301, %v3385, 1.0
        %v3403 = vsel %vm3302, %v3369, 1.0
        %v3404 = vsel %vm3301, %v3386, 1.0
        %v3405 = vsel %vm3302, %v3370, 1.0
        %v3406 = vsel %vm3301, %v3387, 1.0
        %v3407 = vsel %vm3302, %v3371, 1.0
        %v3408 = vsel %vm3301, %v3388, 1.0
        %v3409 = vsel %vm3302, %v3372, 1.0
        %v3410 = vsel %vm3301, %v3389, 1.0
        %v3411 = vsel %vm3302, %v3373, 1.0
        %v3412 = vsel %vm3301, %v3390, 1.0
        %v3413 = vsel %vm3302, %v3374, 1.0
        %v3414 = vsel %vm3301, %v3391, 1.0
        %v3415 = vsel %vm3302, %v3375, 1.0
        %v3416 = vsel %vm3301, %v3392, 1.0
        %v3417 = vsel %vm3302, %v3376, 1.0
        %v3418 = vsel %vm3301, %v3393, 1.0
        %v3419 = vsel %vm3302, %v3377, 1.0
        %v3420 = vsel %vm3301, %v3394, 1.0
        %v3421 = vsel %vm3302, %v3378, 1.0
        %v3422 = vsel %vm3301, %v3395, 1.0
        %v3423 = vsel %vm3302, %v3379, 1.0
        %v3424 = vsel %vm3301, %v3396, 1.0
        %v3425 = vsel %vm3302, %v3380, 1.0
        %v3426 = vsel %vm3301, %v3397, 1.0
        %v3427 = vsel %vm3302, %v3381, 1.0
        %v3428 = vsel %vm3301, %v3398, 1.0
        %v3429 = vsel %vm3302, %v3382, 1.0
        %v3430 = vsel %vm3301, %v3399, 1.0
        %v3431 = vsel %vm3302, %v3383, 1.0
        %3432 = vrot.lane.b32.xlu0 %v3237, 64
        %v3433 = vpop.permute.xlu0 %3432
        %3434 = vrot.lane.b32.xlu0 %v3239, 64
        %v3435 = vpop.permute.xlu0 %3434
        %3436 = vrot.lane.b32.xlu0 %v3241, 64
        %v3437 = vpop.permute.xlu0 %3436
        %3438 = vrot.lane.b32.xlu0 %v3243, 64
        %v3439 = vpop.permute.xlu0 %3438
        %3440 = vrot.lane.b32.xlu0 %v3245, 64
        %v3441 = vpop.permute.xlu0 %3440
        %3442 = vrot.lane.b32.xlu0 %v3247, 64
        %v3443 = vpop.permute.xlu0 %3442
        %3444 = vrot.lane.b32.xlu0 %v3249, 64
        %v3445 = vpop.permute.xlu0 %3444
        %3446 = vrot.lane.b32.xlu0 %v3251, 64
        %v3447 = vpop.permute.xlu0 %3446
        %3448 = vrot.lane.b32.xlu0 %v3253, 64
        %v3449 = vpop.permute.xlu0 %3448
        %3450 = vrot.lane.b32.xlu0 %v3255, 64
        %v3451 = vpop.permute.xlu0 %3450
        %3452 = vrot.lane.b32.xlu0 %v3257, 64
        %v3453 = vpop.permute.xlu0 %3452
        %3454 = vrot.lane.b32.xlu0 %v3259, 64
        %v3455 = vpop.permute.xlu0 %3454
        %3456 = vrot.lane.b32.xlu0 %v3261, 64
        %v3457 = vpop.permute.xlu0 %3456
        %3458 = vrot.lane.b32.xlu0 %v3263, 64
        %v3459 = vpop.permute.xlu0 %3458
        %3460 = vrot.lane.b32.xlu0 %v3265, 64
        %v3461 = vpop.permute.xlu0 %3460
        %3462 = vrot.lane.b32.xlu0 %v3267, 64
        %v3463 = vpop.permute.xlu0 %3462
        %3464 = vrot.lane.b32.xlu0 %v3238, 64
        %v3465 = vpop.permute.xlu0 %3464
        %3466 = vrot.lane.b32.xlu0 %v3240, 64
        %v3467 = vpop.permute.xlu0 %3466
        %3468 = vrot.lane.b32.xlu0 %v3242, 64
        %v3469 = vpop.permute.xlu0 %3468
        %3470 = vrot.lane.b32.xlu0 %v3244, 64
        %v3471 = vpop.permute.xlu0 %3470
        %3472 = vrot.lane.b32.xlu0 %v3246, 64
        %v3473 = vpop.permute.xlu0 %3472
        %3474 = vrot.lane.b32.xlu0 %v3248, 64
        %v3475 = vpop.permute.xlu0 %3474
        %3476 = vrot.lane.b32.xlu0 %v3250, 64
        %v3477 = vpop.permute.xlu0 %3476
        %3478 = vrot.lane.b32.xlu0 %v3252, 64
        %v3479 = vpop.permute.xlu0 %3478
        %3480 = vrot.lane.b32.xlu0 %v3254, 64
        %v3481 = vpop.permute.xlu0 %3480
        %3482 = vrot.lane.b32.xlu0 %v3256, 64
        %v3483 = vpop.permute.xlu0 %3482
        %3484 = vrot.lane.b32.xlu0 %v3258, 64
        %v3485 = vpop.permute.xlu0 %3484
        %3486 = vrot.lane.b32.xlu0 %v3260, 64
        %v3487 = vpop.permute.xlu0 %3486
        %3488 = vrot.lane.b32.xlu0 %v3262, 64
        %v3489 = vpop.permute.xlu0 %3488
        %3490 = vrot.lane.b32.xlu0 %v3264, 64
        %v3491 = vpop.permute.xlu0 %3490
        %3492 = vrot.lane.b32.xlu0 %v3266, 64
        %v3493 = vpop.permute.xlu0 %3492
        %3494 = vrot.lane.b32.xlu0 %v3268, 64
        %v3495 = vpop.permute.xlu0 %3494
        %v3496 = vsel %vm3367, %v3433, %v3465
        %v3497 = vsel %vm3367, %v3435, %v3467
        %v3498 = vsel %vm3367, %v3437, %v3469
        %v3499 = vsel %vm3367, %v3439, %v3471
        %v3500 = vsel %vm3367, %v3441, %v3473
        %v3501 = vsel %vm3367, %v3443, %v3475
        %v3502 = vsel %vm3367, %v3445, %v3477
        %v3503 = vsel %vm3367, %v3447, %v3479
        %v3504 = vsel %vm3367, %v3449, %v3481
        %v3505 = vsel %vm3367, %v3451, %v3483
        %v3506 = vsel %vm3367, %v3453, %v3485
        %v3507 = vsel %vm3367, %v3455, %v3487
        %v3508 = vsel %vm3367, %v3457, %v3489
        %v3509 = vsel %vm3367, %v3459, %v3491
        %v3510 = vsel %vm3367, %v3461, %v3493
        %v3511 = vsel %vm3367, %v3463, %v3495
        %v3512 = vsel %vm3367, %v3465, %v3433
        %v3513 = vsel %vm3367, %v3467, %v3435
        %v3514 = vsel %vm3367, %v3469, %v3437
        %v3515 = vsel %vm3367, %v3471, %v3439
        %v3516 = vsel %vm3367, %v3473, %v3441
        %v3517 = vsel %vm3367, %v3475, %v3443
        %v3518 = vsel %vm3367, %v3477, %v3445
        %v3519 = vsel %vm3367, %v3479, %v3447
        %v3520 = vsel %vm3367, %v3481, %v3449
        %v3521 = vsel %vm3367, %v3483, %v3451
        %v3522 = vsel %vm3367, %v3485, %v3453
        %v3523 = vsel %vm3367, %v3487, %v3455
        %v3524 = vsel %vm3367, %v3489, %v3457
        %v3525 = vsel %vm3367, %v3491, %v3459
        %v3526 = vsel %vm3367, %v3493, %v3461
        %v3527 = vsel %vm3367, %v3495, %v3463
        %v3528 = vsel %vm3301, %v3512, 0.0
        %v3529 = vsel %vm3302, %v3496, 0.0
        %v3530 = vsel %vm3301, %v3513, 0.0
        %v3531 = vsel %vm3302, %v3497, 0.0
        %v3532 = vsel %vm3301, %v3514, 0.0
        %v3533 = vsel %vm3302, %v3498, 0.0
        %v3534 = vsel %vm3301, %v3515, 0.0
        %v3535 = vsel %vm3302, %v3499, 0.0
        %v3536 = vsel %vm3301, %v3516, 0.0
        %v3537 = vsel %vm3302, %v3500, 0.0
        %v3538 = vsel %vm3301, %v3517, 0.0
        %v3539 = vsel %vm3302, %v3501, 0.0
        %v3540 = vsel %vm3301, %v3518, 0.0
        %v3541 = vsel %vm3302, %v3502, 0.0
        %v3542 = vsel %vm3301, %v3519, 0.0
        %v3543 = vsel %vm3302, %v3503, 0.0
        %v3544 = vsel %vm3301, %v3520, 0.0
        %v3545 = vsel %vm3302, %v3504, 0.0
        %v3546 = vsel %vm3301, %v3521, 0.0
        %v3547 = vsel %vm3302, %v3505, 0.0
        %v3548 = vsel %vm3301, %v3522, 0.0
        %v3549 = vsel %vm3302, %v3506, 0.0
        %v3550 = vsel %vm3301, %v3523, 0.0
        %v3551 = vsel %vm3302, %v3507, 0.0
        %v3552 = vsel %vm3301, %v3524, 0.0
        %v3553 = vsel %vm3302, %v3508, 0.0
        %v3554 = vsel %vm3301, %v3525, 0.0
        %v3555 = vsel %vm3302, %v3509, 0.0
        %v3556 = vsel %vm3301, %v3526, 0.0
        %v3557 = vsel %vm3302, %v3510, 0.0
        %v3558 = vsel %vm3301, %v3527, 0.0
        %v3559 = vsel %vm3302, %v3511, 0.0
        %v3560 = vmul.f32 %v3269, %v3528
        %v3561 = vmul.f32 %v3270, %v3529
        %v3562 = vmul.f32 %v3271, %v3530
        %v3563 = vmul.f32 %v3272, %v3531
        %v3564 = vmul.f32 %v3273, %v3532
        %v3565 = vmul.f32 %v3274, %v3533
        %v3566 = vmul.f32 %v3275, %v3534
        %v3567 = vmul.f32 %v3276, %v3535
        %v3568 = vmul.f32 %v3277, %v3536
        %v3569 = vmul.f32 %v3278, %v3537
        %v3570 = vmul.f32 %v3279, %v3538
        %v3571 = vmul.f32 %v3280, %v3539
        %v3572 = vmul.f32 %v3281, %v3540
        %v3573 = vmul.f32 %v3282, %v3541
        %v3574 = vmul.f32 %v3283, %v3542
        %v3575 = vmul.f32 %v3284, %v3543
        %v3576 = vmul.f32 %v3285, %v3544
        %v3577 = vmul.f32 %v3286, %v3545
        %v3578 = vmul.f32 %v3287, %v3546
        %v3579 = vmul.f32 %v3288, %v3547
        %v3580 = vmul.f32 %v3289, %v3548
        %v3581 = vmul.f32 %v3290, %v3549
        %v3582 = vmul.f32 %v3291, %v3550
        %v3583 = vmul.f32 %v3292, %v3551
        %v3584 = vmul.f32 %v3293, %v3552
        %v3585 = vmul.f32 %v3294, %v3553
        %v3586 = vmul.f32 %v3295, %v3554
        %v3587 = vmul.f32 %v3296, %v3555
        %v3588 = vmul.f32 %v3297, %v3556
        %v3589 = vmul.f32 %v3298, %v3557
        %v3590 = vmul.f32 %v3299, %v3558
        %v3591 = vmul.f32 %v3300, %v3559
        %v3592 = vadd.f32 %v3560, %v3237
        %v3593 = vadd.f32 %v3561, %v3238
        %v3594 = vadd.f32 %v3562, %v3239
        %v3595 = vadd.f32 %v3563, %v3240
        %v3596 = vadd.f32 %v3564, %v3241
        %v3597 = vadd.f32 %v3565, %v3242
        %v3598 = vadd.f32 %v3566, %v3243
        %v3599 = vadd.f32 %v3567, %v3244
        %v3600 = vadd.f32 %v3568, %v3245
        %v3601 = vadd.f32 %v3569, %v3246
        %v3602 = vadd.f32 %v3570, %v3247
        %v3603 = vadd.f32 %v3571, %v3248
        %v3604 = vadd.f32 %v3572, %v3249
        %v3605 = vadd.f32 %v3573, %v3250
        %v3606 = vadd.f32 %v3574, %v3251
        %v3607 = vadd.f32 %v3575, %v3252
        %v3608 = vadd.f32 %v3576, %v3253
        %v3609 = vadd.f32 %v3577, %v3254
        %v3610 = vadd.f32 %v3578, %v3255
        %v3611 = vadd.f32 %v3579, %v3256
        %v3612 = vadd.f32 %v3580, %v3257
        %v3613 = vadd.f32 %v3581, %v3258
        %v3614 = vadd.f32 %v3582, %v3259
        %v3615 = vadd.f32 %v3583, %v3260
        %v3616 = vadd.f32 %v3584, %v3261
        %v3617 = vadd.f32 %v3585, %v3262
        %v3618 = vadd.f32 %v3586, %v3263
        %v3619 = vadd.f32 %v3587, %v3264
        %v3620 = vadd.f32 %v3588, %v3265
        %v3621 = vadd.f32 %v3589, %v3266
        %v3622 = vadd.f32 %v3590, %v3267
        %v3623 = vadd.f32 %v3591, %v3268
        %v3624 = vmul.f32 %v3269, %v3400
        %v3625 = vmul.f32 %v3270, %v3401
        %v3626 = vmul.f32 %v3271, %v3402
        %v3627 = vmul.f32 %v3272, %v3403
        %v3628 = vmul.f32 %v3273, %v3404
        %v3629 = vmul.f32 %v3274, %v3405
        %v3630 = vmul.f32 %v3275, %v3406
        %v3631 = vmul.f32 %v3276, %v3407
        %v3632 = vmul.f32 %v3277, %v3408
        %v3633 = vmul.f32 %v3278, %v3409
        %v3634 = vmul.f32 %v3279, %v3410
        %v3635 = vmul.f32 %v3280, %v3411
        %v3636 = vmul.f32 %v3281, %v3412
        %v3637 = vmul.f32 %v3282, %v3413
        %v3638 = vmul.f32 %v3283, %v3414
        %v3639 = vmul.f32 %v3284, %v3415
        %v3640 = vmul.f32 %v3285, %v3416
        %v3641 = vmul.f32 %v3286, %v3417
        %v3642 = vmul.f32 %v3287, %v3418
        %v3643 = vmul.f32 %v3288, %v3419
        %v3644 = vmul.f32 %v3289, %v3420
        %v3645 = vmul.f32 %v3290, %v3421
        %v3646 = vmul.f32 %v3291, %v3422
        %v3647 = vmul.f32 %v3292, %v3423
        %v3648 = vmul.f32 %v3293, %v3424
        %v3649 = vmul.f32 %v3294, %v3425
        %v3650 = vmul.f32 %v3295, %v3426
        %v3651 = vmul.f32 %v3296, %v3427
        %v3652 = vmul.f32 %v3297, %v3428
        %v3653 = vmul.f32 %v3298, %v3429
        %v3654 = vmul.f32 %v3299, %v3430
        %v3655 = vmul.f32 %v3300, %v3431
        %vm3656 = vcmp.ge.s32.totalorder %v456, 128
        %vm3657 = vcmp.ge.s32.totalorder %v457, 128
        %v3658 = vsel %vm3656, %v3625, 1.0
        %v3659 = vsel %vm3657, %v3624, 1.0
        %v3660 = vsel %vm3656, %v3627, 1.0
        %v3661 = vsel %vm3657, %v3626, 1.0
        %v3662 = vsel %vm3656, %v3629, 1.0
        %v3663 = vsel %vm3657, %v3628, 1.0
        %v3664 = vsel %vm3656, %v3631, 1.0
        %v3665 = vsel %vm3657, %v3630, 1.0
        %v3666 = vsel %vm3656, %v3633, 1.0
        %v3667 = vsel %vm3657, %v3632, 1.0
        %v3668 = vsel %vm3656, %v3635, 1.0
        %v3669 = vsel %vm3657, %v3634, 1.0
        %v3670 = vsel %vm3656, %v3637, 1.0
        %v3671 = vsel %vm3657, %v3636, 1.0
        %v3672 = vsel %vm3656, %v3639, 1.0
        %v3673 = vsel %vm3657, %v3638, 1.0
        %v3674 = vsel %vm3656, %v3641, 1.0
        %v3675 = vsel %vm3657, %v3640, 1.0
        %v3676 = vsel %vm3656, %v3643, 1.0
        %v3677 = vsel %vm3657, %v3642, 1.0
        %v3678 = vsel %vm3656, %v3645, 1.0
        %v3679 = vsel %vm3657, %v3644, 1.0
        %v3680 = vsel %vm3656, %v3647, 1.0
        %v3681 = vsel %vm3657, %v3646, 1.0
        %v3682 = vsel %vm3656, %v3649, 1.0
        %v3683 = vsel %vm3657, %v3648, 1.0
        %v3684 = vsel %vm3656, %v3651, 1.0
        %v3685 = vsel %vm3657, %v3650, 1.0
        %v3686 = vsel %vm3656, %v3653, 1.0
        %v3687 = vsel %vm3657, %v3652, 1.0
        %v3688 = vsel %vm3656, %v3655, 1.0
        %v3689 = vsel %vm3657, %v3654, 1.0
        %v3690 = vsel %vm3656, %v3593, 0.0
        %v3691 = vsel %vm3657, %v3592, 0.0
        %v3692 = vsel %vm3656, %v3595, 0.0
        %v3693 = vsel %vm3657, %v3594, 0.0
        %v3694 = vsel %vm3656, %v3597, 0.0
        %v3695 = vsel %vm3657, %v3596, 0.0
        %v3696 = vsel %vm3656, %v3599, 0.0
        %v3697 = vsel %vm3657, %v3598, 0.0
        %v3698 = vsel %vm3656, %v3601, 0.0
        %v3699 = vsel %vm3657, %v3600, 0.0
        %v3700 = vsel %vm3656, %v3603, 0.0
        %v3701 = vsel %vm3657, %v3602, 0.0
        %v3702 = vsel %vm3656, %v3605, 0.0
        %v3703 = vsel %vm3657, %v3604, 0.0
        %v3704 = vsel %vm3656, %v3607, 0.0
        %v3705 = vsel %vm3657, %v3606, 0.0
        %v3706 = vsel %vm3656, %v3609, 0.0
        %v3707 = vsel %vm3657, %v3608, 0.0
        %v3708 = vsel %vm3656, %v3611, 0.0
        %v3709 = vsel %vm3657, %v3610, 0.0
        %v3710 = vsel %vm3656, %v3613, 0.0
        %v3711 = vsel %vm3657, %v3612, 0.0
        %v3712 = vsel %vm3656, %v3615, 0.0
        %v3713 = vsel %vm3657, %v3614, 0.0
        %v3714 = vsel %vm3656, %v3617, 0.0
        %v3715 = vsel %vm3657, %v3616, 0.0
        %v3716 = vsel %vm3656, %v3619, 0.0
        %v3717 = vsel %vm3657, %v3618, 0.0
        %v3718 = vsel %vm3656, %v3621, 0.0
        %v3719 = vsel %vm3657, %v3620, 0.0
        %v3720 = vsel %vm3656, %v3623, 0.0
        %v3721 = vsel %vm3657, %v3622, 0.0
        %v3722 = vmul.f32 %v3624, %v3690
        %v3723 = vmul.f32 %v3625, %v3691
        %v3724 = vmul.f32 %v3626, %v3692
        %v3725 = vmul.f32 %v3627, %v3693
        %v3726 = vmul.f32 %v3628, %v3694
        %v3727 = vmul.f32 %v3629, %v3695
        %v3728 = vmul.f32 %v3630, %v3696
        %v3729 = vmul.f32 %v3631, %v3697
        %v3730 = vmul.f32 %v3632, %v3698
        %v3731 = vmul.f32 %v3633, %v3699
        %v3732 = vmul.f32 %v3634, %v3700
        %v3733 = vmul.f32 %v3635, %v3701
        %v3734 = vmul.f32 %v3636, %v3702
        %v3735 = vmul.f32 %v3637, %v3703
        %v3736 = vmul.f32 %v3638, %v3704
        %v3737 = vmul.f32 %v3639, %v3705
        %v3738 = vmul.f32 %v3640, %v3706
        %v3739 = vmul.f32 %v3641, %v3707
        %v3740 = vmul.f32 %v3642, %v3708
        %v3741 = vmul.f32 %v3643, %v3709
        %v3742 = vmul.f32 %v3644, %v3710
        %v3743 = vmul.f32 %v3645, %v3711
        %v3744 = vmul.f32 %v3646, %v3712
        %v3745 = vmul.f32 %v3647, %v3713
        %v3746 = vmul.f32 %v3648, %v3714
        %v3747 = vmul.f32 %v3649, %v3715
        %v3748 = vmul.f32 %v3650, %v3716
        %v3749 = vmul.f32 %v3651, %v3717
        %v3750 = vmul.f32 %v3652, %v3718
        %v3751 = vmul.f32 %v3653, %v3719
        %v3752 = vmul.f32 %v3654, %v3720
        %v3753 = vmul.f32 %v3655, %v3721
        %v3754 = vadd.f32 %v3722, %v3592
        %v3755 = vadd.f32 %v3723, %v3593
        %v3756 = vadd.f32 %v3724, %v3594
        %v3757 = vadd.f32 %v3725, %v3595
        %v3758 = vadd.f32 %v3726, %v3596
        %v3759 = vadd.f32 %v3727, %v3597
        %v3760 = vadd.f32 %v3728, %v3598
        %v3761 = vadd.f32 %v3729, %v3599
        %v3762 = vadd.f32 %v3730, %v3600
        %v3763 = vadd.f32 %v3731, %v3601
        %v3764 = vadd.f32 %v3732, %v3602
        %v3765 = vadd.f32 %v3733, %v3603
        %v3766 = vadd.f32 %v3734, %v3604
        %v3767 = vadd.f32 %v3735, %v3605
        %v3768 = vadd.f32 %v3736, %v3606
        %v3769 = vadd.f32 %v3737, %v3607
        %v3770 = vadd.f32 %v3738, %v3608
        %v3771 = vadd.f32 %v3739, %v3609
        %v3772 = vadd.f32 %v3740, %v3610
        %v3773 = vadd.f32 %v3741, %v3611
        %v3774 = vadd.f32 %v3742, %v3612
        %v3775 = vadd.f32 %v3743, %v3613
        %v3776 = vadd.f32 %v3744, %v3614
        %v3777 = vadd.f32 %v3745, %v3615
        %v3778 = vadd.f32 %v3746, %v3616
        %v3779 = vadd.f32 %v3747, %v3617
        %v3780 = vadd.f32 %v3748, %v3618
        %v3781 = vadd.f32 %v3749, %v3619
        %v3782 = vadd.f32 %v3750, %v3620
        %v3783 = vadd.f32 %v3751, %v3621
        %v3784 = vadd.f32 %v3752, %v3622
        %v3785 = vadd.f32 %v3753, %v3623
        %v3786 = vmul.f32 %v3624, %v3658
        %v3787 = vmul.f32 %v3625, %v3659
        %v3788 = vmul.f32 %v3626, %v3660
        %v3789 = vmul.f32 %v3627, %v3661
        %v3790 = vmul.f32 %v3628, %v3662
        %v3791 = vmul.f32 %v3629, %v3663
        %v3792 = vmul.f32 %v3630, %v3664
        %v3793 = vmul.f32 %v3631, %v3665
        %v3794 = vmul.f32 %v3632, %v3666
        %v3795 = vmul.f32 %v3633, %v3667
        %v3796 = vmul.f32 %v3634, %v3668
        %v3797 = vmul.f32 %v3635, %v3669
        %v3798 = vmul.f32 %v3636, %v3670
        %v3799 = vmul.f32 %v3637, %v3671
        %v3800 = vmul.f32 %v3638, %v3672
        %v3801 = vmul.f32 %v3639, %v3673
        %v3802 = vmul.f32 %v3640, %v3674
        %v3803 = vmul.f32 %v3641, %v3675
        %v3804 = vmul.f32 %v3642, %v3676
        %v3805 = vmul.f32 %v3643, %v3677
        %v3806 = vmul.f32 %v3644, %v3678
        %v3807 = vmul.f32 %v3645, %v3679
        %v3808 = vmul.f32 %v3646, %v3680
        %v3809 = vmul.f32 %v3647, %v3681
        %v3810 = vmul.f32 %v3648, %v3682
        %v3811 = vmul.f32 %v3649, %v3683
        %v3812 = vmul.f32 %v3650, %v3684
        %v3813 = vmul.f32 %v3651, %v3685
        %v3814 = vmul.f32 %v3652, %v3686
        %v3815 = vmul.f32 %v3653, %v3687
        %v3816 = vmul.f32 %v3654, %v3688
        %v3817 = vmul.f32 %v3655, %v3689
        %v3818 = vld [vmem:[#allocation2] sm:$0xff]
        %v3819 = vld [vmem:[#allocation2 + $0x8] sm:$0xff]
        %v3820 = vld [vmem:[#allocation2 + $0x10] sm:$0xff]
        %v3821 = vld [vmem:[#allocation2 + $0x18] sm:$0xff]
        %v3822 = vld [vmem:[#allocation2 + $0x20] sm:$0xff]
        %v3823 = vld [vmem:[#allocation2 + $0x28] sm:$0xff]
        %v3824 = vld [vmem:[#allocation2 + $0x30] sm:$0xff]
        %v3825 = vld [vmem:[#allocation2 + $0x38] sm:$0xff]
        %v3826 = vld [vmem:[#allocation2 + $0x40] sm:$0xff]
        %v3827 = vld [vmem:[#allocation2 + $0x48] sm:$0xff]
        %v3828 = vld [vmem:[#allocation2 + $0x50] sm:$0xff]
        %v3829 = vld [vmem:[#allocation2 + $0x58] sm:$0xff]
        %v3830 = vld [vmem:[#allocation2 + $0x60] sm:$0xff]
        %v3831 = vld [vmem:[#allocation2 + $0x68] sm:$0xff]
        %v3832 = vld [vmem:[#allocation2 + $0x70] sm:$0xff]
        %v3833 = vld [vmem:[#allocation2 + $0x78] sm:$0xff]
        %3835 = vset.pattern.permute.xlu0 0
        %3836 = vperm.xlu0 %3835, %v3818
        %v3837 = vpop.permute.xlu0 %3836
        %3840 = vset.pattern.permute.xlu0 0
        %3841 = vperm.xlu0 %3840, %v3819
        %v3842 = vpop.permute.xlu0 %3841
        %3845 = vset.pattern.permute.xlu0 0
        %3846 = vperm.xlu0 %3845, %v3820
        %v3847 = vpop.permute.xlu0 %3846
        %3850 = vset.pattern.permute.xlu0 0
        %3851 = vperm.xlu0 %3850, %v3821
        %v3852 = vpop.permute.xlu0 %3851
        %3855 = vset.pattern.permute.xlu0 0
        %3856 = vperm.xlu0 %3855, %v3822
        %v3857 = vpop.permute.xlu0 %3856
        %3860 = vset.pattern.permute.xlu0 0
        %3861 = vperm.xlu0 %3860, %v3823
        %v3862 = vpop.permute.xlu0 %3861
        %3865 = vset.pattern.permute.xlu0 0
        %3866 = vperm.xlu0 %3865, %v3824
        %v3867 = vpop.permute.xlu0 %3866
        %3870 = vset.pattern.permute.xlu0 0
        %3871 = vperm.xlu0 %3870, %v3825
        %v3872 = vpop.permute.xlu0 %3871
        %3875 = vset.pattern.permute.xlu0 0
        %3876 = vperm.xlu0 %3875, %v3826
        %v3877 = vpop.permute.xlu0 %3876
        %3880 = vset.pattern.permute.xlu0 0
        %3881 = vperm.xlu0 %3880, %v3827
        %v3882 = vpop.permute.xlu0 %3881
        %3885 = vset.pattern.permute.xlu0 0
        %3886 = vperm.xlu0 %3885, %v3828
        %v3887 = vpop.permute.xlu0 %3886
        %3890 = vset.pattern.permute.xlu0 0
        %3891 = vperm.xlu0 %3890, %v3829
        %v3892 = vpop.permute.xlu0 %3891
        %3895 = vset.pattern.permute.xlu0 0
        %3896 = vperm.xlu0 %3895, %v3830
        %v3897 = vpop.permute.xlu0 %3896
        %3900 = vset.pattern.permute.xlu0 0
        %3901 = vperm.xlu0 %3900, %v3831
        %v3902 = vpop.permute.xlu0 %3901
        %3905 = vset.pattern.permute.xlu0 0
        %3906 = vperm.xlu0 %3905, %v3832
        %v3907 = vpop.permute.xlu0 %3906
        %3910 = vset.pattern.permute.xlu0 0
        %3911 = vperm.xlu0 %3910, %v3833
        %v3912 = vpop.permute.xlu0 %3911
        %v3914 = vmul.f32 %v3786, %v3837
        %v3915 = vmul.f32 %v3787, %v3837
        %v3916 = vmul.f32 %v3788, %v3842
        %v3917 = vmul.f32 %v3789, %v3842
        %v3918 = vmul.f32 %v3790, %v3847
        %v3919 = vmul.f32 %v3791, %v3847
        %v3920 = vmul.f32 %v3792, %v3852
        %v3921 = vmul.f32 %v3793, %v3852
        %v3922 = vmul.f32 %v3794, %v3857
        %v3923 = vmul.f32 %v3795, %v3857
        %v3924 = vmul.f32 %v3796, %v3862
        %v3925 = vmul.f32 %v3797, %v3862
        %v3926 = vmul.f32 %v3798, %v3867
        %v3927 = vmul.f32 %v3799, %v3867
        %v3928 = vmul.f32 %v3800, %v3872
        %v3929 = vmul.f32 %v3801, %v3872
        %v3930 = vmul.f32 %v3802, %v3877
        %v3931 = vmul.f32 %v3803, %v3877
        %v3932 = vmul.f32 %v3804, %v3882
        %v3933 = vmul.f32 %v3805, %v3882
        %v3934 = vmul.f32 %v3806, %v3887
        %v3935 = vmul.f32 %v3807, %v3887
        %v3936 = vmul.f32 %v3808, %v3892
        %v3937 = vmul.f32 %v3809, %v3892
        %v3938 = vmul.f32 %v3810, %v3897
        %v3939 = vmul.f32 %v3811, %v3897
        %v3940 = vmul.f32 %v3812, %v3902
        %v3941 = vmul.f32 %v3813, %v3902
        %v3942 = vmul.f32 %v3814, %v3907
        %v3943 = vmul.f32 %v3815, %v3907
        %v3944 = vmul.f32 %v3816, %v3912
        %v3945 = vmul.f32 %v3817, %v3912
        %v3946 = vadd.f32 %v3914, %v3754
        %v3947 = vadd.f32 %v3915, %v3755
        %v3948 = vadd.f32 %v3916, %v3756
        %v3949 = vadd.f32 %v3917, %v3757
        %v3950 = vadd.f32 %v3918, %v3758
        %v3951 = vadd.f32 %v3919, %v3759
        %v3952 = vadd.f32 %v3920, %v3760
        %v3953 = vadd.f32 %v3921, %v3761
        %v3954 = vadd.f32 %v3922, %v3762
        %v3955 = vadd.f32 %v3923, %v3763
        %v3956 = vadd.f32 %v3924, %v3764
        %v3957 = vadd.f32 %v3925, %v3765
        %v3958 = vadd.f32 %v3926, %v3766
        %v3959 = vadd.f32 %v3927, %v3767
        %v3960 = vadd.f32 %v3928, %v3768
        %v3961 = vadd.f32 %v3929, %v3769
        %v3962 = vadd.f32 %v3930, %v3770
        %v3963 = vadd.f32 %v3931, %v3771
        %v3964 = vadd.f32 %v3932, %v3772
        %v3965 = vadd.f32 %v3933, %v3773
        %v3966 = vadd.f32 %v3934, %v3774
        %v3967 = vadd.f32 %v3935, %v3775
        %v3968 = vadd.f32 %v3936, %v3776
        %v3969 = vadd.f32 %v3937, %v3777
        %v3970 = vadd.f32 %v3938, %v3778
        %v3971 = vadd.f32 %v3939, %v3779
        %v3972 = vadd.f32 %v3940, %v3780
        %v3973 = vadd.f32 %v3941, %v3781
        %v3974 = vadd.f32 %v3942, %v3782
        %v3975 = vadd.f32 %v3943, %v3783
        %v3976 = vadd.f32 %v3944, %v3784
        %v3977 = vadd.f32 %v3945, %v3785
        %3994 = vrot.lane.b32.xlu0 %v3947, 1
        %v3995 = vpop.permute.xlu0 %3994
        %3996 = vrot.lane.b32.xlu0 %v3949, 1
        %v3997 = vpop.permute.xlu0 %3996
        %3998 = vrot.lane.b32.xlu0 %v3951, 1
        %v3999 = vpop.permute.xlu0 %3998
        %4000 = vrot.lane.b32.xlu0 %v3953, 1
        %v4001 = vpop.permute.xlu0 %4000
        %4002 = vrot.lane.b32.xlu0 %v3955, 1
        %v4003 = vpop.permute.xlu0 %4002
        %4004 = vrot.lane.b32.xlu0 %v3957, 1
        %v4005 = vpop.permute.xlu0 %4004
        %4006 = vrot.lane.b32.xlu0 %v3959, 1
        %v4007 = vpop.permute.xlu0 %4006
        %4008 = vrot.lane.b32.xlu0 %v3961, 1
        %v4009 = vpop.permute.xlu0 %4008
        %4010 = vrot.lane.b32.xlu0 %v3963, 1
        %v4011 = vpop.permute.xlu0 %4010
        %4012 = vrot.lane.b32.xlu0 %v3965, 1
        %v4013 = vpop.permute.xlu0 %4012
        %4014 = vrot.lane.b32.xlu0 %v3967, 1
        %v4015 = vpop.permute.xlu0 %4014
        %4016 = vrot.lane.b32.xlu0 %v3969, 1
        %v4017 = vpop.permute.xlu0 %4016
        %4018 = vrot.lane.b32.xlu0 %v3971, 1
        %v4019 = vpop.permute.xlu0 %4018
        %4020 = vrot.lane.b32.xlu0 %v3973, 1
        %v4021 = vpop.permute.xlu0 %4020
        %4022 = vrot.lane.b32.xlu0 %v3975, 1
        %v4023 = vpop.permute.xlu0 %4022
        %4024 = vrot.lane.b32.xlu0 %v3977, 1
        %v4025 = vpop.permute.xlu0 %4024
        %vm4042 = vcmask 7168
        %4043 = vst.msk [vmem:[#allocation2] sm:$0xff] %vm4042, %v3995
        %4044 = vst.msk [vmem:[#allocation2 + $0x8] sm:$0xff] %vm4042, %v3997
        %4045 = vst.msk [vmem:[#allocation2 + $0x10] sm:$0xff] %vm4042, %v3999
        %4046 = vst.msk [vmem:[#allocation2 + $0x18] sm:$0xff] %vm4042, %v4001
        %4047 = vst.msk [vmem:[#allocation2 + $0x20] sm:$0xff] %vm4042, %v4003
        %4048 = vst.msk [vmem:[#allocation2 + $0x28] sm:$0xff] %vm4042, %v4005
        %4049 = vst.msk [vmem:[#allocation2 + $0x30] sm:$0xff] %vm4042, %v4007
        %4050 = vst.msk [vmem:[#allocation2 + $0x38] sm:$0xff] %vm4042, %v4009
        %4051 = vst.msk [vmem:[#allocation2 + $0x40] sm:$0xff] %vm4042, %v4011
        %4052 = vst.msk [vmem:[#allocation2 + $0x48] sm:$0xff] %vm4042, %v4013
        %4053 = vst.msk [vmem:[#allocation2 + $0x50] sm:$0xff] %vm4042, %v4015
        %4054 = vst.msk [vmem:[#allocation2 + $0x58] sm:$0xff] %vm4042, %v4017
        %4055 = vst.msk [vmem:[#allocation2 + $0x60] sm:$0xff] %vm4042, %v4019
        %4056 = vst.msk [vmem:[#allocation2 + $0x68] sm:$0xff] %vm4042, %v4021
        %4057 = vst.msk [vmem:[#allocation2 + $0x70] sm:$0xff] %vm4042, %v4023
        %4058 = vst.msk [vmem:[#allocation2 + $0x78] sm:$0xff] %vm4042, %v4025
        %v4059 = vld [vmem:[%s7] sm:$0xff]
        %4061 = vset.pattern.permute.xlu0 0
        %4062 = vperm.xlu0 %4061, %v4059
        %v4063 = vpop.permute.xlu0 %4062
        %v4065 = vmul.f32 %v4063, %v561
        %v4066 = vmul.f32 %v4063, %v562
        %v4067 = vlaneseq
        %v4068 = vshrl.u32 %v4067, 7
        %v4069 = vsub.s32 0, %v4068
        %v4070 = vrot.slane %v645, %v4069
        %v4071 = vlaneseq
        %v4072 = vshrl.u32 %v4071, 7
        %v4073 = vsub.s32 0, %v4072
        %v4074 = vrot.slane %v647, %v4073
        %v4075 = vmul.f32 %v4070, %v3946
        %v4076 = vmul.f32 %v4074, %v3947
        %v4077 = vadd.f32 %v4065, %v4075
        %v4078 = vadd.f32 %v4066, %v4076
        %v4079 = vlaneseq
        %v4080 = vshrl.u32 %v4079, 7
        %v4081 = vsub.s32 1, %v4080
        %v4082 = vrot.slane %v645, %v4081
        %v4083 = vlaneseq
        %v4084 = vshrl.u32 %v4083, 7
        %v4085 = vsub.s32 1, %v4084
        %v4086 = vrot.slane %v647, %v4085
        %v4087 = vmul.f32 %v4082, %v3948
        %v4088 = vmul.f32 %v4086, %v3949
        %v4089 = vadd.f32 %v4077, %v4087
        %v4090 = vadd.f32 %v4078, %v4088
        %v4091 = vlaneseq
        %v4092 = vshrl.u32 %v4091, 7
        %v4093 = vsub.s32 2, %v4092
        %v4094 = vrot.slane %v645, %v4093
        %v4095 = vlaneseq
        %v4096 = vshrl.u32 %v4095, 7
        %v4097 = vsub.s32 2, %v4096
        %v4098 = vrot.slane %v647, %v4097
        %v4099 = vmul.f32 %v4094, %v3950
        %v4100 = vmul.f32 %v4098, %v3951
        %v4101 = vadd.f32 %v4089, %v4099
        %v4102 = vadd.f32 %v4090, %v4100
        %v4103 = vlaneseq
        %v4104 = vshrl.u32 %v4103, 7
        %v4105 = vsub.s32 3, %v4104
        %v4106 = vrot.slane %v645, %v4105
        %v4107 = vlaneseq
        %v4108 = vshrl.u32 %v4107, 7
        %v4109 = vsub.s32 3, %v4108
        %v4110 = vrot.slane %v647, %v4109
        %v4111 = vmul.f32 %v4106, %v3952
        %v4112 = vmul.f32 %v4110, %v3953
        %v4113 = vadd.f32 %v4101, %v4111
        %v4114 = vadd.f32 %v4102, %v4112
        %v4115 = vlaneseq
        %v4116 = vshrl.u32 %v4115, 7
        %v4117 = vsub.s32 4, %v4116
        %v4118 = vrot.slane %v645, %v4117
        %v4119 = vlaneseq
        %v4120 = vshrl.u32 %v4119, 7
        %v4121 = vsub.s32 4, %v4120
        %v4122 = vrot.slane %v647, %v4121
        %v4123 = vmul.f32 %v4118, %v3954
        %v4124 = vmul.f32 %v4122, %v3955
        %v4125 = vadd.f32 %v4113, %v4123
        %v4126 = vadd.f32 %v4114, %v4124
        %v4127 = vlaneseq
        %v4128 = vshrl.u32 %v4127, 7
        %v4129 = vsub.s32 5, %v4128
        %v4130 = vrot.slane %v645, %v4129
        %v4131 = vlaneseq
        %v4132 = vshrl.u32 %v4131, 7
        %v4133 = vsub.s32 5, %v4132
        %v4134 = vrot.slane %v647, %v4133
        %v4135 = vmul.f32 %v4130, %v3956
        %v4136 = vmul.f32 %v4134, %v3957
        %v4137 = vadd.f32 %v4125, %v4135
        %v4138 = vadd.f32 %v4126, %v4136
        %v4139 = vlaneseq
        %v4140 = vshrl.u32 %v4139, 7
        %v4141 = vsub.s32 6, %v4140
        %v4142 = vrot.slane %v645, %v4141
        %v4143 = vlaneseq
        %v4144 = vshrl.u32 %v4143, 7
        %v4145 = vsub.s32 6, %v4144
        %v4146 = vrot.slane %v647, %v4145
        %v4147 = vmul.f32 %v4142, %v3958
        %v4148 = vmul.f32 %v4146, %v3959
        %v4149 = vadd.f32 %v4137, %v4147
        %v4150 = vadd.f32 %v4138, %v4148
        %v4151 = vlaneseq
        %v4152 = vshrl.u32 %v4151, 7
        %v4153 = vsub.s32 7, %v4152
        %v4154 = vrot.slane %v645, %v4153
        %v4155 = vlaneseq
        %v4156 = vshrl.u32 %v4155, 7
        %v4157 = vsub.s32 7, %v4156
        %v4158 = vrot.slane %v647, %v4157
        %v4159 = vmul.f32 %v4154, %v3960
        %v4160 = vmul.f32 %v4158, %v3961
        %v4161 = vadd.f32 %v4149, %v4159
        %v4162 = vadd.f32 %v4150, %v4160
        %v4163 = vlaneseq
        %v4164 = vshrl.u32 %v4163, 7
        %v4165 = vsub.s32 0, %v4164
        %v4166 = vrot.slane %v649, %v4165
        %v4167 = vlaneseq
        %v4168 = vshrl.u32 %v4167, 7
        %v4169 = vsub.s32 0, %v4168
        %v4170 = vrot.slane %v651, %v4169
        %v4171 = vmul.f32 %v4166, %v3962
        %v4172 = vmul.f32 %v4170, %v3963
        %v4173 = vadd.f32 %v4161, %v4171
        %v4174 = vadd.f32 %v4162, %v4172
        %v4175 = vlaneseq
        %v4176 = vshrl.u32 %v4175, 7
        %v4177 = vsub.s32 1, %v4176
        %v4178 = vrot.slane %v649, %v4177
        %v4179 = vlaneseq
        %v4180 = vshrl.u32 %v4179, 7
        %v4181 = vsub.s32 1, %v4180
        %v4182 = vrot.slane %v651, %v4181
        %v4183 = vmul.f32 %v4178, %v3964
        %v4184 = vmul.f32 %v4182, %v3965
        %v4185 = vadd.f32 %v4173, %v4183
        %v4186 = vadd.f32 %v4174, %v4184
        %v4187 = vlaneseq
        %v4188 = vshrl.u32 %v4187, 7
        %v4189 = vsub.s32 2, %v4188
        %v4190 = vrot.slane %v649, %v4189
        %v4191 = vlaneseq
        %v4192 = vshrl.u32 %v4191, 7
        %v4193 = vsub.s32 2, %v4192
        %v4194 = vrot.slane %v651, %v4193
        %v4195 = vmul.f32 %v4190, %v3966
        %v4196 = vmul.f32 %v4194, %v3967
        %v4197 = vadd.f32 %v4185, %v4195
        %v4198 = vadd.f32 %v4186, %v4196
        %v4199 = vlaneseq
        %v4200 = vshrl.u32 %v4199, 7
        %v4201 = vsub.s32 3, %v4200
        %v4202 = vrot.slane %v649, %v4201
        %v4203 = vlaneseq
        %v4204 = vshrl.u32 %v4203, 7
        %v4205 = vsub.s32 3, %v4204
        %v4206 = vrot.slane %v651, %v4205
        %v4207 = vmul.f32 %v4202, %v3968
        %v4208 = vmul.f32 %v4206, %v3969
        %v4209 = vadd.f32 %v4197, %v4207
        %v4210 = vadd.f32 %v4198, %v4208
        %v4211 = vlaneseq
        %v4212 = vshrl.u32 %v4211, 7
        %v4213 = vsub.s32 4, %v4212
        %v4214 = vrot.slane %v649, %v4213
        %v4215 = vlaneseq
        %v4216 = vshrl.u32 %v4215, 7
        %v4217 = vsub.s32 4, %v4216
        %v4218 = vrot.slane %v651, %v4217
        %v4219 = vmul.f32 %v4214, %v3970
        %v4220 = vmul.f32 %v4218, %v3971
        %v4221 = vadd.f32 %v4209, %v4219
        %v4222 = vadd.f32 %v4210, %v4220
        %v4223 = vlaneseq
        %v4224 = vshrl.u32 %v4223, 7
        %v4225 = vsub.s32 5, %v4224
        %v4226 = vrot.slane %v649, %v4225
        %v4227 = vlaneseq
        %v4228 = vshrl.u32 %v4227, 7
        %v4229 = vsub.s32 5, %v4228
        %v4230 = vrot.slane %v651, %v4229
        %v4231 = vmul.f32 %v4226, %v3972
        %v4232 = vmul.f32 %v4230, %v3973
        %v4233 = vadd.f32 %v4221, %v4231
        %v4234 = vadd.f32 %v4222, %v4232
        %v4235 = vlaneseq
        %v4236 = vshrl.u32 %v4235, 7
        %v4237 = vsub.s32 6, %v4236
        %v4238 = vrot.slane %v649, %v4237
        %v4239 = vlaneseq
        %v4240 = vshrl.u32 %v4239, 7
        %v4241 = vsub.s32 6, %v4240
        %v4242 = vrot.slane %v651, %v4241
        %v4243 = vmul.f32 %v4238, %v3974
        %v4244 = vmul.f32 %v4242, %v3975
        %v4245 = vadd.f32 %v4233, %v4243
        %v4246 = vadd.f32 %v4234, %v4244
        %v4247 = vlaneseq
        %v4248 = vshrl.u32 %v4247, 7
        %v4249 = vsub.s32 7, %v4248
        %v4250 = vrot.slane %v649, %v4249
        %v4251 = vlaneseq
        %v4252 = vshrl.u32 %v4251, 7
        %v4253 = vsub.s32 7, %v4252
        %v4254 = vrot.slane %v651, %v4253
        %v4255 = vmul.f32 %v4250, %v3976
        %v4256 = vmul.f32 %v4254, %v3977
        %v4257 = vadd.f32 %v4245, %v4255
        %v4258 = vadd.f32 %v4246, %v4256
        %v4259 = vsub.f32 0.0, %v449
        %v4260 = vsub.f32 0.0, %v451
        %v4261 = vmul.f32 %v4259, 1.442695
        %v4262 = vpow.pop %v4261
        %v4263 = vmul.f32 %v4260, 1.442695
        %v4264 = vpow.pop %v4263
        %v4265 = vadd.f32 %v4262, 1.0
        %v4266 = vadd.f32 %v4264, 1.0
        %v4267 = vrcp.pop %v4265
        %v4268 = vrcp.pop %v4266
        %v4269 = vmul.f32 %v449, %v4267
        %v4270 = vmul.f32 %v451, %v4268
        %v4271 = vmul.f32 %v4257, %v4269
        %v4272 = vmul.f32 %v4258, %v4270
        %v4273 = vld [vmem:[%s8] sm:$0x3]
        %v4274 = vpack.c.bf16 %v4271, %v4271
        %v4275 = vpack.c.bf16 %v4272, %v4272
        %v4277 = vsel %vm583, %v4273, 0
        %v4280 = vsel %vm593, %v4274, 0
        %v4283 = vsel %vm593, %v4275, 0
        %4285 = vmatprep.subr.bf16.mxu0 %v4283
        %4286 = vmatpush1.bf16.msra.mxu0 %v4280
        %4287 = vmatprep.subr.bf16.mxu0 0
        %4288 = vmatpush1.bf16.msra.mxu0 0
        %4289 = vmatprep.subr.bf16.mxu0 0
        %4290 = vmatpush1.bf16.msra.mxu0 0
        %4291 = vmatprep.subr.bf16.mxu0 0
        %4292 = vmatpush1.bf16.msra.mxu0 0
        %4293 = vmatprep.subr.bf16.mxu0 0
        %4294 = vmatpush1.bf16.msra.mxu0 0
        %4295 = vmatprep.subr.bf16.mxu0 0
        %4296 = vmatpush1.bf16.msra.mxu0 0
        %4297 = vmatprep.subr.bf16.mxu0 0
        %4298 = vmatpush1.bf16.msra.mxu0 0
        %4299 = vmatprep.subr.bf16.mxu0 0
        %4300 = vmatpush1.bf16.msra.mxu0 0
        %4301 = vmatprep.subr.bf16.mxu0 0
        %4302 = vmatpush1.bf16.msra.mxu0 0
        %4303 = vmatprep.subr.bf16.mxu0 0
        %4304 = vmatpush1.bf16.msra.mxu0 0
        %4305 = vmatprep.subr.bf16.mxu0 0
        %4306 = vmatpush1.bf16.msra.mxu0 0
        %4307 = vmatprep.subr.bf16.mxu0 0
        %4308 = vmatpush1.bf16.msra.mxu0 0
        %4309 = vmatprep.subr.bf16.mxu0 0
        %4310 = vmatpush1.bf16.msra.mxu0 0
        %4311 = vmatprep.subr.bf16.mxu0 0
        %4312 = vmatpush1.bf16.msra.mxu0 0
        %4313 = vmatprep.subr.bf16.mxu0 0
        %4314 = vmatpush1.bf16.msra.mxu0 0
        %4315 = vmatprep.subr.bf16.mxu0 0
        %4316 = vmatpush1.bf16.msra.mxu0 0
        %4317 = vmatprep.mubr.bf16.mxu0 0
        %4318 = vmatmul.mubr.bf16.gmra.mrb[0].mxu0 %v4277
        %v4319 = vpop.f32.mrb[0].mxu0
        %v4320 = vadd.f32 0.0, %v4319
        %v4321 = vpop.f32.mrb[0].mxu0
        %v4322 = vadd.f32 0.0, %v4321
        %v4323 = vpop.f32.mrb[0].mxu0
        %v4324 = vpop.f32.mrb[0].mxu0
        %4325 = vdwg.mxu0
        %v4328 = vcombine.low %v4320, %v4322
        %4330 = vst [vmem:[%s350] sm:$0xff] %v4328
        %s4331 = sand.u32 %s241, 1
        %s4332 = scalar_lea.sflag [#allocation5], %s4331
        %s4333 = sand.u32 %s241, 1
        %s4334 = smul.addr %s4333, 8
        %s4335 = scalar_lea.vmem [#allocation4], %s4334
        // Predicated region
        $region61: #{tpu_custom_call.1} parent=55 // pred_check
          %p4336 = pneg %p251
        $region62: #{tpu_custom_call.1} parent=55 // pred_check_branch
          %4338 = sbr.rel (%p4336) target = $region64
        $region63: #{tpu_custom_call.1} parent=55 // pred_region
          %s4339 = smul.u32 2, %s28
          %s4341 = ssub.s32 128, 128
          %4342 = vsyncadd %s4332, %s4341
          %s4343 = smul.addr %s27, 2
          %s4344 = sadd.s32 %s4339, %s4343
          %s4345 = smul.addr %s4344, 64
          %s4346 = scalar_lea.hbm %s9, %s4345
          %s4348 = sshll.u32 %s4335, 4
          %s4349 = int_to_ptr.vmem [resolvable:$true] %s4348
          %4351 = dma.vmem_to_hbm [thread:$0]  %s4349, 128, %s4346, %s4332
        $region64: #{tpu_custom_call.1} parent=55 // pred_fallthru
          _
      $region56: #{tpu_custom_call.1} parent=5 // pred_fallthru
        _
      %p4352 = scmp.le.s32.totalorder 2, %s18
      // Predicated region
      $region65: #{tpu_custom_call.1} parent=5 // pred_check
        %p4353 = pneg %p4352
      $region66: #{tpu_custom_call.1} parent=5 // pred_check_branch
        %4355 = sbr.rel (%p4353) target = $region68
      $region67: #{tpu_custom_call.1} parent=5 // pred_region
        %s4356 = ssub.s32 %s18, 2
        // Predicated region
        $region69: #{tpu_custom_call.1} parent=67 // pred_check
          %p4357 = pneg %p257
        $region70: #{tpu_custom_call.1} parent=67 // pred_check_branch
          %4359 = sbr.rel (%p4357) target = $region72
        $region71: #{tpu_custom_call.1} parent=67 // pred_region
          %s4360 = sand.u32 %s242, 1
          %s4361 = scalar_lea.sflag [#allocation5], %s4360
          %s4362 = sand.u32 %s242, 1
          %s4363 = smul.addr %s4362, 8
          %s4364 = scalar_lea.vmem [#allocation4], %s4363
          %4365 = dma.done %s4361, 128
        $region72: #{tpu_custom_call.1} parent=67 // pred_fallthru
          _
      $region68: #{tpu_custom_call.1} parent=5 // pred_fallthru
        _
    $region6: #{tpu_custom_call.1} parent=1 // loop_footer
      %s22 = sadd.s32 1, %s18
    $region7: #{tpu_custom_call.1} parent=1 // loop_footer_branch
      %17 = sbr.rel target = $region3
    $region8: #{tpu_custom_call.1} parent=1 // loop_exit
      _
    %4366 = vsyncpa [#allocation5], 1
    %s4367 = scalar_lea.sflag [#allocation5], 1
    %4368 = vsyncpa %s4367, 1

</llo_original>
